<compile_context>
chip_gen: v7x
topology: tpu7x:2x2x1
jax: 0.10.0
libtpu: 0.0.40
codegen_flags: <defaults>
</compile_context>

<pallas_src>
import functools

import jax
import jax.numpy as jnp
from jax.experimental import pallas as pl
from jax.experimental.pallas import tpu as pltpu

EPS = 1e-5


def _round_up(x, m):
    return (x + m - 1) // m * m


def _vmem_limit_bytes():
    # Generation-aware scoped-VMEM budget (v5e/v6e: 128 MiB, v7x: 64 MiB per TensorCore).
    try:
        cap = int(pltpu.get_tpu_info().vmem_capacity_bytes)
        return min(100 * 1024 * 1024, (cap * 3) // 4)
    except Exception:
        return 48 * 1024 * 1024  # safe default on every generation


# ----------------------------- Pallas kernel -----------------------------

def _conv_kernel(taps, do_relu, has_short, has_resid, x_ref, w_ref, b_ref, *rest):
    """Fused 3x3 conv (+folded BN) [+1x1-conv shortcut | +identity residual] [+ReLU].

    x_ref : (1, Mi, Cin)  bf16  flattened, spatially padded (phase-split if strided) input
    w_ref : (9, Cin, tn)  bf16  BN-scale-folded 3x3 weights, tap-major (kh*3+kw)
    b_ref : (1, tn)       f32   folded BN bias
    [xs_ref: (1, Mo, Cs) bf16, ws_ref: (Cs, tn) bf16]   projection-shortcut 1x1 conv
    [r_ref : (1, Mo, tn) bf16]                          identity residual
    o_ref : (1, Mo, tn)   out dtype
    acc_ref: (Mo, tn)     f32 VMEM scratch accumulator
    """
    idx = 0
    xs_ref = ws_ref = r_ref = None
    if has_short:
        xs_ref, ws_ref = rest[0], rest[1]
        idx = 2
    if has_resid:
        r_ref = rest[idx]
        idx += 1
    o_ref = rest[idx]
    acc_ref = rest[idx + 1]

    mo = o_ref.shape[1]

    if has_short:
        # Initialize the accumulator with the fused 1x1-conv projection shortcut.
        acc_ref[...] = jnp.dot(xs_ref[0], ws_ref[...],
                               preferred_element_type=jnp.float32)
    else:
        acc_ref[...] = jnp.zeros_like(acc_ref)

    # 9-tap accumulated matmul: every tap is a statically shifted flat window of the
    # VMEM-resident padded input -- no im2col materialisation in HBM.
    for t, off in enumerate(taps):
        acc_ref[...] += jnp.dot(x_ref[0, off:off + mo, :], w_ref[t],
                                preferred_element_type=jnp.float32)

    acc = acc_ref[...] + b_ref[...]
    if has_resid:
        acc = acc + r_ref[0].astype(jnp.float32)
    if do_relu:
        acc = jnp.maximum(acc, 0.0)
    o_ref[0] = acc.astype(o_ref.dtype)


# ----------------------------- conv wrapper -----------------------------

def conv3x3_bn(x, w9, bias, *, stride, do_relu=True,
               shortcut=None, residual=None, out_dtype=jnp.bfloat16):
    """y = [relu]( conv3x3_stride(x) * bn_scale + bn_bias [+ conv1x1_stride(xs)] [+ residual] ).

    x        : (N, H, W, Cin) activations (computed in bf16 on the MXU).
    w9       : (9, Cin, Cout) f32 weights with BN scale folded in, tap-major.
    bias     : (Cout,) f32 folded BN bias.
    shortcut : optional (xs, ws): xs (N, Ho, Wo, Cs), ws (Cs, Cout) f32 (BN-folded 1x1 proj).
    residual : optional (N, Ho, Wo, Cout) identity residual.
    Returns  : (N, Ho, Wo, Cout) in out_dtype.
    """
    N, H, W, Cin = x.shape
    Cout = w9.shape[2]
    s = stride
    Ho = (H - 1) // s + 1
    Wo = (W - 1) // s + 1

    # Lane-dense output channels (never < 128) and 8-aligned contraction.
    Cin_p = _round_up(Cin, 8)
    Cout_p = _round_up(Cout, 128)
    tn = 512 if Cout_p % 512 == 0 else (256 if Cout_p % 256 == 0 else 128)
    tn = min(tn, Cout_p)

    # ---- flattened, spatially padded (and phase-split if strided) input ----
    xb = x.astype(jnp.bfloat16)
    He = _round_up(H + 2, s)
    We = _round_up(W + 2, s)
    # padding (spatial halo of 1, evenness for phases, channel alignment) folded into ONE pad
    xpad = jnp.pad(xb, ((0, 0), (1, He - H - 1), (1, We - W - 1), (0, Cin_p - Cin)))
    Hph, Wph = He // s, We // s
    if s == 1:
        phases = [xpad]
    else:
        phases = [xpad[:, a::s, b::s, :] for a in range(s) for b in range(s)]
    xflat = jnp.concatenate([p.reshape(N, Hph * Wph, Cin_p) for p in phases], axis=1)

    # Flat tap offsets; output row (i) / col (j) lives at flat index i*Wph + j
    # (Wph - Wo throw-away columns per row are sliced off after the kernel).
    taps = tuple(((kh % s) * s + (kw % s)) * Hph * Wph + (kh // s) * Wph + (kw // s)
                 for kh in range(3) for kw in range(3))
    Mo = _round_up(Ho * Wph, 8)
    Mi = _round_up(max(xflat.shape[1], max(taps) + Mo), 8)
    xflat = jnp.pad(xflat, ((0, 0), (0, Mi - xflat.shape[1]), (0, 0)))

    # ---- weights / bias (zero-padded channels contribute nothing) ----
    w = jnp.pad(w9, ((0, 0), (0, Cin_p - Cin), (0, Cout_p - Cout))).astype(jnp.bfloat16)
    b = jnp.pad(bias.reshape(1, Cout).astype(jnp.float32), ((0, 0), (0, Cout_p - Cout)))

    grid = (N, Cout_p // tn)
    in_specs = [
        pl.BlockSpec((1, Mi, Cin_p), lambda n, j: (n, 0, 0)),
        pl.BlockSpec((9, Cin_p, tn), lambda n, j: (0, 0, j)),
        pl.BlockSpec((1, tn), lambda n, j: (0, j)),
    ]
    args = [xflat, w, b]
    flops = 2 * N * Ho * Wo * 9 * Cin * Cout
    out_bytes = N * Mo * Cout_p * jnp.dtype(out_dtype).itemsize
    bytes_accessed = xflat.size * 2 + w.size * 2 + b.size * 4 + out_bytes

    has_short = shortcut is not None
    has_resid = residual is not None
    if has_short:
        xs, ws = shortcut
        Cs = xs.shape[-1]
        Cs_p = _round_up(Cs, 8)
        xs = jnp.pad(xs.astype(jnp.bfloat16),
                     ((0, 0), (0, 0), (0, Wph - Wo), (0, Cs_p - Cs)))
        xs = xs.reshape(N, Ho * Wph, Cs_p)
        xs = jnp.pad(xs, ((0, 0), (0, Mo - Ho * Wph), (0, 0)))
        wsp = jnp.pad(ws, ((0, Cs_p - Cs), (0, Cout_p - Cout))).astype(jnp.bfloat16)
        in_specs += [pl.BlockSpec((1, Mo, Cs_p), lambda n, j: (n, 0, 0)),
                     pl.BlockSpec((Cs_p, tn), lambda n, j: (0, j))]
        args += [xs, wsp]
        flops += 2 * N * Ho * Wo * Cs * Cout
        bytes_accessed += xs.size * 2 + wsp.size * 2
    if has_resid:
        r = jnp.pad(residual.astype(jnp.bfloat16),
                    ((0, 0), (0, 0), (0, Wph - Wo), (0, Cout_p - Cout)))
        r = r.reshape(N, Ho * Wph, Cout_p)
        r = jnp.pad(r, ((0, 0), (0, Mo - Ho * Wph), (0, 0)))
        in_specs.append(pl.BlockSpec((1, Mo, tn), lambda n, j: (n, 0, j)))
        args.append(r)
        bytes_accessed += r.size * 2

    kernel = functools.partial(_conv_kernel, taps, do_relu, has_short, has_resid)

    out = pl.pallas_call(
        kernel,
        out_shape=jax.ShapeDtypeStruct((N, Mo, Cout_p), out_dtype),
        grid_spec=pltpu.PrefetchScalarGridSpec(
            num_scalar_prefetch=0,
            grid=grid,
            in_specs=in_specs,
            out_specs=pl.BlockSpec((1, Mo, tn), lambda n, j: (n, 0, j)),
            scratch_shapes=[pltpu.VMEM((Mo, tn), jnp.float32)],
        ),
        compiler_params=pltpu.CompilerParams(
            dimension_semantics=("parallel", "parallel"),
            vmem_limit_bytes=_vmem_limit_bytes(),
        ),
        cost_estimate=pl.CostEstimate(
            flops=flops, transcendentals=0, bytes_accessed=int(bytes_accessed)),
    )(*args)

    # Drop the throw-away columns and the channel padding (cheap XLA slice/reshape).
    out = out[:, :Ho * Wph, :Cout].reshape(N, Ho, Wph, Cout)[:, :, :Wo, :]
    return out


# ----------------------------- JAX glue -----------------------------

def _fold_bn(bn):
    g, b, m, v = bn
    scale = g / jnp.sqrt(v + EPS)
    return scale, b - m * scale


def resnet_block_forward(x_nchw, params, stride):
    """Equivalent of ResNetBlock.forward (inference-mode BN) for NCHW input."""
    x = jnp.transpose(x_nchw, (0, 2, 3, 1)).astype(jnp.bfloat16)  # NHWC, bf16 activations
    N, H, W, Cin = x.shape
    planes = params["w1"].shape[0]

    s1, b1 = _fold_bn(params["bn1"])
    s2, b2 = _fold_bn(params["bn2"])

    # (Cout, Cin, 3, 3) -> tap-major (9, Cin, Cout) with the BN scale folded in.
    w1 = jnp.transpose(params["w1"], (2, 3, 1, 0)).reshape(9, Cin, planes) * s1
    w2 = jnp.transpose(params["w2"], (2, 3, 1, 0)).reshape(9, planes, planes) * s2

    # conv1 (3x3, stride) + bn1 + relu ; intermediate kept in bf16 NHWC
    y1 = conv3x3_bn(x, w1, b1, stride=stride, do_relu=True, out_dtype=jnp.bfloat16)

    # conv2 (3x3, stride 1) + bn2 + shortcut + relu, fully fused in ONE kernel
    if "ws" in params:
        ss, bs = _fold_bn(params["bns"])
        ws = jnp.transpose(params["ws"], (2, 3, 1, 0)).reshape(Cin, planes) * ss
        xs = x[:, ::stride, ::stride, :]                     # 1x1-conv (stride) input
        out = conv3x3_bn(y1, w2, b2 + bs, stride=1, do_relu=True,
                         shortcut=(xs, ws), out_dtype=jnp.bfloat16)
    else:
        out = conv3x3_bn(y1, w2, b2, stride=1, do_relu=True,
                         residual=x, out_dtype=jnp.bfloat16)

    # Transpose back to NCHW in bf16; cast to f32 only at the model boundary.
    return jnp.transpose(out, (0, 3, 1, 2)).astype(jnp.float32)


# ----------------------------- params + reference -----------------------------

def init_params(key, in_planes, planes, stride):
    ks = jax.random.split(key, 6)

    def conv_w(k, co, ci, kh, kw):
        fan = ci * kh * kw
        return jax.random.normal(k, (co, ci, kh, kw), jnp.float32) * (2.0 / fan) ** 0.5

    def bn_p(k, c):
        k1, k2, k3, k4 = jax.random.split(k, 4)
        g = jax.random.uniform(k1, (c,), jnp.float32, 0.5, 1.5)
        b = jax.random.normal(k2, (c,), jnp.float32) * 0.1
        m = jax.random.normal(k3, (c,), jnp.float32) * 0.1
        v = jax.random.uniform(k4, (c,), jnp.float32, 0.5, 1.5)
        return (g, b, m, v)

    params = {
        "w1": conv_w(ks[0], planes, in_planes, 3, 3),
        "bn1": bn_p(ks[1], planes),
        "w2": conv_w(ks[2], planes, planes, 3, 3),
        "bn2": bn_p(ks[3], planes),
    }
    if stride != 1 or in_planes != planes:
        params["ws"] = conv_w(ks[4], planes, in_planes, 1, 1)
        params["bns"] = bn_p(ks[5], planes)
    return params


def ref_forward(x, params, stride):
    def conv(x, w, s, p):
        return jax.lax.conv_general_dilated(
            x, w, (s, s), ((p, p), (p, p)),
            dimension_numbers=("NCHW", "OIHW", "NCHW"))

    def bn(x, bnp):
        g, b, m, v = bnp
        r = lambda a: a[None, :, None, None]
        return (x - r(m)) / jnp.sqrt(r(v) + EPS) * r(g) + r(b)

    out = jax.nn.relu(bn(conv(x, params["w1"], stride, 1), params["bn1"]))
    out = bn(conv(out, params["w2"], 1, 1), params["bn2"])
    sc = bn(conv(x, params["ws"], stride, 0), params["bns"]) if "ws" in params else x
    return jax.nn.relu(out + sc)


def _check(out, ref, name):
    err = float(jnp.max(jnp.abs(out - ref)) / (jnp.max(jnp.abs(ref)) + 1e-6))
    assert err < 2e-2, f"{name}: relative error {err}"


# ----------------------------- main -----------------------------

if __name__ == "__main__":
    key = jax.random.PRNGKey(0)
    kx, kp1, kp2 = jax.random.split(key, 3)
    x = jax.random.normal(kx, (2, 4, 16, 16), jnp.float32)  # NCHW, like PyTorch

    fwd = jax.jit(resnet_block_forward, static_argnums=2)

    # Case A: stride=2, channel change -> projection (1x1 conv + BN) shortcut, fused in-kernel
    p_a = init_params(kp1, 4, 8, 2)
    out_a = jax.block_until_ready(fwd(x, p_a, 2))
    assert out_a.shape == (2, 8, 8, 8)
    _check(out_a, ref_forward(x, p_a, 2), "projection-shortcut")

    # Case B: stride=1, same channels -> identity shortcut, fused residual add
    p_b = init_params(kp2, 4, 4, 1)
    out_b = jax.block_until_ready(fwd(x, p_b, 1))
    assert out_b.shape == (2, 4, 16, 16)
    _check(out_b, ref_forward(x, p_b, 1), "identity-shortcut")

    print("KERNEL_OK")
</pallas_src>

<mosaic_0001>
module attributes {stable_mosaic.version = 11 : i64} {
  func.func @_conv_kernel(%arg0: i32, %arg1: i32, %arg2: memref<1x328x8xbf16, #tpu.memory_space<vmem>>, %arg3: memref<9x8x128xbf16, #tpu.memory_space<vmem>>, %arg4: memref<1x128xf32, #tpu.memory_space<vmem>>, %arg5: memref<1x72x128xbf16, #tpu.memory_space<vmem>>, %arg6: memref<72x128xf32, #tpu.memory_space<vmem>>) attributes {dimension_semantics = [#tpu.dimension_semantics<parallel>, #tpu.dimension_semantics<parallel>], iteration_bounds = array<i64: 2, 1>, scalar_prefetch = 0 : i64, scratch_operands = 1 : i64, tpu.core_type = #tpu.core_type<tc>, window_params = [{transform_indices = @transform_0, window_bounds = array<i64: 1, 328, 8>}, {transform_indices = @transform_1, window_bounds = array<i64: 9, 8, 128>}, {transform_indices = @transform_2, window_bounds = array<i64: 1, 128>}, {transform_indices = @transform_3, window_bounds = array<i64: 1, 72, 128>}]} {
    %cst = arith.constant 0.000000e+00 : f32
    %0 = vector.broadcast %cst : f32 to vector<72x128xf32>
    %c0 = arith.constant 0 : index
    %c0_0 = arith.constant 0 : index
    %1 = vector.load %arg6[%c0, %c0_0] : memref<72x128xf32, #tpu.memory_space<vmem>>, vector<72x128xf32>
    tpu.vector_store %arg6[%c0, %c0_0], %0 {strides = array<i32>} : memref<72x128xf32, #tpu.memory_space<vmem>>, vector<72x128xf32>,
    %c0_1 = arith.constant 0 : index
    %c0_2 = arith.constant 0 : index
    %2 = vector.load %arg6[%c0_1, %c0_2] : memref<72x128xf32, #tpu.memory_space<vmem>>, vector<72x128xf32>
    %c0_3 = arith.constant 0 : index
    %c0_4 = arith.constant 0 : index
    %c0_5 = arith.constant 0 : index
    %3 = vector.load %arg2[%c0_3, %c0_4, %c0_5] : memref<1x328x8xbf16, #tpu.memory_space<vmem>>, vector<1x72x8xbf16>
    %4 = vector.shape_cast %3 : vector<1x72x8xbf16> to vector<72x8xbf16>
    %c0_6 = arith.constant 0 : index
    %c0_7 = arith.constant 0 : index
    %c0_8 = arith.constant 0 : index
    %5 = vector.load %arg3[%c0_6, %c0_7, %c0_8] : memref<9x8x128xbf16, #tpu.memory_space<vmem>>, vector<1x8x128xbf16>
    %6 = vector.shape_cast %5 : vector<1x8x128xbf16> to vector<8x128xbf16>
    %cst_9 = arith.constant dense<0.000000e+00> : vector<72x128xf32>
    %7 = tpu.matmul %4, %6, %cst_9 {dimension_numbers = #tpu.dot_dimension_numbers<[1], [0], [0], [1], [0, 0, 1, 1], [], []>} : vector<72x8xbf16>, vector<8x128xbf16>, vector<72x128xf32> -> vector<72x128xf32>
    %8 = arith.addf %2, %7 : vector<72x128xf32>
    %c0_10 = arith.constant 0 : index
    %c0_11 = arith.constant 0 : index
    %9 = vector.load %arg6[%c0_10, %c0_11] : memref<72x128xf32, #tpu.memory_space<vmem>>, vector<72x128xf32>
    tpu.vector_store %arg6[%c0_10, %c0_11], %8 {strides = array<i32>} : memref<72x128xf32, #tpu.memory_space<vmem>>, vector<72x128xf32>,
    %c0_12 = arith.constant 0 : index
    %c0_13 = arith.constant 0 : index
    %10 = vector.load %arg6[%c0_12, %c0_13] : memref<72x128xf32, #tpu.memory_space<vmem>>, vector<72x128xf32>
    %c0_14 = arith.constant 0 : index
    %c81 = arith.constant 81 : index
    %c0_15 = arith.constant 0 : index
    %11 = vector.load %arg2[%c0_14, %c81, %c0_15] : memref<1x328x8xbf16, #tpu.memory_space<vmem>>, vector<1x72x8xbf16>
    %12 = vector.shape_cast %11 : vector<1x72x8xbf16> to vector<72x8xbf16>
    %c1 = arith.constant 1 : index
    %c0_16 = arith.constant 0 : index
    %c0_17 = arith.constant 0 : index
    %13 = vector.load %arg3[%c1, %c0_16, %c0_17] : memref<9x8x128xbf16, #tpu.memory_space<vmem>>, vector<1x8x128xbf16>
    %14 = vector.shape_cast %13 : vector<1x8x128xbf16> to vector<8x128xbf16>
    %cst_18 = arith.constant dense<0.000000e+00> : vector<72x128xf32>
    %15 = tpu.matmul %12, %14, %cst_18 {dimension_numbers = #tpu.dot_dimension_numbers<[1], [0], [0], [1], [0, 0, 1, 1], [], []>} : vector<72x8xbf16>, vector<8x128xbf16>, vector<72x128xf32> -> vector<72x128xf32>
    %16 = arith.addf %10, %15 : vector<72x128xf32>
    %c0_19 = arith.constant 0 : index
    %c0_20 = arith.constant 0 : index
    %17 = vector.load %arg6[%c0_19, %c0_20] : memref<72x128xf32, #tpu.memory_space<vmem>>, vector<72x128xf32>
    tpu.vector_store %arg6[%c0_19, %c0_20], %16 {strides = array<i32>} : memref<72x128xf32, #tpu.memory_space<vmem>>, vector<72x128xf32>,
    %c0_21 = arith.constant 0 : index
    %c0_22 = arith.constant 0 : index
    %18 = vector.load %arg6[%c0_21, %c0_22] : memref<72x128xf32, #tpu.memory_space<vmem>>, vector<72x128xf32>
    %c0_23 = arith.constant 0 : index
    %c1_24 = arith.constant 1 : index
    %c0_25 = arith.constant 0 : index
    %19 = vector.load %arg2[%c0_23, %c1_24, %c0_25] : memref<1x328x8xbf16, #tpu.memory_space<vmem>>, vector<1x72x8xbf16>
    %20 = vector.shape_cast %19 : vector<1x72x8xbf16> to vector<72x8xbf16>
    %c2 = arith.constant 2 : index
    %c0_26 = arith.constant 0 : index
    %c0_27 = arith.constant 0 : index
    %21 = vector.load %arg3[%c2, %c0_26, %c0_27] : memref<9x8x128xbf16, #tpu.memory_space<vmem>>, vector<1x8x128xbf16>
    %22 = vector.shape_cast %21 : vector<1x8x128xbf16> to vector<8x128xbf16>
    %cst_28 = arith.constant dense<0.000000e+00> : vector<72x128xf32>
    %23 = tpu.matmul %20, %22, %cst_28 {dimension_numbers = #tpu.dot_dimension_numbers<[1], [0], [0], [1], [0, 0, 1, 1], [], []>} : vector<72x8xbf16>, vector<8x128xbf16>, vector<72x128xf32> -> vector<72x128xf32>
    %24 = arith.addf %18, %23 : vector<72x128xf32>
    %c0_29 = arith.constant 0 : index
    %c0_30 = arith.constant 0 : index
    %25 = vector.load %arg6[%c0_29, %c0_30] : memref<72x128xf32, #tpu.memory_space<vmem>>, vector<72x128xf32>
    tpu.vector_store %arg6[%c0_29, %c0_30], %24 {strides = array<i32>} : memref<72x128xf32, #tpu.memory_space<vmem>>, vector<72x128xf32>,
    %c0_31 = arith.constant 0 : index
    %c0_32 = arith.constant 0 : index
    %26 = vector.load %arg6[%c0_31, %c0_32] : memref<72x128xf32, #tpu.memory_space<vmem>>, vector<72x128xf32>
    %c0_33 = arith.constant 0 : index
    %c162 = arith.constant 162 : index
    %c0_34 = arith.constant 0 : index
    %27 = vector.load %arg2[%c0_33, %c162, %c0_34] : memref<1x328x8xbf16, #tpu.memory_space<vmem>>, vector<1x72x8xbf16>
    %28 = vector.shape_cast %27 : vector<1x72x8xbf16> to vector<72x8xbf16>
    %c3 = arith.constant 3 : index
    %c0_35 = arith.constant 0 : index
    %c0_36 = arith.constant 0 : index
    %29 = vector.load %arg3[%c3, %c0_35, %c0_36] : memref<9x8x128xbf16, #tpu.memory_space<vmem>>, vector<1x8x128xbf16>
    %30 = vector.shape_cast %29 : vector<1x8x128xbf16> to vector<8x128xbf16>
    %cst_37 = arith.constant dense<0.000000e+00> : vector<72x128xf32>
    %31 = tpu.matmul %28, %30, %cst_37 {dimension_numbers = #tpu.dot_dimension_numbers<[1], [0], [0], [1], [0, 0, 1, 1], [], []>} : vector<72x8xbf16>, vector<8x128xbf16>, vector<72x128xf32> -> vector<72x128xf32>
    %32 = arith.addf %26, %31 : vector<72x128xf32>
    %c0_38 = arith.constant 0 : index
    %c0_39 = arith.constant 0 : index
    %33 = vector.load %arg6[%c0_38, %c0_39] : memref<72x128xf32, #tpu.memory_space<vmem>>, vector<72x128xf32>
    tpu.vector_store %arg6[%c0_38, %c0_39], %32 {strides = array<i32>} : memref<72x128xf32, #tpu.memory_space<vmem>>, vector<72x128xf32>,
    %c0_40 = arith.constant 0 : index
    %c0_41 = arith.constant 0 : index
    %34 = vector.load %arg6[%c0_40, %c0_41] : memref<72x128xf32, #tpu.memory_space<vmem>>, vector<72x128xf32>
    %c0_42 = arith.constant 0 : index
    %c243 = arith.constant 243 : index
    %c0_43 = arith.constant 0 : index
    %35 = vector.load %arg2[%c0_42, %c243, %c0_43] : memref<1x328x8xbf16, #tpu.memory_space<vmem>>, vector<1x72x8xbf16>
    %36 = vector.shape_cast %35 : vector<1x72x8xbf16> to vector<72x8xbf16>
    %c4 = arith.constant 4 : index
    %c0_44 = arith.constant 0 : index
    %c0_45 = arith.constant 0 : index
    %37 = vector.load %arg3[%c4, %c0_44, %c0_45] : memref<9x8x128xbf16, #tpu.memory_space<vmem>>, vector<1x8x128xbf16>
    %38 = vector.shape_cast %37 : vector<1x8x128xbf16> to vector<8x128xbf16>
    %cst_46 = arith.constant dense<0.000000e+00> : vector<72x128xf32>
    %39 = tpu.matmul %36, %38, %cst_46 {dimension_numbers = #tpu.dot_dimension_numbers<[1], [0], [0], [1], [0, 0, 1, 1], [], []>} : vector<72x8xbf16>, vector<8x128xbf16>, vector<72x128xf32> -> vector<72x128xf32>
    %40 = arith.addf %34, %39 : vector<72x128xf32>
    %c0_47 = arith.constant 0 : index
    %c0_48 = arith.constant 0 : index
    %41 = vector.load %arg6[%c0_47, %c0_48] : memref<72x128xf32, #tpu.memory_space<vmem>>, vector<72x128xf32>
    tpu.vector_store %arg6[%c0_47, %c0_48], %40 {strides = array<i32>} : memref<72x128xf32, #tpu.memory_space<vmem>>, vector<72x128xf32>,
    %c0_49 = arith.constant 0 : index
    %c0_50 = arith.constant 0 : index
    %42 = vector.load %arg6[%c0_49, %c0_50] : memref<72x128xf32, #tpu.memory_space<vmem>>, vector<72x128xf32>
    %c0_51 = arith.constant 0 : index
    %c163 = arith.constant 163 : index
    %c0_52 = arith.constant 0 : index
    %43 = vector.load %arg2[%c0_51, %c163, %c0_52] : memref<1x328x8xbf16, #tpu.memory_space<vmem>>, vector<1x72x8xbf16>
    %44 = vector.shape_cast %43 : vector<1x72x8xbf16> to vector<72x8xbf16>
    %c5 = arith.constant 5 : index
    %c0_53 = arith.constant 0 : index
    %c0_54 = arith.constant 0 : index
    %45 = vector.load %arg3[%c5, %c0_53, %c0_54] : memref<9x8x128xbf16, #tpu.memory_space<vmem>>, vector<1x8x128xbf16>
    %46 = vector.shape_cast %45 : vector<1x8x128xbf16> to vector<8x128xbf16>
    %cst_55 = arith.constant dense<0.000000e+00> : vector<72x128xf32>
    %47 = tpu.matmul %44, %46, %cst_55 {dimension_numbers = #tpu.dot_dimension_numbers<[1], [0], [0], [1], [0, 0, 1, 1], [], []>} : vector<72x8xbf16>, vector<8x128xbf16>, vector<72x128xf32> -> vector<72x128xf32>
    %48 = arith.addf %42, %47 : vector<72x128xf32>
    %c0_56 = arith.constant 0 : index
    %c0_57 = arith.constant 0 : index
    %49 = vector.load %arg6[%c0_56, %c0_57] : memref<72x128xf32, #tpu.memory_space<vmem>>, vector<72x128xf32>
    tpu.vector_store %arg6[%c0_56, %c0_57], %48 {strides = array<i32>} : memref<72x128xf32, #tpu.memory_space<vmem>>, vector<72x128xf32>,
    %c0_58 = arith.constant 0 : index
    %c0_59 = arith.constant 0 : index
    %50 = vector.load %arg6[%c0_58, %c0_59] : memref<72x128xf32, #tpu.memory_space<vmem>>, vector<72x128xf32>
    %c0_60 = arith.constant 0 : index
    %c9 = arith.constant 9 : index
    %c0_61 = arith.constant 0 : index
    %51 = vector.load %arg2[%c0_60, %c9, %c0_61] : memref<1x328x8xbf16, #tpu.memory_space<vmem>>, vector<1x72x8xbf16>
    %52 = vector.shape_cast %51 : vector<1x72x8xbf16> to vector<72x8xbf16>
    %c6 = arith.constant 6 : index
    %c0_62 = arith.constant 0 : index
    %c0_63 = arith.constant 0 : index
    %53 = vector.load %arg3[%c6, %c0_62, %c0_63] : memref<9x8x128xbf16, #tpu.memory_space<vmem>>, vector<1x8x128xbf16>
    %54 = vector.shape_cast %53 : vector<1x8x128xbf16> to vector<8x128xbf16>
    %cst_64 = arith.constant dense<0.000000e+00> : vector<72x128xf32>
    %55 = tpu.matmul %52, %54, %cst_64 {dimension_numbers = #tpu.dot_dimension_numbers<[1], [0], [0], [1], [0, 0, 1, 1], [], []>} : vector<72x8xbf16>, vector<8x128xbf16>, vector<72x128xf32> -> vector<72x128xf32>
    %56 = arith.addf %50, %55 : vector<72x128xf32>
    %c0_65 = arith.constant 0 : index
    %c0_66 = arith.constant 0 : index
    %57 = vector.load %arg6[%c0_65, %c0_66] : memref<72x128xf32, #tpu.memory_space<vmem>>, vector<72x128xf32>
    tpu.vector_store %arg6[%c0_65, %c0_66], %56 {strides = array<i32>} : memref<72x128xf32, #tpu.memory_space<vmem>>, vector<72x128xf32>,
    %c0_67 = arith.constant 0 : index
    %c0_68 = arith.constant 0 : index
    %58 = vector.load %arg6[%c0_67, %c0_68] : memref<72x128xf32, #tpu.memory_space<vmem>>, vector<72x128xf32>
    %c0_69 = arith.constant 0 : index
    %c90 = arith.constant 90 : index
    %c0_70 = arith.constant 0 : index
    %59 = vector.load %arg2[%c0_69, %c90, %c0_70] : memref<1x328x8xbf16, #tpu.memory_space<vmem>>, vector<1x72x8xbf16>
    %60 = vector.shape_cast %59 : vector<1x72x8xbf16> to vector<72x8xbf16>
    %c7 = arith.constant 7 : index
    %c0_71 = arith.constant 0 : index
    %c0_72 = arith.constant 0 : index
    %61 = vector.load %arg3[%c7, %c0_71, %c0_72] : memref<9x8x128xbf16, #tpu.memory_space<vmem>>, vector<1x8x128xbf16>
    %62 = vector.shape_cast %61 : vector<1x8x128xbf16> to vector<8x128xbf16>
    %cst_73 = arith.constant dense<0.000000e+00> : vector<72x128xf32>
    %63 = tpu.matmul %60, %62, %cst_73 {dimension_numbers = #tpu.dot_dimension_numbers<[1], [0], [0], [1], [0, 0, 1, 1], [], []>} : vector<72x8xbf16>, vector<8x128xbf16>, vector<72x128xf32> -> vector<72x128xf32>
    %64 = arith.addf %58, %63 : vector<72x128xf32>
    %c0_74 = arith.constant 0 : index
    %c0_75 = arith.constant 0 : index
    %65 = vector.load %arg6[%c0_74, %c0_75] : memref<72x128xf32, #tpu.memory_space<vmem>>, vector<72x128xf32>
    tpu.vector_store %arg6[%c0_74, %c0_75], %64 {strides = array<i32>} : memref<72x128xf32, #tpu.memory_space<vmem>>, vector<72x128xf32>,
    %c0_76 = arith.constant 0 : index
    %c0_77 = arith.constant 0 : index
    %66 = vector.load %arg6[%c0_76, %c0_77] : memref<72x128xf32, #tpu.memory_space<vmem>>, vector<72x128xf32>
    %c0_78 = arith.constant 0 : index
    %c10 = arith.constant 10 : index
    %c0_79 = arith.constant 0 : index
    %67 = vector.load %arg2[%c0_78, %c10, %c0_79] : memref<1x328x8xbf16, #tpu.memory_space<vmem>>, vector<1x72x8xbf16>
    %68 = vector.shape_cast %67 : vector<1x72x8xbf16> to vector<72x8xbf16>
    %c8 = arith.constant 8 : index
    %c0_80 = arith.constant 0 : index
    %c0_81 = arith.constant 0 : index
    %69 = vector.load %arg3[%c8, %c0_80, %c0_81] : memref<9x8x128xbf16, #tpu.memory_space<vmem>>, vector<1x8x128xbf16>
    %70 = vector.shape_cast %69 : vector<1x8x128xbf16> to vector<8x128xbf16>
    %cst_82 = arith.constant dense<0.000000e+00> : vector<72x128xf32>
    %71 = tpu.matmul %68, %70, %cst_82 {dimension_numbers = #tpu.dot_dimension_numbers<[1], [0], [0], [1], [0, 0, 1, 1], [], []>} : vector<72x8xbf16>, vector<8x128xbf16>, vector<72x128xf32> -> vector<72x128xf32>
    %72 = arith.addf %66, %71 : vector<72x128xf32>
    %c0_83 = arith.constant 0 : index
    %c0_84 = arith.constant 0 : index
    %73 = vector.load %arg6[%c0_83, %c0_84] : memref<72x128xf32, #tpu.memory_space<vmem>>, vector<72x128xf32>
    tpu.vector_store %arg6[%c0_83, %c0_84], %72 {strides = array<i32>} : memref<72x128xf32, #tpu.memory_space<vmem>>, vector<72x128xf32>,
    %c0_85 = arith.constant 0 : index
    %c0_86 = arith.constant 0 : index
    %74 = vector.load %arg6[%c0_85, %c0_86] : memref<72x128xf32, #tpu.memory_space<vmem>>, vector<72x128xf32>
    %c0_87 = arith.constant 0 : index
    %c0_88 = arith.constant 0 : index
    %75 = vector.load %arg4[%c0_87, %c0_88] : memref<1x128xf32, #tpu.memory_space<vmem>>, vector<1x128xf32>
    %76 = vector.broadcast %75 : vector<1x128xf32> to vector<72x128xf32>
    %77 = arith.addf %74, %76 : vector<72x128xf32>
    %cst_89 = arith.constant 0.000000e+00 : f32
    %78 = vector.broadcast %cst_89 : f32 to vector<72x128xf32>
    %79 = arith.maximumf %77, %78 : vector<72x128xf32>
    %80 = arith.truncf %79 : vector<72x128xf32> to vector<72x128xbf16>
    %c0_90 = arith.constant 0 : index
    %c0_91 = arith.constant 0 : index
    %c0_92 = arith.constant 0 : index
    %81 = vector.load %arg5[%c0_90, %c0_91, %c0_92] : memref<1x72x128xbf16, #tpu.memory_space<vmem>>, vector<1x72x128xbf16>
    %82 = vector.shape_cast %81 : vector<1x72x128xbf16> to vector<72x128xbf16>
    %83 = vector.shape_cast %80 : vector<72x128xbf16> to vector<1x72x128xbf16>
    tpu.vector_store %arg5[%c0_90, %c0_91, %c0_92], %83 {strides = array<i32>} : memref<1x72x128xbf16, #tpu.memory_space<vmem>>, vector<1x72x128xbf16>,
    return
  }
  func.func @transform_0(%arg0: i32, %arg1: i32) -> (i32, i32, i32) {
    %c0_i32 = arith.constant 0 : i32
    %c0_i32_0 = arith.constant 0 : i32
    %c0_i32_1 = arith.constant 0 : i32
    return %arg0, %c0_i32, %c0_i32_0 : i32, i32, i32
  }
  func.func @transform_1(%arg0: i32, %arg1: i32) -> (i32, i32, i32) {
    %c0_i32 = arith.constant 0 : i32
    %c0_i32_0 = arith.constant 0 : i32
    %c0_i32_1 = arith.constant 0 : i32
    return %c0_i32, %c0_i32_0, %arg1 : i32, i32, i32
  }
  func.func @transform_2(%arg0: i32, %arg1: i32) -> (i32, i32) {
    %c0_i32 = arith.constant 0 : i32
    %c0_i32_0 = arith.constant 0 : i32
    return %c0_i32, %arg1 : i32, i32
  }
  func.func @transform_3(%arg0: i32, %arg1: i32) -> (i32, i32, i32) {
    %c0_i32 = arith.constant 0 : i32
    %c0_i32_0 = arith.constant 0 : i32
    return %arg0, %c0_i32, %arg1 : i32, i32, i32
  }
}

module attributes {stable_mosaic.version = 11 : i64} {
  func.func @_conv_kernel(%arg0: i32, %arg1: i32, %arg2: memref<1x104x8xbf16, #tpu.memory_space<vmem>>, %arg3: memref<9x8x128xbf16, #tpu.memory_space<vmem>>, %arg4: memref<1x128xf32, #tpu.memory_space<vmem>>, %arg5: memref<1x80x8xbf16, #tpu.memory_space<vmem>>, %arg6: memref<8x128xbf16, #tpu.memory_space<vmem>>, %arg7: memref<1x80x128xbf16, #tpu.memory_space<vmem>>, %arg8: memref<80x128xf32, #tpu.memory_space<vmem>>) attributes {dimension_semantics = [#tpu.dimension_semantics<parallel>, #tpu.dimension_semantics<parallel>], iteration_bounds = array<i64: 2, 1>, scalar_prefetch = 0 : i64, scratch_operands = 1 : i64, tpu.core_type = #tpu.core_type<tc>, window_params = [{transform_indices = @transform_0, window_bounds = array<i64: 1, 104, 8>}, {transform_indices = @transform_1, window_bounds = array<i64: 9, 8, 128>}, {transform_indices = @transform_2, window_bounds = array<i64: 1, 128>}, {transform_indices = @transform_3, window_bounds = array<i64: 1, 80, 8>}, {transform_indices = @transform_4, window_bounds = array<i64: 8, 128>}, {transform_indices = @transform_5, window_bounds = array<i64: 1, 80, 128>}]} {
    %c0 = arith.constant 0 : index
    %c0_0 = arith.constant 0 : index
    %c0_1 = arith.constant 0 : index
    %0 = vector.load %arg5[%c0, %c0_0, %c0_1] : memref<1x80x8xbf16, #tpu.memory_space<vmem>>, vector<1x80x8xbf16>
    %1 = vector.shape_cast %0 : vector<1x80x8xbf16> to vector<80x8xbf16>
    %c0_2 = arith.constant 0 : index
    %c0_3 = arith.constant 0 : index
    %2 = vector.load %arg6[%c0_2, %c0_3] : memref<8x128xbf16, #tpu.memory_space<vmem>>, vector<8x128xbf16>
    %cst = arith.constant dense<0.000000e+00> : vector<80x128xf32>
    %3 = tpu.matmul %1, %2, %cst {dimension_numbers = #tpu.dot_dimension_numbers<[1], [0], [0], [1], [0, 0, 1, 1], [], []>} : vector<80x8xbf16>, vector<8x128xbf16>, vector<80x128xf32> -> vector<80x128xf32>
    %c0_4 = arith.constant 0 : index
    %c0_5 = arith.constant 0 : index
    %4 = vector.load %arg8[%c0_4, %c0_5] : memref<80x128xf32, #tpu.memory_space<vmem>>, vector<80x128xf32>
    tpu.vector_store %arg8[%c0_4, %c0_5], %3 {strides = array<i32>} : memref<80x128xf32, #tpu.memory_space<vmem>>, vector<80x128xf32>,
    %c0_6 = arith.constant 0 : index
    %c0_7 = arith.constant 0 : index
    %5 = vector.load %arg8[%c0_6, %c0_7] : memref<80x128xf32, #tpu.memory_space<vmem>>, vector<80x128xf32>
    %c0_8 = arith.constant 0 : index
    %c0_9 = arith.constant 0 : index
    %c0_10 = arith.constant 0 : index
    %6 = vector.load %arg2[%c0_8, %c0_9, %c0_10] : memref<1x104x8xbf16, #tpu.memory_space<vmem>>, vector<1x80x8xbf16>
    %7 = vector.shape_cast %6 : vector<1x80x8xbf16> to vector<80x8xbf16>
    %c0_11 = arith.constant 0 : index
    %c0_12 = arith.constant 0 : index
    %c0_13 = arith.constant 0 : index
    %8 = vector.load %arg3[%c0_11, %c0_12, %c0_13] : memref<9x8x128xbf16, #tpu.memory_space<vmem>>, vector<1x8x128xbf16>
    %9 = vector.shape_cast %8 : vector<1x8x128xbf16> to vector<8x128xbf16>
    %cst_14 = arith.constant dense<0.000000e+00> : vector<80x128xf32>
    %10 = tpu.matmul %7, %9, %cst_14 {dimension_numbers = #tpu.dot_dimension_numbers<[1], [0], [0], [1], [0, 0, 1, 1], [], []>} : vector<80x8xbf16>, vector<8x128xbf16>, vector<80x128xf32> -> vector<80x128xf32>
    %11 = arith.addf %5, %10 : vector<80x128xf32>
    %c0_15 = arith.constant 0 : index
    %c0_16 = arith.constant 0 : index
    %12 = vector.load %arg8[%c0_15, %c0_16] : memref<80x128xf32, #tpu.memory_space<vmem>>, vector<80x128xf32>
    tpu.vector_store %arg8[%c0_15, %c0_16], %11 {strides = array<i32>} : memref<80x128xf32, #tpu.memory_space<vmem>>, vector<80x128xf32>,
    %c0_17 = arith.constant 0 : index
    %c0_18 = arith.constant 0 : index
    %13 = vector.load %arg8[%c0_17, %c0_18] : memref<80x128xf32, #tpu.memory_space<vmem>>, vector<80x128xf32>
    %c0_19 = arith.constant 0 : index
    %c1 = arith.constant 1 : index
    %c0_20 = arith.constant 0 : index
    %14 = vector.load %arg2[%c0_19, %c1, %c0_20] : memref<1x104x8xbf16, #tpu.memory_space<vmem>>, vector<1x80x8xbf16>
    %15 = vector.shape_cast %14 : vector<1x80x8xbf16> to vector<80x8xbf16>
    %c1_21 = arith.constant 1 : index
    %c0_22 = arith.constant 0 : index
    %c0_23 = arith.constant 0 : index
    %16 = vector.load %arg3[%c1_21, %c0_22, %c0_23] : memref<9x8x128xbf16, #tpu.memory_space<vmem>>, vector<1x8x128xbf16>
    %17 = vector.shape_cast %16 : vector<1x8x128xbf16> to vector<8x128xbf16>
    %cst_24 = arith.constant dense<0.000000e+00> : vector<80x128xf32>
    %18 = tpu.matmul %15, %17, %cst_24 {dimension_numbers = #tpu.dot_dimension_numbers<[1], [0], [0], [1], [0, 0, 1, 1], [], []>} : vector<80x8xbf16>, vector<8x128xbf16>, vector<80x128xf32> -> vector<80x128xf32>
    %19 = arith.addf %13, %18 : vector<80x128xf32>
    %c0_25 = arith.constant 0 : index
    %c0_26 = arith.constant 0 : index
    %20 = vector.load %arg8[%c0_25, %c0_26] : memref<80x128xf32, #tpu.memory_space<vmem>>, vector<80x128xf32>
    tpu.vector_store %arg8[%c0_25, %c0_26], %19 {strides = array<i32>} : memref<80x128xf32, #tpu.memory_space<vmem>>, vector<80x128xf32>,
    %c0_27 = arith.constant 0 : index
    %c0_28 = arith.constant 0 : index
    %21 = vector.load %arg8[%c0_27, %c0_28] : memref<80x128xf32, #tpu.memory_space<vmem>>, vector<80x128xf32>
    %c0_29 = arith.constant 0 : index
    %c2 = arith.constant 2 : index
    %c0_30 = arith.constant 0 : index
    %22 = vector.load %arg2[%c0_29, %c2, %c0_30] : memref<1x104x8xbf16, #tpu.memory_space<vmem>>, vector<1x80x8xbf16>
    %23 = vector.shape_cast %22 : vector<1x80x8xbf16> to vector<80x8xbf16>
    %c2_31 = arith.constant 2 : index
    %c0_32 = arith.constant 0 : index
    %c0_33 = arith.constant 0 : index
    %24 = vector.load %arg3[%c2_31, %c0_32, %c0_33] : memref<9x8x128xbf16, #tpu.memory_space<vmem>>, vector<1x8x128xbf16>
    %25 = vector.shape_cast %24 : vector<1x8x128xbf16> to vector<8x128xbf16>
    %cst_34 = arith.constant dense<0.000000e+00> : vector<80x128xf32>
    %26 = tpu.matmul %23, %25, %cst_34 {dimension_numbers = #tpu.dot_dimension_numbers<[1], [0], [0], [1], [0, 0, 1, 1], [], []>} : vector<80x8xbf16>, vector<8x128xbf16>, vector<80x128xf32> -> vector<80x128xf32>
    %27 = arith.addf %21, %26 : vector<80x128xf32>
    %c0_35 = arith.constant 0 : index
    %c0_36 = arith.constant 0 : index
    %28 = vector.load %arg8[%c0_35, %c0_36] : memref<80x128xf32, #tpu.memory_space<vmem>>, vector<80x128xf32>
    tpu.vector_store %arg8[%c0_35, %c0_36], %27 {strides = array<i32>} : memref<80x128xf32, #tpu.memory_space<vmem>>, vector<80x128xf32>,
    %c0_37 = arith.constant 0 : index
    %c0_38 = arith.constant 0 : index
    %29 = vector.load %arg8[%c0_37, %c0_38] : memref<80x128xf32, #tpu.memory_space<vmem>>, vector<80x128xf32>
    %c0_39 = arith.constant 0 : index
    %c10 = arith.constant 10 : index
    %c0_40 = arith.constant 0 : index
    %30 = vector.load %arg2[%c0_39, %c10, %c0_40] : memref<1x104x8xbf16, #tpu.memory_space<vmem>>, vector<1x80x8xbf16>
    %31 = vector.shape_cast %30 : vector<1x80x8xbf16> to vector<80x8xbf16>
    %c3 = arith.constant 3 : index
    %c0_41 = arith.constant 0 : index
    %c0_42 = arith.constant 0 : index
    %32 = vector.load %arg3[%c3, %c0_41, %c0_42] : memref<9x8x128xbf16, #tpu.memory_space<vmem>>, vector<1x8x128xbf16>
    %33 = vector.shape_cast %32 : vector<1x8x128xbf16> to vector<8x128xbf16>
    %cst_43 = arith.constant dense<0.000000e+00> : vector<80x128xf32>
    %34 = tpu.matmul %31, %33, %cst_43 {dimension_numbers = #tpu.dot_dimension_numbers<[1], [0], [0], [1], [0, 0, 1, 1], [], []>} : vector<80x8xbf16>, vector<8x128xbf16>, vector<80x128xf32> -> vector<80x128xf32>
    %35 = arith.addf %29, %34 : vector<80x128xf32>
    %c0_44 = arith.constant 0 : index
    %c0_45 = arith.constant 0 : index
    %36 = vector.load %arg8[%c0_44, %c0_45] : memref<80x128xf32, #tpu.memory_space<vmem>>, vector<80x128xf32>
    tpu.vector_store %arg8[%c0_44, %c0_45], %35 {strides = array<i32>} : memref<80x128xf32, #tpu.memory_space<vmem>>, vector<80x128xf32>,
    %c0_46 = arith.constant 0 : index
    %c0_47 = arith.constant 0 : index
    %37 = vector.load %arg8[%c0_46, %c0_47] : memref<80x128xf32, #tpu.memory_space<vmem>>, vector<80x128xf32>
    %c0_48 = arith.constant 0 : index
    %c11 = arith.constant 11 : index
    %c0_49 = arith.constant 0 : index
    %38 = vector.load %arg2[%c0_48, %c11, %c0_49] : memref<1x104x8xbf16, #tpu.memory_space<vmem>>, vector<1x80x8xbf16>
    %39 = vector.shape_cast %38 : vector<1x80x8xbf16> to vector<80x8xbf16>
    %c4 = arith.constant 4 : index
    %c0_50 = arith.constant 0 : index
    %c0_51 = arith.constant 0 : index
    %40 = vector.load %arg3[%c4, %c0_50, %c0_51] : memref<9x8x128xbf16, #tpu.memory_space<vmem>>, vector<1x8x128xbf16>
    %41 = vector.shape_cast %40 : vector<1x8x128xbf16> to vector<8x128xbf16>
    %cst_52 = arith.constant dense<0.000000e+00> : vector<80x128xf32>
    %42 = tpu.matmul %39, %41, %cst_52 {dimension_numbers = #tpu.dot_dimension_numbers<[1], [0], [0], [1], [0, 0, 1, 1], [], []>} : vector<80x8xbf16>, vector<8x128xbf16>, vector<80x128xf32> -> vector<80x128xf32>
    %43 = arith.addf %37, %42 : vector<80x128xf32>
    %c0_53 = arith.constant 0 : index
    %c0_54 = arith.constant 0 : index
    %44 = vector.load %arg8[%c0_53, %c0_54] : memref<80x128xf32, #tpu.memory_space<vmem>>, vector<80x128xf32>
    tpu.vector_store %arg8[%c0_53, %c0_54], %43 {strides = array<i32>} : memref<80x128xf32, #tpu.memory_space<vmem>>, vector<80x128xf32>,
    %c0_55 = arith.constant 0 : index
    %c0_56 = arith.constant 0 : index
    %45 = vector.load %arg8[%c0_55, %c0_56] : memref<80x128xf32, #tpu.memory_space<vmem>>, vector<80x128xf32>
    %c0_57 = arith.constant 0 : index
    %c12 = arith.constant 12 : index
    %c0_58 = arith.constant 0 : index
    %46 = vector.load %arg2[%c0_57, %c12, %c0_58] : memref<1x104x8xbf16, #tpu.memory_space<vmem>>, vector<1x80x8xbf16>
    %47 = vector.shape_cast %46 : vector<1x80x8xbf16> to vector<80x8xbf16>
    %c5 = arith.constant 5 : index
    %c0_59 = arith.constant 0 : index
    %c0_60 = arith.constant 0 : index
    %48 = vector.load %arg3[%c5, %c0_59, %c0_60] : memref<9x8x128xbf16, #tpu.memory_space<vmem>>, vector<1x8x128xbf16>
    %49 = vector.shape_cast %48 : vector<1x8x128xbf16> to vector<8x128xbf16>
    %cst_61 = arith.constant dense<0.000000e+00> : vector<80x128xf32>
    %50 = tpu.matmul %47, %49, %cst_61 {dimension_numbers = #tpu.dot_dimension_numbers<[1], [0], [0], [1], [0, 0, 1, 1], [], []>} : vector<80x8xbf16>, vector<8x128xbf16>, vector<80x128xf32> -> vector<80x128xf32>
    %51 = arith.addf %45, %50 : vector<80x128xf32>
    %c0_62 = arith.constant 0 : index
    %c0_63 = arith.constant 0 : index
    %52 = vector.load %arg8[%c0_62, %c0_63] : memref<80x128xf32, #tpu.memory_space<vmem>>, vector<80x128xf32>
    tpu.vector_store %arg8[%c0_62, %c0_63], %51 {strides = array<i32>} : memref<80x128xf32, #tpu.memory_space<vmem>>, vector<80x128xf32>,
    %c0_64 = arith.constant 0 : index
    %c0_65 = arith.constant 0 : index
    %53 = vector.load %arg8[%c0_64, %c0_65] : memref<80x128xf32, #tpu.memory_space<vmem>>, vector<80x128xf32>
    %c0_66 = arith.constant 0 : index
    %c20 = arith.constant 20 : index
    %c0_67 = arith.constant 0 : index
    %54 = vector.load %arg2[%c0_66, %c20, %c0_67] : memref<1x104x8xbf16, #tpu.memory_space<vmem>>, vector<1x80x8xbf16>
    %55 = vector.shape_cast %54 : vector<1x80x8xbf16> to vector<80x8xbf16>
    %c6 = arith.constant 6 : index
    %c0_68 = arith.constant 0 : index
    %c0_69 = arith.constant 0 : index
    %56 = vector.load %arg3[%c6, %c0_68, %c0_69] : memref<9x8x128xbf16, #tpu.memory_space<vmem>>, vector<1x8x128xbf16>
    %57 = vector.shape_cast %56 : vector<1x8x128xbf16> to vector<8x128xbf16>
    %cst_70 = arith.constant dense<0.000000e+00> : vector<80x128xf32>
    %58 = tpu.matmul %55, %57, %cst_70 {dimension_numbers = #tpu.dot_dimension_numbers<[1], [0], [0], [1], [0, 0, 1, 1], [], []>} : vector<80x8xbf16>, vector<8x128xbf16>, vector<80x128xf32> -> vector<80x128xf32>
    %59 = arith.addf %53, %58 : vector<80x128xf32>
    %c0_71 = arith.constant 0 : index
    %c0_72 = arith.constant 0 : index
    %60 = vector.load %arg8[%c0_71, %c0_72] : memref<80x128xf32, #tpu.memory_space<vmem>>, vector<80x128xf32>
    tpu.vector_store %arg8[%c0_71, %c0_72], %59 {strides = array<i32>} : memref<80x128xf32, #tpu.memory_space<vmem>>, vector<80x128xf32>,
    %c0_73 = arith.constant 0 : index
    %c0_74 = arith.constant 0 : index
    %61 = vector.load %arg8[%c0_73, %c0_74] : memref<80x128xf32, #tpu.memory_space<vmem>>, vector<80x128xf32>
    %c0_75 = arith.constant 0 : index
    %c21 = arith.constant 21 : index
    %c0_76 = arith.constant 0 : index
    %62 = vector.load %arg2[%c0_75, %c21, %c0_76] : memref<1x104x8xbf16, #tpu.memory_space<vmem>>, vector<1x80x8xbf16>
    %63 = vector.shape_cast %62 : vector<1x80x8xbf16> to vector<80x8xbf16>
    %c7 = arith.constant 7 : index
    %c0_77 = arith.constant 0 : index
    %c0_78 = arith.constant 0 : index
    %64 = vector.load %arg3[%c7, %c0_77, %c0_78] : memref<9x8x128xbf16, #tpu.memory_space<vmem>>, vector<1x8x128xbf16>
    %65 = vector.shape_cast %64 : vector<1x8x128xbf16> to vector<8x128xbf16>
    %cst_79 = arith.constant dense<0.000000e+00> : vector<80x128xf32>
    %66 = tpu.matmul %63, %65, %cst_79 {dimension_numbers = #tpu.dot_dimension_numbers<[1], [0], [0], [1], [0, 0, 1, 1], [], []>} : vector<80x8xbf16>, vector<8x128xbf16>, vector<80x128xf32> -> vector<80x128xf32>
    %67 = arith.addf %61, %66 : vector<80x128xf32>
    %c0_80 = arith.constant 0 : index
    %c0_81 = arith.constant 0 : index
    %68 = vector.load %arg8[%c0_80, %c0_81] : memref<80x128xf32, #tpu.memory_space<vmem>>, vector<80x128xf32>
    tpu.vector_store %arg8[%c0_80, %c0_81], %67 {strides = array<i32>} : memref<80x128xf32, #tpu.memory_space<vmem>>, vector<80x128xf32>,
    %c0_82 = arith.constant 0 : index
    %c0_83 = arith.constant 0 : index
    %69 = vector.load %arg8[%c0_82, %c0_83] : memref<80x128xf32, #tpu.memory_space<vmem>>, vector<80x128xf32>
    %c0_84 = arith.constant 0 : index
    %c22 = arith.constant 22 : index
    %c0_85 = arith.constant 0 : index
    %70 = vector.load %arg2[%c0_84, %c22, %c0_85] : memref<1x104x8xbf16, #tpu.memory_space<vmem>>, vector<1x80x8xbf16>
    %71 = vector.shape_cast %70 : vector<1x80x8xbf16> to vector<80x8xbf16>
    %c8 = arith.constant 8 : index
    %c0_86 = arith.constant 0 : index
    %c0_87 = arith.constant 0 : index
    %72 = vector.load %arg3[%c8, %c0_86, %c0_87] : memref<9x8x128xbf16, #tpu.memory_space<vmem>>, vector<1x8x128xbf16>
    %73 = vector.shape_cast %72 : vector<1x8x128xbf16> to vector<8x128xbf16>
    %cst_88 = arith.constant dense<0.000000e+00> : vector<80x128xf32>
    %74 = tpu.matmul %71, %73, %cst_88 {dimension_numbers = #tpu.dot_dimension_numbers<[1], [0], [0], [1], [0, 0, 1, 1], [], []>} : vector<80x8xbf16>, vector<8x128xbf16>, vector<80x128xf32> -> vector<80x128xf32>
    %75 = arith.addf %69, %74 : vector<80x128xf32>
    %c0_89 = arith.constant 0 : index
    %c0_90 = arith.constant 0 : index
    %76 = vector.load %arg8[%c0_89, %c0_90] : memref<80x128xf32, #tpu.memory_space<vmem>>, vector<80x128xf32>
    tpu.vector_store %arg8[%c0_89, %c0_90], %75 {strides = array<i32>} : memref<80x128xf32, #tpu.memory_space<vmem>>, vector<80x128xf32>,
    %c0_91 = arith.constant 0 : index
    %c0_92 = arith.constant 0 : index
    %77 = vector.load %arg8[%c0_91, %c0_92] : memref<80x128xf32, #tpu.memory_space<vmem>>, vector<80x128xf32>
    %c0_93 = arith.constant 0 : index
    %c0_94 = arith.constant 0 : index
    %78 = vector.load %arg4[%c0_93, %c0_94] : memref<1x128xf32, #tpu.memory_space<vmem>>, vector<1x128xf32>
    %79 = vector.broadcast %78 : vector<1x128xf32> to vector<80x128xf32>
    %80 = arith.addf %77, %79 : vector<80x128xf32>
    %cst_95 = arith.constant 0.000000e+00 : f32
    %81 = vector.broadcast %cst_95 : f32 to vector<80x128xf32>
    %82 = arith.maximumf %80, %81 : vector<80x128xf32>
    %83 = arith.truncf %82 : vector<80x128xf32> to vector<80x128xbf16>
    %c0_96 = arith.constant 0 : index
    %c0_97 = arith.constant 0 : index
    %c0_98 = arith.constant 0 : index
    %84 = vector.load %arg7[%c0_96, %c0_97, %c0_98] : memref<1x80x128xbf16, #tpu.memory_space<vmem>>, vector<1x80x128xbf16>
    %85 = vector.shape_cast %84 : vector<1x80x128xbf16> to vector<80x128xbf16>
    %86 = vector.shape_cast %83 : vector<80x128xbf16> to vector<1x80x128xbf16>
    tpu.vector_store %arg7[%c0_96, %c0_97, %c0_98], %86 {strides = array<i32>} : memref<1x80x128xbf16, #tpu.memory_space<vmem>>, vector<1x80x128xbf16>,
    return
  }
  func.func @transform_0(%arg0: i32, %arg1: i32) -> (i32, i32, i32) {
    %c0_i32 = arith.constant 0 : i32
    %c0_i32_0 = arith.constant 0 : i32
    %c0_i32_1 = arith.constant 0 : i32
    return %arg0, %c0_i32, %c0_i32_0 : i32, i32, i32
  }
  func.func @transform_1(%arg0: i32, %arg1: i32) -> (i32, i32, i32) {
    %c0_i32 = arith.constant 0 : i32
    %c0_i32_0 = arith.constant 0 : i32
    %c0_i32_1 = arith.constant 0 : i32
    return %c0_i32, %c0_i32_0, %arg1 : i32, i32, i32
  }
  func.func @transform_2(%arg0: i32, %arg1: i32) -> (i32, i32) {
    %c0_i32 = arith.constant 0 : i32
    %c0_i32_0 = arith.constant 0 : i32
    return %c0_i32, %arg1 : i32, i32
  }
  func.func @transform_3(%arg0: i32, %arg1: i32) -> (i32, i32, i32) {
    %c0_i32 = arith.constant 0 : i32
    %c0_i32_0 = arith.constant 0 : i32
    %c0_i32_1 = arith.constant 0 : i32
    return %arg0, %c0_i32, %c0_i32_0 : i32, i32, i32
  }
  func.func @transform_4(%arg0: i32, %arg1: i32) -> (i32, i32) {
    %c0_i32 = arith.constant 0 : i32
    %c0_i32_0 = arith.constant 0 : i32
    return %c0_i32, %arg1 : i32, i32
  }
  func.func @transform_5(%arg0: i32, %arg1: i32) -> (i32, i32, i32) {
    %c0_i32 = arith.constant 0 : i32
    %c0_i32_0 = arith.constant 0 : i32
    return %arg0, %c0_i32, %arg1 : i32, i32, i32
  }
}

</mosaic_0001>

<llo_original>
// kernel: resnet_block_forward.2
$region0: #{resnet_block_forward.2}
  #allocation0 [shape = 'u32[]', space=smem, size = 0x4, offset = 0x4, fixed_abs, tag = 'smem constant byte address 0x4 - core index']
  #allocation1 [shape = 'u32[144,128]{1,0:T(1,128)}', space=vmem, size = 0x12000, scoped, tag = 'internal scratch']
  #allocation2 [shape = 'f32[72,128]{1,0:T(8,128)}', space=vmem, size = 0x9000, scoped, tag = 'scratch operand']
  %s0 = inlined_call_operand.vmem [shape: bf16[2,328,8], index: 0, kind: input, shape index: {}]
  %s1 = inlined_call_operand.vmem [shape: bf16[9,8,128], index: 1, kind: input, shape index: {}]
  %s2 = inlined_call_operand.vmem [shape: f32[1,128], index: 2, kind: input, shape index: {}]
  %s3 = inlined_call_operand.vmem [shape: bf16[2,72,128], index: 3, kind: output, shape index: {}]
  %s4 = sld [smem:[#allocation0]]
  $region45: #{resnet_block_forward.2} parent=0
    _
  %s6 = ssub.s32 1, %s4
  %s7 = scalar_select 0, %s6, %s4
  loop: start=0, step=1, limit=4
  $region2: #{resnet_block_forward.2} parent=0 // loop_pre_header
    _
  $region3: #{resnet_block_forward.2} parent=0 // loop_header
    %s9 = sphi 0, %s13
    %p10 = scmp.ge.s32.totalorder %s9, 4
    %s16 = sphi 0, %s28
    %s17 = sphi 0, %s24
    %s18 = sphi 0, %s16
    %s19 = sphi 0, %s17
    %s20 = sphi 0, %s18
    %s21 = sphi 0, %s19
    %s31 = sphi 0, %s33
    %s34 = sphi 0, %s31
    %s35 = sphi 0, %s34
    %s51 = sphi 0, %s35
    %s57 = sphi 0, %s59
    %s60 = sphi 0, %s57
    %s61 = sphi 0, %s60
    %s77 = sphi 0, %s61
    %s83 = sphi 0, %s85
    %s86 = sphi 0, %s83
    %s87 = sphi 0, %s86
    %s103 = sphi 0, %s87
    %s111 = sphi 0, %s113
    %s114 = sphi 0, %s111
    %s115 = sphi 0, %s114
    %s131 = sphi 0, %s115
  $region4: #{resnet_block_forward.2} parent=0 // loop_header_branch
    %12 = sbr.rel (%p10) target = $region8
  $region5: #{resnet_block_forward.2} parent=0 // loop_body
    %s14 = ssub.s32 %s9, 1
    %s15 = ssub.s32 %s9, 2
    %s22 = sadd.s32 1, %s17
    %p23 = scmp.ge.s32.totalorder %s22, 1
    %s24 = scalar_select %p23, 0, %s22
    %s25 = sadd.s32 1, %s16
    %s26 = scalar_select %p23, %s25, %s16
    %p27 = scmp.ge.s32.totalorder %s26, 2
    %s28 = scalar_select %p27, 0, %s26
    %s29 = ssub.s32 %s16, %s28
    %p30 = scmp.eq.s32.totalorder %s29, 0
    %s32 = sadd.s32 %s31, 1
    %s33 = scalar_select %p30, %s31, %s32
    %p36 = pneg %p30
    %p37 = scmp.eq.s32.totalorder %s9, 1
    %p38 = por %p36, %p37
    %p39 = scmp.ne.s32.totalorder %s31, %s34
    %p40 = scmp.eq.s32.totalorder %s9, 0
    %p41 = por %p39, %p40
    %p42 = scmp.ne.s32.totalorder %s31, %s34
    %p43 = scmp.eq.s32.totalorder %s14, 1
    %p44 = por %p42, %p43
    %p45 = scmp.ne.s32.totalorder %s34, %s35
    %p46 = scmp.eq.s32.totalorder %s14, 0
    %p47 = por %p45, %p46
    %p48 = scmp.ne.s32.totalorder %s34, %s35
    %p49 = scmp.eq.s32.totalorder %s15, 1
    %p50 = por %p48, %p49
    %p52 = scmp.ne.s32.totalorder %s35, %s51
    %p53 = scmp.eq.s32.totalorder %s15, 0
    %p54 = por %p52, %p53
    %s55 = ssub.s32 %s17, %s24
    %p56 = scmp.eq.s32.totalorder %s55, 0
    %s58 = sadd.s32 %s57, 1
    %s59 = scalar_select %p56, %s57, %s58
    %p62 = pneg %p56
    %p63 = scmp.eq.s32.totalorder %s9, 1
    %p64 = por %p62, %p63
    %p65 = scmp.ne.s32.totalorder %s57, %s60
    %p66 = scmp.eq.s32.totalorder %s9, 0
    %p67 = por %p65, %p66
    %p68 = scmp.ne.s32.totalorder %s57, %s60
    %p69 = scmp.eq.s32.totalorder %s14, 1
    %p70 = por %p68, %p69
    %p71 = scmp.ne.s32.totalorder %s60, %s61
    %p72 = scmp.eq.s32.totalorder %s14, 0
    %p73 = por %p71, %p72
    %p74 = scmp.ne.s32.totalorder %s60, %s61
    %p75 = scmp.eq.s32.totalorder %s15, 1
    %p76 = por %p74, %p75
    %p78 = scmp.ne.s32.totalorder %s61, %s77
    %p79 = scmp.eq.s32.totalorder %s15, 0
    %p80 = por %p78, %p79
    %s81 = ssub.s32 %s17, %s24
    %p82 = scmp.eq.s32.totalorder %s81, 0
    %s84 = sadd.s32 %s83, 1
    %s85 = scalar_select %p82, %s83, %s84
    %p88 = pneg %p82
    %p89 = scmp.eq.s32.totalorder %s9, 1
    %p90 = por %p88, %p89
    %p91 = scmp.ne.s32.totalorder %s83, %s86
    %p92 = scmp.eq.s32.totalorder %s9, 0
    %p93 = por %p91, %p92
    %p94 = scmp.ne.s32.totalorder %s83, %s86
    %p95 = scmp.eq.s32.totalorder %s14, 1
    %p96 = por %p94, %p95
    %p97 = scmp.ne.s32.totalorder %s86, %s87
    %p98 = scmp.eq.s32.totalorder %s14, 0
    %p99 = por %p97, %p98
    %p100 = scmp.ne.s32.totalorder %s86, %s87
    %p101 = scmp.eq.s32.totalorder %s15, 1
    %p102 = por %p100, %p101
    %p104 = scmp.ne.s32.totalorder %s87, %s103
    %p105 = scmp.eq.s32.totalorder %s15, 0
    %p106 = por %p104, %p105
    %s107 = ssub.s32 %s16, %s28
    %s108 = ssub.s32 %s17, %s24
    %s109 = sor.u32 %s107, %s108
    %p110 = scmp.eq.s32.totalorder %s109, 0
    %s112 = sadd.s32 %s111, 1
    %s113 = scalar_select %p110, %s111, %s112
    %p116 = pneg %p110
    %p117 = scmp.eq.s32.totalorder %s9, 1
    %p118 = por %p116, %p117
    %p119 = scmp.ne.s32.totalorder %s111, %s114
    %p120 = scmp.eq.s32.totalorder %s9, 0
    %p121 = por %p119, %p120
    %p122 = scmp.ne.s32.totalorder %s111, %s114
    %p123 = scmp.eq.s32.totalorder %s14, 1
    %p124 = por %p122, %p123
    %p125 = scmp.ne.s32.totalorder %s114, %s115
    %p126 = scmp.eq.s32.totalorder %s14, 0
    %p127 = por %p125, %p126
    %p128 = scmp.ne.s32.totalorder %s114, %s115
    %p129 = scmp.eq.s32.totalorder %s15, 1
    %p130 = por %p128, %p129
    %p132 = scmp.ne.s32.totalorder %s115, %s131
    %p133 = scmp.eq.s32.totalorder %s15, 0
    %p134 = por %p132, %p133
    %p135 = scmp.le.s32.totalorder 1, %s9
    %p136 = scmp.lt.s32.totalorder %s9, 3
    %p137 = pnand %p135, %p136
    %p138 = pneg %p137
    // Predicated region
    $region9: #{resnet_block_forward.2} parent=5 // pred_check
      _
    $region10: #{resnet_block_forward.2} parent=5 // pred_check_branch
      %140 = sbr.rel (%p137) target = $region12
    $region11: #{resnet_block_forward.2} parent=5 // pred_region
      %s141 = ssub.s32 %s9, 1
      // Predicated region
      $region13: #{resnet_block_forward.2} parent=11 // pred_check
        %p142 = pneg %p73
      $region14: #{resnet_block_forward.2} parent=11 // pred_check_branch
        %144 = sbr.rel (%p142) target = $region16
      $region15: #{resnet_block_forward.2} parent=11 // pred_region
        %p145 = scmp.lt.s32.totalorder %s19, 0
        %s146 = scalar_select %p145, %s19, 0
        %s147 = smul.addr %s146, 4
        %s148 = scalar_lea.vmem %s1, %s147
      $region16: #{resnet_block_forward.2} parent=11 // pred_fallthru
        _
      // Predicated region
      $region17: #{resnet_block_forward.2} parent=11 // pred_check
        %p149 = pneg %p99
      $region18: #{resnet_block_forward.2} parent=11 // pred_check_branch
        %151 = sbr.rel (%p149) target = $region20
      $region19: #{resnet_block_forward.2} parent=11 // pred_region
        %p152 = scmp.lt.s32.totalorder %s19, 0
        %s153 = scalar_select %p152, %s19, 0
        %s154 = scalar_lea.vmem %s2, %s153
      $region20: #{resnet_block_forward.2} parent=11 // pred_fallthru
        _
    $region12: #{resnet_block_forward.2} parent=5 // pred_fallthru
      _
    %p155 = scmp.lt.s32.totalorder %s9, 2
    // Predicated region
    $region21: #{resnet_block_forward.2} parent=5 // pred_check
      %p156 = pneg %p155
    $region22: #{resnet_block_forward.2} parent=5 // pred_check_branch
      %158 = sbr.rel (%p156) target = $region24
    $region23: #{resnet_block_forward.2} parent=5 // pred_region
      // Predicated region
      $region25: #{resnet_block_forward.2} parent=23 // pred_check
        %p159 = pneg %p41
      $region26: #{resnet_block_forward.2} parent=23 // pred_check_branch
        %161 = sbr.rel (%p159) target = $region28
      $region27: #{resnet_block_forward.2} parent=23 // pred_region
        %p162 = scmp.lt.s32.totalorder %s16, 1
        %s163 = scalar_select %p162, %s16, 1
        %s164 = smul.addr %s163, 41
        %s165 = smul.addr %s164, 4
        %s166 = scalar_lea.vmem %s0, %s165
      $region28: #{resnet_block_forward.2} parent=23 // pred_fallthru
        _
    $region24: #{resnet_block_forward.2} parent=5 // pred_fallthru
      _
    %p167 = scmp.le.s32.totalorder 1, %s9
    %p168 = scmp.lt.s32.totalorder %s9, 3
    %p169 = pnand %p167, %p168
    %p170 = pneg %p169
    // Predicated region
    $region29: #{resnet_block_forward.2} parent=5 // pred_check
      _
    $region30: #{resnet_block_forward.2} parent=5 // pred_check_branch
      %172 = sbr.rel (%p169) target = $region32
    $region31: #{resnet_block_forward.2} parent=5 // pred_region
      %s173 = ssub.s32 %s9, 1
      %p174 = scmp.lt.s32.totalorder %s18, 1
      %s175 = scalar_select %p174, %s18, 1
      %s176 = smul.addr %s175, 41
      %s177 = smul.addr %s176, 4
      %s178 = scalar_lea.vmem %s0, %s177
      %p179 = pneg %p47
      %p180 = pneg %p44
      %p181 = scmp.lt.s32.totalorder %s19, 0
      %s182 = scalar_select %p181, %s19, 0
      %s183 = smul.addr %s182, 4
      %s184 = scalar_lea.vmem %s1, %s183
      %p185 = pneg %p73
      %p186 = pneg %p70
      %p187 = scmp.lt.s32.totalorder %s19, 0
      %s188 = scalar_select %p187, %s19, 0
      %s189 = scalar_lea.vmem %s2, %s188
      %p190 = pneg %p99
      %p191 = pneg %p96
      %p192 = pneg %p127
      %p193 = pneg %p124
      %p194 = scmp.lt.s32.totalorder %s18, 1
      %s195 = scalar_select %p194, %s18, 1
      %p196 = scmp.lt.s32.totalorder %s19, 0
      %s197 = scalar_select %p196, %s19, 0
      %s198 = smul.addr %s195, 9
      %s199 = sadd.s32 %s197, %s198
      %s200 = smul.addr %s199, 4
      %s201 = scalar_lea.vmem %s3, %s200
      %p202 = scmp.lt.s32.totalorder %s18, 1
      %s203 = scalar_select %p202, %s18, 1
      %s204 = smul.addr %s203, 41
      %s205 = smul.addr %s204, 4
      %s206 = scalar_lea.vmem %s0, %s205
      %p207 = scmp.lt.s32.totalorder %s19, 0
      %s208 = scalar_select %p207, %s19, 0
      %s209 = smul.addr %s208, 4
      %s210 = scalar_lea.vmem %s1, %s209
      %p211 = scmp.lt.s32.totalorder %s19, 0
      %s212 = scalar_select %p211, %s19, 0
      %s213 = scalar_lea.vmem %s2, %s212
      %p214 = scmp.lt.s32.totalorder %s18, 1
      %s215 = scalar_select %p214, %s18, 1
      %p216 = scmp.lt.s32.totalorder %s19, 0
      %s217 = scalar_select %p216, %s19, 0
      %s218 = smul.addr %s215, 9
      %s219 = sadd.s32 %s217, %s218
      %s220 = smul.addr %s219, 4
      %s221 = scalar_lea.vmem %s3, %s220
      %223 = vst [vmem:[#allocation2] sm:$0xff] 0.0
      %224 = vst [vmem:[#allocation2 + $0x8] sm:$0xff] 0.0
      %225 = vst [vmem:[#allocation2 + $0x10] sm:$0xff] 0.0
      %226 = vst [vmem:[#allocation2 + $0x18] sm:$0xff] 0.0
      %227 = vst [vmem:[#allocation2 + $0x20] sm:$0xff] 0.0
      %228 = vst [vmem:[#allocation2 + $0x28] sm:$0xff] 0.0
      %229 = vst [vmem:[#allocation2 + $0x30] sm:$0xff] 0.0
      %230 = vst [vmem:[#allocation2 + $0x38] sm:$0xff] 0.0
      %231 = vst [vmem:[#allocation2 + $0x40] sm:$0xff] 0.0
      %v232 = vld [vmem:[#allocation2] sm:$0xff]
      %v233 = vld [vmem:[#allocation2 + $0x8] sm:$0xff]
      %v234 = vld [vmem:[#allocation2 + $0x10] sm:$0xff]
      %v235 = vld [vmem:[#allocation2 + $0x18] sm:$0xff]
      %v236 = vld [vmem:[#allocation2 + $0x20] sm:$0xff]
      %v237 = vld [vmem:[#allocation2 + $0x28] sm:$0xff]
      %v238 = vld [vmem:[#allocation2 + $0x30] sm:$0xff]
      %v239 = vld [vmem:[#allocation2 + $0x38] sm:$0xff]
      %v240 = vld [vmem:[#allocation2 + $0x40] sm:$0xff]
      %v241 = vld [vmem:[%s206] sm:$0xf]
      %v242 = vld [vmem:[%s206 + $0x4] sm:$0xf]
      %v243 = vld [vmem:[%s206 + $0x8] sm:$0xf]
      %v244 = vld [vmem:[%s206 + $0xc] sm:$0xf]
      %v245 = vld [vmem:[%s206 + $0x10] sm:$0xf]
      %v246 = vld [vmem:[%s206 + $0x14] sm:$0xf]
      %v247 = vld [vmem:[%s206 + $0x18] sm:$0xf]
      %v248 = vld [vmem:[%s206 + $0x1c] sm:$0xf]
      %v249 = vld [vmem:[%s206 + $0x20] sm:$0xf]
      %v250 = vld [vmem:[%s210] sm:$0xf]
      %v260 = vunpack.c.l.b16 %v241
      %v261 = vunpack.c.l.b16 %v242
      %v262 = vunpack.c.l.b16 %v243
      %v263 = vunpack.c.l.b16 %v244
      %v264 = vunpack.c.l.b16 %v245
      %v265 = vunpack.c.l.b16 %v246
      %v266 = vunpack.c.l.b16 %v247
      %v267 = vunpack.c.l.b16 %v248
      %v268 = vunpack.c.l.b16 %v249
      %v269 = vpack.c.b16 %v261, %v260
      %v270 = vpack.c.b16 %v263, %v262
      %v271 = vpack.c.b16 %v265, %v264
      %v272 = vpack.c.b16 %v267, %v266
      %v273 = vpack.c.b16 %v268, %v268
      %vm274 = vcmask 64512
      %v276 = vsel %vm274, %v269, 0
      %v279 = vsel %vm274, %v270, 0
      %v282 = vsel %vm274, %v271, 0
      %v285 = vsel %vm274, %v272, 0
      %v288 = vsel %vm274, %v273, 0
      %vm290 = vcmask 1043456
      %v292 = vsel %vm290, %v250, 0
      %294 = vmatprep.subr.bf16.mxu0 0
      %295 = vmatpush1.bf16.msra.mxu0 %v292
      %296 = vmatprep.subr.bf16.mxu0 0
      %297 = vmatpush1.bf16.msra.mxu0 0
      %298 = vmatprep.subr.bf16.mxu0 0
      %299 = vmatpush1.bf16.msra.mxu0 0
      %300 = vmatprep.subr.bf16.mxu0 0
      %301 = vmatpush1.bf16.msra.mxu0 0
      %302 = vmatprep.subr.bf16.mxu0 0
      %303 = vmatpush1.bf16.msra.mxu0 0
      %304 = vmatprep.subr.bf16.mxu0 0
      %305 = vmatpush1.bf16.msra.mxu0 0
      %306 = vmatprep.subr.bf16.mxu0 0
      %307 = vmatpush1.bf16.msra.mxu0 0
      %308 = vmatprep.subr.bf16.mxu0 0
      %309 = vmatpush1.bf16.msra.mxu0 0
      %310 = vmatprep.subr.bf16.mxu0 0
      %311 = vmatpush1.bf16.msra.mxu0 0
      %312 = vmatprep.subr.bf16.mxu0 0
      %313 = vmatpush1.bf16.msra.mxu0 0
      %314 = vmatprep.subr.bf16.mxu0 0
      %315 = vmatpush1.bf16.msra.mxu0 0
      %316 = vmatprep.subr.bf16.mxu0 0
      %317 = vmatpush1.bf16.msra.mxu0 0
      %318 = vmatprep.subr.bf16.mxu0 0
      %319 = vmatpush1.bf16.msra.mxu0 0
      %320 = vmatprep.subr.bf16.mxu0 0
      %321 = vmatpush1.bf16.msra.mxu0 0
      %322 = vmatprep.subr.bf16.mxu0 0
      %323 = vmatpush1.bf16.msra.mxu0 0
      %324 = vmatprep.subr.bf16.mxu0 0
      %325 = vmatpush1.bf16.msra.mxu0 0
      %326 = vmatprep.mubr.bf16.mxu0 0
      %327 = vmatmul.mubr.bf16.gmra.mrb[0].mxu0 %v276
      %v328 = vpop.f32.mrb[0].mxu0
      %v329 = vadd.f32 0.0, %v328
      %v330 = vpop.f32.mrb[0].mxu0
      %v331 = vpop.f32.mrb[0].mxu0
      %v332 = vadd.f32 0.0, %v331
      %v333 = vpop.f32.mrb[0].mxu0
      %334 = vmatprep.mubr.bf16.mxu0 0
      %335 = vmatmul.mubr.bf16.gmra.mrb[0].mxu0 %v279
      %v336 = vpop.f32.mrb[0].mxu0
      %v337 = vadd.f32 0.0, %v336
      %v338 = vpop.f32.mrb[0].mxu0
      %v339 = vpop.f32.mrb[0].mxu0
      %v340 = vadd.f32 0.0, %v339
      %v341 = vpop.f32.mrb[0].mxu0
      %342 = vmatprep.mubr.bf16.mxu0 0
      %343 = vmatmul.mubr.bf16.gmra.mrb[0].mxu0 %v282
      %v344 = vpop.f32.mrb[0].mxu0
      %v345 = vadd.f32 0.0, %v344
      %v346 = vpop.f32.mrb[0].mxu0
      %v347 = vpop.f32.mrb[0].mxu0
      %v348 = vadd.f32 0.0, %v347
      %v349 = vpop.f32.mrb[0].mxu0
      %350 = vmatprep.mubr.bf16.mxu0 0
      %351 = vmatmul.mubr.bf16.gmra.mrb[0].mxu0 %v285
      %v352 = vpop.f32.mrb[0].mxu0
      %v353 = vadd.f32 0.0, %v352
      %v354 = vpop.f32.mrb[0].mxu0
      %v355 = vpop.f32.mrb[0].mxu0
      %v356 = vadd.f32 0.0, %v355
      %v357 = vpop.f32.mrb[0].mxu0
      %358 = vmatprep.mubr.bf16.mxu0 0
      %359 = vmatmul.mubr.bf16.gmra.mrb[0].mxu0 %v288
      %v360 = vpop.f32.mrb[0].mxu0
      %v361 = vadd.f32 0.0, %v360
      %v362 = vpop.f32.mrb[0].mxu0
      %v363 = vpop.f32.mrb[0].mxu0
      %v364 = vpop.f32.mrb[0].mxu0
      %365 = vdwg.mxu0
      %v366 = vadd.f32 %v232, %v329
      %v367 = vadd.f32 %v233, %v332
      %v368 = vadd.f32 %v234, %v337
      %v369 = vadd.f32 %v235, %v340
      %v370 = vadd.f32 %v236, %v345
      %v371 = vadd.f32 %v237, %v348
      %v372 = vadd.f32 %v238, %v353
      %v373 = vadd.f32 %v239, %v356
      %v374 = vadd.f32 %v240, %v361
      %375 = vst [vmem:[#allocation2] sm:$0xff] %v366
      %376 = vst [vmem:[#allocation2 + $0x8] sm:$0xff] %v367
      %377 = vst [vmem:[#allocation2 + $0x10] sm:$0xff] %v368
      %378 = vst [vmem:[#allocation2 + $0x18] sm:$0xff] %v369
      %379 = vst [vmem:[#allocation2 + $0x20] sm:$0xff] %v370
      %380 = vst [vmem:[#allocation2 + $0x28] sm:$0xff] %v371
      %381 = vst [vmem:[#allocation2 + $0x30] sm:$0xff] %v372
      %382 = vst [vmem:[#allocation2 + $0x38] sm:$0xff] %v373
      %383 = vst [vmem:[#allocation2 + $0x40] sm:$0xff] %v374
      %v384 = vld [vmem:[#allocation2] sm:$0xff]
      %v385 = vld [vmem:[#allocation2 + $0x8] sm:$0xff]
      %v386 = vld [vmem:[#allocation2 + $0x10] sm:$0xff]
      %v387 = vld [vmem:[#allocation2 + $0x18] sm:$0xff]
      %v388 = vld [vmem:[#allocation2 + $0x20] sm:$0xff]
      %v389 = vld [vmem:[#allocation2 + $0x28] sm:$0xff]
      %v390 = vld [vmem:[#allocation2 + $0x30] sm:$0xff]
      %v391 = vld [vmem:[#allocation2 + $0x38] sm:$0xff]
      %v392 = vld [vmem:[#allocation2 + $0x40] sm:$0xff]
      %v393 = vld [vmem:[%s206 + $0x28] sm:$0xf]
      %v394 = vld [vmem:[%s206 + $0x2c] sm:$0xf]
      %v395 = vld [vmem:[%s206 + $0x30] sm:$0xf]
      %v396 = vld [vmem:[%s206 + $0x34] sm:$0xf]
      %v397 = vld [vmem:[%s206 + $0x38] sm:$0xf]
      %v398 = vld [vmem:[%s206 + $0x3c] sm:$0xf]
      %v399 = vld [vmem:[%s206 + $0x40] sm:$0xf]
      %v400 = vld [vmem:[%s206 + $0x44] sm:$0xf]
      %v401 = vld [vmem:[%s206 + $0x48] sm:$0xf]
      %v402 = vld [vmem:[%s206 + $0x4c] sm:$0x1]
      %s403 = scalar_lea.vmem %s210, 4
      %v404 = vld [vmem:[%s403] sm:$0xf]
      %v415 = vunpack.c.l.b16 %v393
      %v416 = vunpack.c.l.b16 %v394
      %v417 = vunpack.c.l.b16 %v395
      %v418 = vunpack.c.l.b16 %v396
      %v419 = vunpack.c.l.b16 %v397
      %v420 = vunpack.c.l.b16 %v398
      %v421 = vunpack.c.l.b16 %v399
      %v422 = vunpack.c.l.b16 %v400
      %v423 = vunpack.c.l.b16 %v401
      %v424 = vunpack.c.l.b16 %v402
      %v425 = vpack.c.b16 %v416, %v415
      %v426 = vpack.c.b16 %v418, %v417
      %v427 = vpack.c.b16 %v420, %v419
      %v428 = vpack.c.b16 %v422, %v421
      %v429 = vpack.c.b16 %v424, %v423
      %vm430 = vsmask.f32 7424
      %v432 = vshrl.u32 %v425, 16
      %v434 = vshll.u32 %v425, 16
      %v436 = vrot.slane %v434, 1
      %v437 = vor.u32 %v432, %v436
      %v439 = vshll.u32 %v426, 16
      %v441 = vrot.slane %v439, 1
      %v442 = vsel %vm430, %v437, %v441
      %v443 = vshrl.u32 %v426, 16
      %v445 = vor.u32 %v443, %v441
      %v447 = vshll.u32 %v427, 16
      %v449 = vrot.slane %v447, 1
      %v450 = vsel %vm430, %v445, %v449
      %v451 = vshrl.u32 %v427, 16
      %v453 = vor.u32 %v451, %v449
      %v455 = vshll.u32 %v428, 16
      %v457 = vrot.slane %v455, 1
      %v458 = vsel %vm430, %v453, %v457
      %v459 = vshrl.u32 %v428, 16
      %v461 = vor.u32 %v459, %v457
      %v463 = vshll.u32 %v429, 16
      %v465 = vrot.slane %v463, 1
      %v466 = vsel %vm430, %v461, %v465
      %v467 = vshrl.u32 %v429, 16
      %v469 = vor.u32 %v467, %v465
      %v471 = vsel %vm274, %v442, 0
      %v474 = vsel %vm274, %v450, 0
      %v477 = vsel %vm274, %v458, 0
      %v480 = vsel %vm274, %v466, 0
      %v483 = vsel %vm274, %v469, 0
      %v486 = vsel %vm290, %v404, 0
      %488 = vmatprep.subr.bf16.mxu0 0
      %489 = vmatpush1.bf16.msra.mxu0 %v486
      %490 = vmatprep.subr.bf16.mxu0 0
      %491 = vmatpush1.bf16.msra.mxu0 0
      %492 = vmatprep.subr.bf16.mxu0 0
      %493 = vmatpush1.bf16.msra.mxu0 0
      %494 = vmatprep.subr.bf16.mxu0 0
      %495 = vmatpush1.bf16.msra.mxu0 0
      %496 = vmatprep.subr.bf16.mxu0 0
      %497 = vmatpush1.bf16.msra.mxu0 0
      %498 = vmatprep.subr.bf16.mxu0 0
      %499 = vmatpush1.bf16.msra.mxu0 0
      %500 = vmatprep.subr.bf16.mxu0 0
      %501 = vmatpush1.bf16.msra.mxu0 0
      %502 = vmatprep.subr.bf16.mxu0 0
      %503 = vmatpush1.bf16.msra.mxu0 0
      %504 = vmatprep.subr.bf16.mxu0 0
      %505 = vmatpush1.bf16.msra.mxu0 0
      %506 = vmatprep.subr.bf16.mxu0 0
      %507 = vmatpush1.bf16.msra.mxu0 0
      %508 = vmatprep.subr.bf16.mxu0 0
      %509 = vmatpush1.bf16.msra.mxu0 0
      %510 = vmatprep.subr.bf16.mxu0 0
      %511 = vmatpush1.bf16.msra.mxu0 0
      %512 = vmatprep.subr.bf16.mxu0 0
      %513 = vmatpush1.bf16.msra.mxu0 0
      %514 = vmatprep.subr.bf16.mxu0 0
      %515 = vmatpush1.bf16.msra.mxu0 0
      %516 = vmatprep.subr.bf16.mxu0 0
      %517 = vmatpush1.bf16.msra.mxu0 0
      %518 = vmatprep.subr.bf16.mxu0 0
      %519 = vmatpush1.bf16.msra.mxu0 0
      %520 = vmatprep.mubr.bf16.mxu0 0
      %521 = vmatmul.mubr.bf16.gmra.mrb[0].mxu0 %v471
      %v522 = vpop.f32.mrb[0].mxu0
      %v523 = vadd.f32 0.0, %v522
      %v524 = vpop.f32.mrb[0].mxu0
      %v525 = vpop.f32.mrb[0].mxu0
      %v526 = vadd.f32 0.0, %v525
      %v527 = vpop.f32.mrb[0].mxu0
      %528 = vmatprep.mubr.bf16.mxu0 0
      %529 = vmatmul.mubr.bf16.gmra.mrb[0].mxu0 %v474
      %v530 = vpop.f32.mrb[0].mxu0
      %v531 = vadd.f32 0.0, %v530
      %v532 = vpop.f32.mrb[0].mxu0
      %v533 = vpop.f32.mrb[0].mxu0
      %v534 = vadd.f32 0.0, %v533
      %v535 = vpop.f32.mrb[0].mxu0
      %536 = vmatprep.mubr.bf16.mxu0 0
      %537 = vmatmul.mubr.bf16.gmra.mrb[0].mxu0 %v477
      %v538 = vpop.f32.mrb[0].mxu0
      %v539 = vadd.f32 0.0, %v538
      %v540 = vpop.f32.mrb[0].mxu0
      %v541 = vpop.f32.mrb[0].mxu0
      %v542 = vadd.f32 0.0, %v541
      %v543 = vpop.f32.mrb[0].mxu0
      %544 = vmatprep.mubr.bf16.mxu0 0
      %545 = vmatmul.mubr.bf16.gmra.mrb[0].mxu0 %v480
      %v546 = vpop.f32.mrb[0].mxu0
      %v547 = vadd.f32 0.0, %v546
      %v548 = vpop.f32.mrb[0].mxu0
      %v549 = vpop.f32.mrb[0].mxu0
      %v550 = vadd.f32 0.0, %v549
      %v551 = vpop.f32.mrb[0].mxu0
      %552 = vmatprep.mubr.bf16.mxu0 0
      %553 = vmatmul.mubr.bf16.gmra.mrb[0].mxu0 %v483
      %v554 = vpop.f32.mrb[0].mxu0
      %v555 = vadd.f32 0.0, %v554
      %v556 = vpop.f32.mrb[0].mxu0
      %v557 = vpop.f32.mrb[0].mxu0
      %v558 = vpop.f32.mrb[0].mxu0
      %559 = vdwg.mxu0
      %v560 = vadd.f32 %v384, %v523
      %v561 = vadd.f32 %v385, %v526
      %v562 = vadd.f32 %v386, %v531
      %v563 = vadd.f32 %v387, %v534
      %v564 = vadd.f32 %v388, %v539
      %v565 = vadd.f32 %v389, %v542
      %v566 = vadd.f32 %v390, %v547
      %v567 = vadd.f32 %v391, %v550
      %v568 = vadd.f32 %v392, %v555
      %569 = vst [vmem:[#allocation2] sm:$0xff] %v560
      %570 = vst [vmem:[#allocation2 + $0x8] sm:$0xff] %v561
      %571 = vst [vmem:[#allocation2 + $0x10] sm:$0xff] %v562
      %572 = vst [vmem:[#allocation2 + $0x18] sm:$0xff] %v563
      %573 = vst [vmem:[#allocation2 + $0x20] sm:$0xff] %v564
      %574 = vst [vmem:[#allocation2 + $0x28] sm:$0xff] %v565
      %575 = vst [vmem:[#allocation2 + $0x30] sm:$0xff] %v566
      %576 = vst [vmem:[#allocation2 + $0x38] sm:$0xff] %v567
      %577 = vst [vmem:[#allocation2 + $0x40] sm:$0xff] %v568
      %v578 = vld [vmem:[#allocation2] sm:$0xff]
      %v579 = vld [vmem:[#allocation2 + $0x8] sm:$0xff]
      %v580 = vld [vmem:[#allocation2 + $0x10] sm:$0xff]
      %v581 = vld [vmem:[#allocation2 + $0x18] sm:$0xff]
      %v582 = vld [vmem:[#allocation2 + $0x20] sm:$0xff]
      %v583 = vld [vmem:[#allocation2 + $0x28] sm:$0xff]
      %v584 = vld [vmem:[#allocation2 + $0x30] sm:$0xff]
      %v585 = vld [vmem:[#allocation2 + $0x38] sm:$0xff]
      %v586 = vld [vmem:[#allocation2 + $0x40] sm:$0xff]
      %v587 = vld [vmem:[%s206] sm:$0xf]
      %v588 = vld [vmem:[%s206 + $0x4] sm:$0xf]
      %v589 = vld [vmem:[%s206 + $0x8] sm:$0xf]
      %v590 = vld [vmem:[%s206 + $0xc] sm:$0xf]
      %v591 = vld [vmem:[%s206 + $0x10] sm:$0xf]
      %v592 = vld [vmem:[%s206 + $0x14] sm:$0xf]
      %v593 = vld [vmem:[%s206 + $0x18] sm:$0xf]
      %v594 = vld [vmem:[%s206 + $0x1c] sm:$0xf]
      %v595 = vld [vmem:[%s206 + $0x20] sm:$0xf]
      %v596 = vld [vmem:[%s206 + $0x24] sm:$0x1]
      %s597 = scalar_lea.vmem %s210, 8
      %v598 = vld [vmem:[%s597] sm:$0xf]
      %v609 = vunpack.c.l.b16 %v587
      %v610 = vunpack.c.l.b16 %v588
      %v611 = vunpack.c.l.b16 %v589
      %v612 = vunpack.c.l.b16 %v590
      %v613 = vunpack.c.l.b16 %v591
      %v614 = vunpack.c.l.b16 %v592
      %v615 = vunpack.c.l.b16 %v593
      %v616 = vunpack.c.l.b16 %v594
      %v617 = vunpack.c.l.b16 %v595
      %v618 = vunpack.c.l.b16 %v596
      %v619 = vpack.c.b16 %v610, %v609
      %v620 = vpack.c.b16 %v612, %v611
      %v621 = vpack.c.b16 %v614, %v613
      %v622 = vpack.c.b16 %v616, %v615
      %v623 = vpack.c.b16 %v618, %v617
      %v625 = vshrl.u32 %v619, 16
      %v627 = vshll.u32 %v619, 16
      %v629 = vrot.slane %v627, 1
      %v630 = vor.u32 %v625, %v629
      %v632 = vshll.u32 %v620, 16
      %v634 = vrot.slane %v632, 1
      %v635 = vsel %vm430, %v630, %v634
      %v636 = vshrl.u32 %v620, 16
      %v638 = vor.u32 %v636, %v634
      %v640 = vshll.u32 %v621, 16
      %v642 = vrot.slane %v640, 1
      %v643 = vsel %vm430, %v638, %v642
      %v644 = vshrl.u32 %v621, 16
      %v646 = vor.u32 %v644, %v642
      %v648 = vshll.u32 %v622, 16
      %v650 = vrot.slane %v648, 1
      %v651 = vsel %vm430, %v646, %v650
      %v652 = vshrl.u32 %v622, 16
      %v654 = vor.u32 %v652, %v650
      %v656 = vshll.u32 %v623, 16
      %v658 = vrot.slane %v656, 1
      %v659 = vsel %vm430, %v654, %v658
      %v660 = vshrl.u32 %v623, 16
      %v662 = vor.u32 %v660, %v658
      %v664 = vsel %vm274, %v635, 0
      %v667 = vsel %vm274, %v643, 0
      %v670 = vsel %vm274, %v651, 0
      %v673 = vsel %vm274, %v659, 0
      %v676 = vsel %vm274, %v662, 0
      %v679 = vsel %vm290, %v598, 0
      %681 = vmatprep.subr.bf16.mxu0 0
      %682 = vmatpush1.bf16.msra.mxu0 %v679
      %683 = vmatprep.subr.bf16.mxu0 0
      %684 = vmatpush1.bf16.msra.mxu0 0
      %685 = vmatprep.subr.bf16.mxu0 0
      %686 = vmatpush1.bf16.msra.mxu0 0
      %687 = vmatprep.subr.bf16.mxu0 0
      %688 = vmatpush1.bf16.msra.mxu0 0
      %689 = vmatprep.subr.bf16.mxu0 0
      %690 = vmatpush1.bf16.msra.mxu0 0
      %691 = vmatprep.subr.bf16.mxu0 0
      %692 = vmatpush1.bf16.msra.mxu0 0
      %693 = vmatprep.subr.bf16.mxu0 0
      %694 = vmatpush1.bf16.msra.mxu0 0
      %695 = vmatprep.subr.bf16.mxu0 0
      %696 = vmatpush1.bf16.msra.mxu0 0
      %697 = vmatprep.subr.bf16.mxu0 0
      %698 = vmatpush1.bf16.msra.mxu0 0
      %699 = vmatprep.subr.bf16.mxu0 0
      %700 = vmatpush1.bf16.msra.mxu0 0
      %701 = vmatprep.subr.bf16.mxu0 0
      %702 = vmatpush1.bf16.msra.mxu0 0
      %703 = vmatprep.subr.bf16.mxu0 0
      %704 = vmatpush1.bf16.msra.mxu0 0
      %705 = vmatprep.subr.bf16.mxu0 0
      %706 = vmatpush1.bf16.msra.mxu0 0
      %707 = vmatprep.subr.bf16.mxu0 0
      %708 = vmatpush1.bf16.msra.mxu0 0
      %709 = vmatprep.subr.bf16.mxu0 0
      %710 = vmatpush1.bf16.msra.mxu0 0
      %711 = vmatprep.subr.bf16.mxu0 0
      %712 = vmatpush1.bf16.msra.mxu0 0
      %713 = vmatprep.mubr.bf16.mxu0 0
      %714 = vmatmul.mubr.bf16.gmra.mrb[0].mxu0 %v664
      %v715 = vpop.f32.mrb[0].mxu0
      %v716 = vadd.f32 0.0, %v715
      %v717 = vpop.f32.mrb[0].mxu0
      %v718 = vpop.f32.mrb[0].mxu0
      %v719 = vadd.f32 0.0, %v718
      %v720 = vpop.f32.mrb[0].mxu0
      %721 = vmatprep.mubr.bf16.mxu0 0
      %722 = vmatmul.mubr.bf16.gmra.mrb[0].mxu0 %v667
      %v723 = vpop.f32.mrb[0].mxu0
      %v724 = vadd.f32 0.0, %v723
      %v725 = vpop.f32.mrb[0].mxu0
      %v726 = vpop.f32.mrb[0].mxu0
      %v727 = vadd.f32 0.0, %v726
      %v728 = vpop.f32.mrb[0].mxu0
      %729 = vmatprep.mubr.bf16.mxu0 0
      %730 = vmatmul.mubr.bf16.gmra.mrb[0].mxu0 %v670
      %v731 = vpop.f32.mrb[0].mxu0
      %v732 = vadd.f32 0.0, %v731
      %v733 = vpop.f32.mrb[0].mxu0
      %v734 = vpop.f32.mrb[0].mxu0
      %v735 = vadd.f32 0.0, %v734
      %v736 = vpop.f32.mrb[0].mxu0
      %737 = vmatprep.mubr.bf16.mxu0 0
      %738 = vmatmul.mubr.bf16.gmra.mrb[0].mxu0 %v673
      %v739 = vpop.f32.mrb[0].mxu0
      %v740 = vadd.f32 0.0, %v739
      %v741 = vpop.f32.mrb[0].mxu0
      %v742 = vpop.f32.mrb[0].mxu0
      %v743 = vadd.f32 0.0, %v742
      %v744 = vpop.f32.mrb[0].mxu0
      %745 = vmatprep.mubr.bf16.mxu0 0
      %746 = vmatmul.mubr.bf16.gmra.mrb[0].mxu0 %v676
      %v747 = vpop.f32.mrb[0].mxu0
      %v748 = vadd.f32 0.0, %v747
      %v749 = vpop.f32.mrb[0].mxu0
      %v750 = vpop.f32.mrb[0].mxu0
      %v751 = vpop.f32.mrb[0].mxu0
      %752 = vdwg.mxu0
      %v753 = vadd.f32 %v578, %v716
      %v754 = vadd.f32 %v579, %v719
      %v755 = vadd.f32 %v580, %v724
      %v756 = vadd.f32 %v581, %v727
      %v757 = vadd.f32 %v582, %v732
      %v758 = vadd.f32 %v583, %v735
      %v759 = vadd.f32 %v584, %v740
      %v760 = vadd.f32 %v585, %v743
      %v761 = vadd.f32 %v586, %v748
      %762 = vst [vmem:[#allocation2] sm:$0xff] %v753
      %763 = vst [vmem:[#allocation2 + $0x8] sm:$0xff] %v754
      %764 = vst [vmem:[#allocation2 + $0x10] sm:$0xff] %v755
      %765 = vst [vmem:[#allocation2 + $0x18] sm:$0xff] %v756
      %766 = vst [vmem:[#allocation2 + $0x20] sm:$0xff] %v757
      %767 = vst [vmem:[#allocation2 + $0x28] sm:$0xff] %v758
      %768 = vst [vmem:[#allocation2 + $0x30] sm:$0xff] %v759
      %769 = vst [vmem:[#allocation2 + $0x38] sm:$0xff] %v760
      %770 = vst [vmem:[#allocation2 + $0x40] sm:$0xff] %v761
      %v771 = vld [vmem:[#allocation2] sm:$0xff]
      %v772 = vld [vmem:[#allocation2 + $0x8] sm:$0xff]
      %v773 = vld [vmem:[#allocation2 + $0x10] sm:$0xff]
      %v774 = vld [vmem:[#allocation2 + $0x18] sm:$0xff]
      %v775 = vld [vmem:[#allocation2 + $0x20] sm:$0xff]
      %v776 = vld [vmem:[#allocation2 + $0x28] sm:$0xff]
      %v777 = vld [vmem:[#allocation2 + $0x30] sm:$0xff]
      %v778 = vld [vmem:[#allocation2 + $0x38] sm:$0xff]
      %v779 = vld [vmem:[#allocation2 + $0x40] sm:$0xff]
      %v780 = vld [vmem:[%s206 + $0x50] sm:$0xe]
      %v781 = vld [vmem:[%s206 + $0x54] sm:$0xf]
      %v782 = vld [vmem:[%s206 + $0x58] sm:$0xf]
      %v783 = vld [vmem:[%s206 + $0x5c] sm:$0xf]
      %v784 = vld [vmem:[%s206 + $0x60] sm:$0xf]
      %v785 = vld [vmem:[%s206 + $0x64] sm:$0xf]
      %v786 = vld [vmem:[%s206 + $0x68] sm:$0xf]
      %v787 = vld [vmem:[%s206 + $0x6c] sm:$0xf]
      %v788 = vld [vmem:[%s206 + $0x70] sm:$0xf]
      %v789 = vld [vmem:[%s206 + $0x74] sm:$0x1]
      %s790 = scalar_lea.vmem %s210, 12
      %v791 = vld [vmem:[%s790] sm:$0xf]
      %v802 = vunpack.c.l.b16 %v780
      %v803 = vunpack.c.l.b16 %v781
      %v804 = vunpack.c.l.b16 %v782
      %v805 = vunpack.c.l.b16 %v783
      %v806 = vunpack.c.l.b16 %v784
      %v807 = vunpack.c.l.b16 %v785
      %v808 = vunpack.c.l.b16 %v786
      %v809 = vunpack.c.l.b16 %v787
      %v810 = vunpack.c.l.b16 %v788
      %v811 = vunpack.c.l.b16 %v789
      %v812 = vpack.c.b16 %v803, %v802
      %v813 = vpack.c.b16 %v805, %v804
      %v814 = vpack.c.b16 %v807, %v806
      %v815 = vpack.c.b16 %v809, %v808
      %v816 = vpack.c.b16 %v811, %v810
      %vm817 = vcmask 1046528
      %v818 = vrot.slane %v812, 1
      %v819 = vrot.slane %v813, 1
      %v820 = vsel %vm817, %v818, %v819
      %v821 = vrot.slane %v814, 1
      %v822 = vsel %vm817, %v819, %v821
      %v823 = vrot.slane %v815, 1
      %v824 = vsel %vm817, %v821, %v823
      %v825 = vrot.slane %v816, 1
      %v826 = vsel %vm817, %v823, %v825
      %v828 = vsel %vm274, %v820, 0
      %v831 = vsel %vm274, %v822, 0
      %v834 = vsel %vm274, %v824, 0
      %v837 = vsel %vm274, %v826, 0
      %v840 = vsel %vm274, %v825, 0
      %v843 = vsel %vm290, %v791, 0
      %845 = vmatprep.subr.bf16.mxu0 0
      %846 = vmatpush1.bf16.msra.mxu0 %v843
      %847 = vmatprep.subr.bf16.mxu0 0
      %848 = vmatpush1.bf16.msra.mxu0 0
      %849 = vmatprep.subr.bf16.mxu0 0
      %850 = vmatpush1.bf16.msra.mxu0 0
      %851 = vmatprep.subr.bf16.mxu0 0
      %852 = vmatpush1.bf16.msra.mxu0 0
      %853 = vmatprep.subr.bf16.mxu0 0
      %854 = vmatpush1.bf16.msra.mxu0 0
      %855 = vmatprep.subr.bf16.mxu0 0
      %856 = vmatpush1.bf16.msra.mxu0 0
      %857 = vmatprep.subr.bf16.mxu0 0
      %858 = vmatpush1.bf16.msra.mxu0 0
      %859 = vmatprep.subr.bf16.mxu0 0
      %860 = vmatpush1.bf16.msra.mxu0 0
      %861 = vmatprep.subr.bf16.mxu0 0
      %862 = vmatpush1.bf16.msra.mxu0 0
      %863 = vmatprep.subr.bf16.mxu0 0
      %864 = vmatpush1.bf16.msra.mxu0 0
      %865 = vmatprep.subr.bf16.mxu0 0
      %866 = vmatpush1.bf16.msra.mxu0 0
      %867 = vmatprep.subr.bf16.mxu0 0
      %868 = vmatpush1.bf16.msra.mxu0 0
      %869 = vmatprep.subr.bf16.mxu0 0
      %870 = vmatpush1.bf16.msra.mxu0 0
      %871 = vmatprep.subr.bf16.mxu0 0
      %872 = vmatpush1.bf16.msra.mxu0 0
      %873 = vmatprep.subr.bf16.mxu0 0
      %874 = vmatpush1.bf16.msra.mxu0 0
      %875 = vmatprep.subr.bf16.mxu0 0
      %876 = vmatpush1.bf16.msra.mxu0 0
      %877 = vmatprep.mubr.bf16.mxu0 0
      %878 = vmatmul.mubr.bf16.gmra.mrb[0].mxu0 %v828
      %v879 = vpop.f32.mrb[0].mxu0
      %v880 = vadd.f32 0.0, %v879
      %v881 = vpop.f32.mrb[0].mxu0
      %v882 = vpop.f32.mrb[0].mxu0
      %v883 = vadd.f32 0.0, %v882
      %v884 = vpop.f32.mrb[0].mxu0
      %885 = vmatprep.mubr.bf16.mxu0 0
      %886 = vmatmul.mubr.bf16.gmra.mrb[0].mxu0 %v831
      %v887 = vpop.f32.mrb[0].mxu0
      %v888 = vadd.f32 0.0, %v887
      %v889 = vpop.f32.mrb[0].mxu0
      %v890 = vpop.f32.mrb[0].mxu0
      %v891 = vadd.f32 0.0, %v890
      %v892 = vpop.f32.mrb[0].mxu0
      %893 = vmatprep.mubr.bf16.mxu0 0
      %894 = vmatmul.mubr.bf16.gmra.mrb[0].mxu0 %v834
      %v895 = vpop.f32.mrb[0].mxu0
      %v896 = vadd.f32 0.0, %v895
      %v897 = vpop.f32.mrb[0].mxu0
      %v898 = vpop.f32.mrb[0].mxu0
      %v899 = vadd.f32 0.0, %v898
      %v900 = vpop.f32.mrb[0].mxu0
      %901 = vmatprep.mubr.bf16.mxu0 0
      %902 = vmatmul.mubr.bf16.gmra.mrb[0].mxu0 %v837
      %v903 = vpop.f32.mrb[0].mxu0
      %v904 = vadd.f32 0.0, %v903
      %v905 = vpop.f32.mrb[0].mxu0
      %v906 = vpop.f32.mrb[0].mxu0
      %v907 = vadd.f32 0.0, %v906
      %v908 = vpop.f32.mrb[0].mxu0
      %909 = vmatprep.mubr.bf16.mxu0 0
      %910 = vmatmul.mubr.bf16.gmra.mrb[0].mxu0 %v840
      %v911 = vpop.f32.mrb[0].mxu0
      %v912 = vadd.f32 0.0, %v911
      %v913 = vpop.f32.mrb[0].mxu0
      %v914 = vpop.f32.mrb[0].mxu0
      %v915 = vpop.f32.mrb[0].mxu0
      %916 = vdwg.mxu0
      %v917 = vadd.f32 %v771, %v880
      %v918 = vadd.f32 %v772, %v883
      %v919 = vadd.f32 %v773, %v888
      %v920 = vadd.f32 %v774, %v891
      %v921 = vadd.f32 %v775, %v896
      %v922 = vadd.f32 %v776, %v899
      %v923 = vadd.f32 %v777, %v904
      %v924 = vadd.f32 %v778, %v907
      %v925 = vadd.f32 %v779, %v912
      %926 = vst [vmem:[#allocation2] sm:$0xff] %v917
      %927 = vst [vmem:[#allocation2 + $0x8] sm:$0xff] %v918
      %928 = vst [vmem:[#allocation2 + $0x10] sm:$0xff] %v919
      %929 = vst [vmem:[#allocation2 + $0x18] sm:$0xff] %v920
      %930 = vst [vmem:[#allocation2 + $0x20] sm:$0xff] %v921
      %931 = vst [vmem:[#allocation2 + $0x28] sm:$0xff] %v922
      %932 = vst [vmem:[#allocation2 + $0x30] sm:$0xff] %v923
      %933 = vst [vmem:[#allocation2 + $0x38] sm:$0xff] %v924
      %934 = vst [vmem:[#allocation2 + $0x40] sm:$0xff] %v925
      %v935 = vld [vmem:[#allocation2] sm:$0xff]
      %v936 = vld [vmem:[#allocation2 + $0x8] sm:$0xff]
      %v937 = vld [vmem:[#allocation2 + $0x10] sm:$0xff]
      %v938 = vld [vmem:[#allocation2 + $0x18] sm:$0xff]
      %v939 = vld [vmem:[#allocation2 + $0x20] sm:$0xff]
      %v940 = vld [vmem:[#allocation2 + $0x28] sm:$0xff]
      %v941 = vld [vmem:[#allocation2 + $0x30] sm:$0xff]
      %v942 = vld [vmem:[#allocation2 + $0x38] sm:$0xff]
      %v943 = vld [vmem:[#allocation2 + $0x40] sm:$0xff]
      %v944 = vld [vmem:[%s206 + $0x78] sm:$0xe]
      %v945 = vld [vmem:[%s206 + $0x7c] sm:$0xf]
      %v946 = vld [vmem:[%s206 + $0x80] sm:$0xf]
      %v947 = vld [vmem:[%s206 + $0x84] sm:$0xf]
      %v948 = vld [vmem:[%s206 + $0x88] sm:$0xf]
      %v949 = vld [vmem:[%s206 + $0x8c] sm:$0xf]
      %v950 = vld [vmem:[%s206 + $0x90] sm:$0xf]
      %v951 = vld [vmem:[%s206 + $0x94] sm:$0xf]
      %v952 = vld [vmem:[%s206 + $0x98] sm:$0xf]
      %v953 = vld [vmem:[%s206 + $0x9c] sm:$0x3]
      %s954 = scalar_lea.vmem %s210, 16
      %v955 = vld [vmem:[%s954] sm:$0xf]
      %v966 = vunpack.c.l.b16 %v944
      %v967 = vunpack.c.l.b16 %v945
      %v968 = vunpack.c.l.b16 %v946
      %v969 = vunpack.c.l.b16 %v947
      %v970 = vunpack.c.l.b16 %v948
      %v971 = vunpack.c.l.b16 %v949
      %v972 = vunpack.c.l.b16 %v950
      %v973 = vunpack.c.l.b16 %v951
      %v974 = vunpack.c.l.b16 %v952
      %v975 = vunpack.c.l.b16 %v953
      %v976 = vpack.c.b16 %v967, %v966
      %v977 = vpack.c.b16 %v969, %v968
      %v978 = vpack.c.b16 %v971, %v970
      %v979 = vpack.c.b16 %v973, %v972
      %v980 = vpack.c.b16 %v975, %v974
      %vm981 = vsmask.f32 6400
      %v983 = vshrl.u32 %v976, 16
      %v985 = vrot.slane %v983, 1
      %v986 = vshll.u32 %v976, 16
      %v988 = vrot.slane %v986, 2
      %v989 = vor.u32 %v985, %v988
      %v991 = vshrl.u32 %v977, 16
      %v993 = vrot.slane %v991, 1
      %v994 = vshll.u32 %v977, 16
      %v996 = vrot.slane %v994, 2
      %v997 = vor.u32 %v993, %v996
      %v998 = vsel %vm981, %v989, %v997
      %v1000 = vshrl.u32 %v978, 16
      %v1002 = vrot.slane %v1000, 1
      %v1003 = vshll.u32 %v978, 16
      %v1005 = vrot.slane %v1003, 2
      %v1006 = vor.u32 %v1002, %v1005
      %v1007 = vsel %vm981, %v997, %v1006
      %v1009 = vshrl.u32 %v979, 16
      %v1011 = vrot.slane %v1009, 1
      %v1012 = vshll.u32 %v979, 16
      %v1014 = vrot.slane %v1012, 2
      %v1015 = vor.u32 %v1011, %v1014
      %v1016 = vsel %vm981, %v1006, %v1015
      %v1018 = vshrl.u32 %v980, 16
      %v1020 = vrot.slane %v1018, 1
      %v1021 = vshll.u32 %v980, 16
      %v1023 = vrot.slane %v1021, 2
      %v1024 = vor.u32 %v1020, %v1023
      %v1025 = vsel %vm981, %v1015, %v1024
      %v1027 = vsel %vm274, %v998, 0
      %v1030 = vsel %vm274, %v1007, 0
      %v1033 = vsel %vm274, %v1016, 0
      %v1036 = vsel %vm274, %v1025, 0
      %v1039 = vsel %vm274, %v1024, 0
      %v1042 = vsel %vm290, %v955, 0
      %1044 = vmatprep.subr.bf16.mxu0 0
      %1045 = vmatpush1.bf16.msra.mxu0 %v1042
      %1046 = vmatprep.subr.bf16.mxu0 0
      %1047 = vmatpush1.bf16.msra.mxu0 0
      %1048 = vmatprep.subr.bf16.mxu0 0
      %1049 = vmatpush1.bf16.msra.mxu0 0
      %1050 = vmatprep.subr.bf16.mxu0 0
      %1051 = vmatpush1.bf16.msra.mxu0 0
      %1052 = vmatprep.subr.bf16.mxu0 0
      %1053 = vmatpush1.bf16.msra.mxu0 0
      %1054 = vmatprep.subr.bf16.mxu0 0
      %1055 = vmatpush1.bf16.msra.mxu0 0
      %1056 = vmatprep.subr.bf16.mxu0 0
      %1057 = vmatpush1.bf16.msra.mxu0 0
      %1058 = vmatprep.subr.bf16.mxu0 0
      %1059 = vmatpush1.bf16.msra.mxu0 0
      %1060 = vmatprep.subr.bf16.mxu0 0
      %1061 = vmatpush1.bf16.msra.mxu0 0
      %1062 = vmatprep.subr.bf16.mxu0 0
      %1063 = vmatpush1.bf16.msra.mxu0 0
      %1064 = vmatprep.subr.bf16.mxu0 0
      %1065 = vmatpush1.bf16.msra.mxu0 0
      %1066 = vmatprep.subr.bf16.mxu0 0
      %1067 = vmatpush1.bf16.msra.mxu0 0
      %1068 = vmatprep.subr.bf16.mxu0 0
      %1069 = vmatpush1.bf16.msra.mxu0 0
      %1070 = vmatprep.subr.bf16.mxu0 0
      %1071 = vmatpush1.bf16.msra.mxu0 0
      %1072 = vmatprep.subr.bf16.mxu0 0
      %1073 = vmatpush1.bf16.msra.mxu0 0
      %1074 = vmatprep.subr.bf16.mxu0 0
      %1075 = vmatpush1.bf16.msra.mxu0 0
      %1076 = vmatprep.mubr.bf16.mxu0 0
      %1077 = vmatmul.mubr.bf16.gmra.mrb[0].mxu0 %v1027
      %v1078 = vpop.f32.mrb[0].mxu0
      %v1079 = vadd.f32 0.0, %v1078
      %v1080 = vpop.f32.mrb[0].mxu0
      %v1081 = vpop.f32.mrb[0].mxu0
      %v1082 = vadd.f32 0.0, %v1081
      %v1083 = vpop.f32.mrb[0].mxu0
      %1084 = vmatprep.mubr.bf16.mxu0 0
      %1085 = vmatmul.mubr.bf16.gmra.mrb[0].mxu0 %v1030
      %v1086 = vpop.f32.mrb[0].mxu0
      %v1087 = vadd.f32 0.0, %v1086
      %v1088 = vpop.f32.mrb[0].mxu0
      %v1089 = vpop.f32.mrb[0].mxu0
      %v1090 = vadd.f32 0.0, %v1089
      %v1091 = vpop.f32.mrb[0].mxu0
      %1092 = vmatprep.mubr.bf16.mxu0 0
      %1093 = vmatmul.mubr.bf16.gmra.mrb[0].mxu0 %v1033
      %v1094 = vpop.f32.mrb[0].mxu0
      %v1095 = vadd.f32 0.0, %v1094
      %v1096 = vpop.f32.mrb[0].mxu0
      %v1097 = vpop.f32.mrb[0].mxu0
      %v1098 = vadd.f32 0.0, %v1097
      %v1099 = vpop.f32.mrb[0].mxu0
      %1100 = vmatprep.mubr.bf16.mxu0 0
      %1101 = vmatmul.mubr.bf16.gmra.mrb[0].mxu0 %v1036
      %v1102 = vpop.f32.mrb[0].mxu0
      %v1103 = vadd.f32 0.0, %v1102
      %v1104 = vpop.f32.mrb[0].mxu0
      %v1105 = vpop.f32.mrb[0].mxu0
      %v1106 = vadd.f32 0.0, %v1105
      %v1107 = vpop.f32.mrb[0].mxu0
      %1108 = vmatprep.mubr.bf16.mxu0 0
      %1109 = vmatmul.mubr.bf16.gmra.mrb[0].mxu0 %v1039
      %v1110 = vpop.f32.mrb[0].mxu0
      %v1111 = vadd.f32 0.0, %v1110
      %v1112 = vpop.f32.mrb[0].mxu0
      %v1113 = vpop.f32.mrb[0].mxu0
      %v1114 = vpop.f32.mrb[0].mxu0
      %1115 = vdwg.mxu0
      %v1116 = vadd.f32 %v935, %v1079
      %v1117 = vadd.f32 %v936, %v1082
      %v1118 = vadd.f32 %v937, %v1087
      %v1119 = vadd.f32 %v938, %v1090
      %v1120 = vadd.f32 %v939, %v1095
      %v1121 = vadd.f32 %v940, %v1098
      %v1122 = vadd.f32 %v941, %v1103
      %v1123 = vadd.f32 %v942, %v1106
      %v1124 = vadd.f32 %v943, %v1111
      %1125 = vst [vmem:[#allocation2] sm:$0xff] %v1116
      %1126 = vst [vmem:[#allocation2 + $0x8] sm:$0xff] %v1117
      %1127 = vst [vmem:[#allocation2 + $0x10] sm:$0xff] %v1118
      %1128 = vst [vmem:[#allocation2 + $0x18] sm:$0xff] %v1119
      %1129 = vst [vmem:[#allocation2 + $0x20] sm:$0xff] %v1120
      %1130 = vst [vmem:[#allocation2 + $0x28] sm:$0xff] %v1121
      %1131 = vst [vmem:[#allocation2 + $0x30] sm:$0xff] %v1122
      %1132 = vst [vmem:[#allocation2 + $0x38] sm:$0xff] %v1123
      %1133 = vst [vmem:[#allocation2 + $0x40] sm:$0xff] %v1124
      %v1134 = vld [vmem:[#allocation2] sm:$0xff]
      %v1135 = vld [vmem:[#allocation2 + $0x8] sm:$0xff]
      %v1136 = vld [vmem:[#allocation2 + $0x10] sm:$0xff]
      %v1137 = vld [vmem:[#allocation2 + $0x18] sm:$0xff]
      %v1138 = vld [vmem:[#allocation2 + $0x20] sm:$0xff]
      %v1139 = vld [vmem:[#allocation2 + $0x28] sm:$0xff]
      %v1140 = vld [vmem:[#allocation2 + $0x30] sm:$0xff]
      %v1141 = vld [vmem:[#allocation2 + $0x38] sm:$0xff]
      %v1142 = vld [vmem:[#allocation2 + $0x40] sm:$0xff]
      %v1143 = vld [vmem:[%s206 + $0x50] sm:$0xe]
      %v1144 = vld [vmem:[%s206 + $0x54] sm:$0xf]
      %v1145 = vld [vmem:[%s206 + $0x58] sm:$0xf]
      %v1146 = vld [vmem:[%s206 + $0x5c] sm:$0xf]
      %v1147 = vld [vmem:[%s206 + $0x60] sm:$0xf]
      %v1148 = vld [vmem:[%s206 + $0x64] sm:$0xf]
      %v1149 = vld [vmem:[%s206 + $0x68] sm:$0xf]
      %v1150 = vld [vmem:[%s206 + $0x6c] sm:$0xf]
      %v1151 = vld [vmem:[%s206 + $0x70] sm:$0xf]
      %v1152 = vld [vmem:[%s206 + $0x74] sm:$0x3]
      %s1153 = scalar_lea.vmem %s210, 20
      %v1154 = vld [vmem:[%s1153] sm:$0xf]
      %v1165 = vunpack.c.l.b16 %v1143
      %v1166 = vunpack.c.l.b16 %v1144
      %v1167 = vunpack.c.l.b16 %v1145
      %v1168 = vunpack.c.l.b16 %v1146
      %v1169 = vunpack.c.l.b16 %v1147
      %v1170 = vunpack.c.l.b16 %v1148
      %v1171 = vunpack.c.l.b16 %v1149
      %v1172 = vunpack.c.l.b16 %v1150
      %v1173 = vunpack.c.l.b16 %v1151
      %v1174 = vunpack.c.l.b16 %v1152
      %v1175 = vpack.c.b16 %v1166, %v1165
      %v1176 = vpack.c.b16 %v1168, %v1167
      %v1177 = vpack.c.b16 %v1170, %v1169
      %v1178 = vpack.c.b16 %v1172, %v1171
      %v1179 = vpack.c.b16 %v1174, %v1173
      %v1181 = vshrl.u32 %v1175, 16
      %v1183 = vrot.slane %v1181, 1
      %v1184 = vshll.u32 %v1175, 16
      %v1186 = vrot.slane %v1184, 2
      %v1187 = vor.u32 %v1183, %v1186
      %v1189 = vshrl.u32 %v1176, 16
      %v1191 = vrot.slane %v1189, 1
      %v1192 = vshll.u32 %v1176, 16
      %v1194 = vrot.slane %v1192, 2
      %v1195 = vor.u32 %v1191, %v1194
      %v1196 = vsel %vm981, %v1187, %v1195
      %v1198 = vshrl.u32 %v1177, 16
      %v1200 = vrot.slane %v1198, 1
      %v1201 = vshll.u32 %v1177, 16
      %v1203 = vrot.slane %v1201, 2
      %v1204 = vor.u32 %v1200, %v1203
      %v1205 = vsel %vm981, %v1195, %v1204
      %v1207 = vshrl.u32 %v1178, 16
      %v1209 = vrot.slane %v1207, 1
      %v1210 = vshll.u32 %v1178, 16
      %v1212 = vrot.slane %v1210, 2
      %v1213 = vor.u32 %v1209, %v1212
      %v1214 = vsel %vm981, %v1204, %v1213
      %v1216 = vshrl.u32 %v1179, 16
      %v1218 = vrot.slane %v1216, 1
      %v1219 = vshll.u32 %v1179, 16
      %v1221 = vrot.slane %v1219, 2
      %v1222 = vor.u32 %v1218, %v1221
      %v1223 = vsel %vm981, %v1213, %v1222
      %v1225 = vsel %vm274, %v1196, 0
      %v1228 = vsel %vm274, %v1205, 0
      %v1231 = vsel %vm274, %v1214, 0
      %v1234 = vsel %vm274, %v1223, 0
      %v1237 = vsel %vm274, %v1222, 0
      %v1240 = vsel %vm290, %v1154, 0
      %1242 = vmatprep.subr.bf16.mxu0 0
      %1243 = vmatpush1.bf16.msra.mxu0 %v1240
      %1244 = vmatprep.subr.bf16.mxu0 0
      %1245 = vmatpush1.bf16.msra.mxu0 0
      %1246 = vmatprep.subr.bf16.mxu0 0
      %1247 = vmatpush1.bf16.msra.mxu0 0
      %1248 = vmatprep.subr.bf16.mxu0 0
      %1249 = vmatpush1.bf16.msra.mxu0 0
      %1250 = vmatprep.subr.bf16.mxu0 0
      %1251 = vmatpush1.bf16.msra.mxu0 0
      %1252 = vmatprep.subr.bf16.mxu0 0
      %1253 = vmatpush1.bf16.msra.mxu0 0
      %1254 = vmatprep.subr.bf16.mxu0 0
      %1255 = vmatpush1.bf16.msra.mxu0 0
      %1256 = vmatprep.subr.bf16.mxu0 0
      %1257 = vmatpush1.bf16.msra.mxu0 0
      %1258 = vmatprep.subr.bf16.mxu0 0
      %1259 = vmatpush1.bf16.msra.mxu0 0
      %1260 = vmatprep.subr.bf16.mxu0 0
      %1261 = vmatpush1.bf16.msra.mxu0 0
      %1262 = vmatprep.subr.bf16.mxu0 0
      %1263 = vmatpush1.bf16.msra.mxu0 0
      %1264 = vmatprep.subr.bf16.mxu0 0
      %1265 = vmatpush1.bf16.msra.mxu0 0
      %1266 = vmatprep.subr.bf16.mxu0 0
      %1267 = vmatpush1.bf16.msra.mxu0 0
      %1268 = vmatprep.subr.bf16.mxu0 0
      %1269 = vmatpush1.bf16.msra.mxu0 0
      %1270 = vmatprep.subr.bf16.mxu0 0
      %1271 = vmatpush1.bf16.msra.mxu0 0
      %1272 = vmatprep.subr.bf16.mxu0 0
      %1273 = vmatpush1.bf16.msra.mxu0 0
      %1274 = vmatprep.mubr.bf16.mxu0 0
      %1275 = vmatmul.mubr.bf16.gmra.mrb[0].mxu0 %v1225
      %v1276 = vpop.f32.mrb[0].mxu0
      %v1277 = vadd.f32 0.0, %v1276
      %v1278 = vpop.f32.mrb[0].mxu0
      %v1279 = vpop.f32.mrb[0].mxu0
      %v1280 = vadd.f32 0.0, %v1279
      %v1281 = vpop.f32.mrb[0].mxu0
      %1282 = vmatprep.mubr.bf16.mxu0 0
      %1283 = vmatmul.mubr.bf16.gmra.mrb[0].mxu0 %v1228
      %v1284 = vpop.f32.mrb[0].mxu0
      %v1285 = vadd.f32 0.0, %v1284
      %v1286 = vpop.f32.mrb[0].mxu0
      %v1287 = vpop.f32.mrb[0].mxu0
      %v1288 = vadd.f32 0.0, %v1287
      %v1289 = vpop.f32.mrb[0].mxu0
      %1290 = vmatprep.mubr.bf16.mxu0 0
      %1291 = vmatmul.mubr.bf16.gmra.mrb[0].mxu0 %v1231
      %v1292 = vpop.f32.mrb[0].mxu0
      %v1293 = vadd.f32 0.0, %v1292
      %v1294 = vpop.f32.mrb[0].mxu0
      %v1295 = vpop.f32.mrb[0].mxu0
      %v1296 = vadd.f32 0.0, %v1295
      %v1297 = vpop.f32.mrb[0].mxu0
      %1298 = vmatprep.mubr.bf16.mxu0 0
      %1299 = vmatmul.mubr.bf16.gmra.mrb[0].mxu0 %v1234
      %v1300 = vpop.f32.mrb[0].mxu0
      %v1301 = vadd.f32 0.0, %v1300
      %v1302 = vpop.f32.mrb[0].mxu0
      %v1303 = vpop.f32.mrb[0].mxu0
      %v1304 = vadd.f32 0.0, %v1303
      %v1305 = vpop.f32.mrb[0].mxu0
      %1306 = vmatprep.mubr.bf16.mxu0 0
      %1307 = vmatmul.mubr.bf16.gmra.mrb[0].mxu0 %v1237
      %v1308 = vpop.f32.mrb[0].mxu0
      %v1309 = vadd.f32 0.0, %v1308
      %v1310 = vpop.f32.mrb[0].mxu0
      %v1311 = vpop.f32.mrb[0].mxu0
      %v1312 = vpop.f32.mrb[0].mxu0
      %1313 = vdwg.mxu0
      %v1314 = vadd.f32 %v1134, %v1277
      %v1315 = vadd.f32 %v1135, %v1280
      %v1316 = vadd.f32 %v1136, %v1285
      %v1317 = vadd.f32 %v1137, %v1288
      %v1318 = vadd.f32 %v1138, %v1293
      %v1319 = vadd.f32 %v1139, %v1296
      %v1320 = vadd.f32 %v1140, %v1301
      %v1321 = vadd.f32 %v1141, %v1304
      %v1322 = vadd.f32 %v1142, %v1309
      %1323 = vst [vmem:[#allocation2] sm:$0xff] %v1314
      %1324 = vst [vmem:[#allocation2 + $0x8] sm:$0xff] %v1315
      %1325 = vst [vmem:[#allocation2 + $0x10] sm:$0xff] %v1316
      %1326 = vst [vmem:[#allocation2 + $0x18] sm:$0xff] %v1317
      %1327 = vst [vmem:[#allocation2 + $0x20] sm:$0xff] %v1318
      %1328 = vst [vmem:[#allocation2 + $0x28] sm:$0xff] %v1319
      %1329 = vst [vmem:[#allocation2 + $0x30] sm:$0xff] %v1320
      %1330 = vst [vmem:[#allocation2 + $0x38] sm:$0xff] %v1321
      %1331 = vst [vmem:[#allocation2 + $0x40] sm:$0xff] %v1322
      %v1332 = vld [vmem:[#allocation2] sm:$0xff]
      %v1333 = vld [vmem:[#allocation2 + $0x8] sm:$0xff]
      %v1334 = vld [vmem:[#allocation2 + $0x10] sm:$0xff]
      %v1335 = vld [vmem:[#allocation2 + $0x18] sm:$0xff]
      %v1336 = vld [vmem:[#allocation2 + $0x20] sm:$0xff]
      %v1337 = vld [vmem:[#allocation2 + $0x28] sm:$0xff]
      %v1338 = vld [vmem:[#allocation2 + $0x30] sm:$0xff]
      %v1339 = vld [vmem:[#allocation2 + $0x38] sm:$0xff]
      %v1340 = vld [vmem:[#allocation2 + $0x40] sm:$0xff]
      %v1341 = vld [vmem:[%s206 + $0x4] sm:$0xf]
      %v1342 = vld [vmem:[%s206 + $0x8] sm:$0xf]
      %v1343 = vld [vmem:[%s206 + $0xc] sm:$0xf]
      %v1344 = vld [vmem:[%s206 + $0x10] sm:$0xf]
      %v1345 = vld [vmem:[%s206 + $0x14] sm:$0xf]
      %v1346 = vld [vmem:[%s206 + $0x18] sm:$0xf]
      %v1347 = vld [vmem:[%s206 + $0x1c] sm:$0xf]
      %v1348 = vld [vmem:[%s206 + $0x20] sm:$0xf]
      %v1349 = vld [vmem:[%s206 + $0x24] sm:$0xf]
      %v1350 = vld [vmem:[%s206 + $0x28] sm:$0x1]
      %s1351 = scalar_lea.vmem %s210, 24
      %v1352 = vld [vmem:[%s1351] sm:$0xf]
      %v1363 = vunpack.c.l.b16 %v1341
      %v1364 = vunpack.c.l.b16 %v1342
      %v1365 = vunpack.c.l.b16 %v1343
      %v1366 = vunpack.c.l.b16 %v1344
      %v1367 = vunpack.c.l.b16 %v1345
      %v1368 = vunpack.c.l.b16 %v1346
      %v1369 = vunpack.c.l.b16 %v1347
      %v1370 = vunpack.c.l.b16 %v1348
      %v1371 = vunpack.c.l.b16 %v1349
      %v1372 = vunpack.c.l.b16 %v1350
      %v1373 = vpack.c.b16 %v1364, %v1363
      %v1374 = vpack.c.b16 %v1366, %v1365
      %v1375 = vpack.c.b16 %v1368, %v1367
      %v1376 = vpack.c.b16 %v1370, %v1369
      %v1377 = vpack.c.b16 %v1372, %v1371
      %v1379 = vshrl.u32 %v1373, 16
      %v1381 = vshll.u32 %v1373, 16
      %v1383 = vrot.slane %v1381, 1
      %v1384 = vor.u32 %v1379, %v1383
      %v1386 = vshll.u32 %v1374, 16
      %v1388 = vrot.slane %v1386, 1
      %v1389 = vsel %vm430, %v1384, %v1388
      %v1390 = vshrl.u32 %v1374, 16
      %v1392 = vor.u32 %v1390, %v1388
      %v1394 = vshll.u32 %v1375, 16
      %v1396 = vrot.slane %v1394, 1
      %v1397 = vsel %vm430, %v1392, %v1396
      %v1398 = vshrl.u32 %v1375, 16
      %v1400 = vor.u32 %v1398, %v1396
      %v1402 = vshll.u32 %v1376, 16
      %v1404 = vrot.slane %v1402, 1
      %v1405 = vsel %vm430, %v1400, %v1404
      %v1406 = vshrl.u32 %v1376, 16
      %v1408 = vor.u32 %v1406, %v1404
      %v1410 = vshll.u32 %v1377, 16
      %v1412 = vrot.slane %v1410, 1
      %v1413 = vsel %vm430, %v1408, %v1412
      %v1414 = vshrl.u32 %v1377, 16
      %v1416 = vor.u32 %v1414, %v1412
      %v1418 = vsel %vm274, %v1389, 0
      %v1421 = vsel %vm274, %v1397, 0
      %v1424 = vsel %vm274, %v1405, 0
      %v1427 = vsel %vm274, %v1413, 0
      %v1430 = vsel %vm274, %v1416, 0
      %v1433 = vsel %vm290, %v1352, 0
      %1435 = vmatprep.subr.bf16.mxu0 0
      %1436 = vmatpush1.bf16.msra.mxu0 %v1433
      %1437 = vmatprep.subr.bf16.mxu0 0
      %1438 = vmatpush1.bf16.msra.mxu0 0
      %1439 = vmatprep.subr.bf16.mxu0 0
      %1440 = vmatpush1.bf16.msra.mxu0 0
      %1441 = vmatprep.subr.bf16.mxu0 0
      %1442 = vmatpush1.bf16.msra.mxu0 0
      %1443 = vmatprep.subr.bf16.mxu0 0
      %1444 = vmatpush1.bf16.msra.mxu0 0
      %1445 = vmatprep.subr.bf16.mxu0 0
      %1446 = vmatpush1.bf16.msra.mxu0 0
      %1447 = vmatprep.subr.bf16.mxu0 0
      %1448 = vmatpush1.bf16.msra.mxu0 0
      %1449 = vmatprep.subr.bf16.mxu0 0
      %1450 = vmatpush1.bf16.msra.mxu0 0
      %1451 = vmatprep.subr.bf16.mxu0 0
      %1452 = vmatpush1.bf16.msra.mxu0 0
      %1453 = vmatprep.subr.bf16.mxu0 0
      %1454 = vmatpush1.bf16.msra.mxu0 0
      %1455 = vmatprep.subr.bf16.mxu0 0
      %1456 = vmatpush1.bf16.msra.mxu0 0
      %1457 = vmatprep.subr.bf16.mxu0 0
      %1458 = vmatpush1.bf16.msra.mxu0 0
      %1459 = vmatprep.subr.bf16.mxu0 0
      %1460 = vmatpush1.bf16.msra.mxu0 0
      %1461 = vmatprep.subr.bf16.mxu0 0
      %1462 = vmatpush1.bf16.msra.mxu0 0
      %1463 = vmatprep.subr.bf16.mxu0 0
      %1464 = vmatpush1.bf16.msra.mxu0 0
      %1465 = vmatprep.subr.bf16.mxu0 0
      %1466 = vmatpush1.bf16.msra.mxu0 0
      %1467 = vmatprep.mubr.bf16.mxu0 0
      %1468 = vmatmul.mubr.bf16.gmra.mrb[0].mxu0 %v1418
      %v1469 = vpop.f32.mrb[0].mxu0
      %v1470 = vadd.f32 0.0, %v1469
      %v1471 = vpop.f32.mrb[0].mxu0
      %v1472 = vpop.f32.mrb[0].mxu0
      %v1473 = vadd.f32 0.0, %v1472
      %v1474 = vpop.f32.mrb[0].mxu0
      %1475 = vmatprep.mubr.bf16.mxu0 0
      %1476 = vmatmul.mubr.bf16.gmra.mrb[0].mxu0 %v1421
      %v1477 = vpop.f32.mrb[0].mxu0
      %v1478 = vadd.f32 0.0, %v1477
      %v1479 = vpop.f32.mrb[0].mxu0
      %v1480 = vpop.f32.mrb[0].mxu0
      %v1481 = vadd.f32 0.0, %v1480
      %v1482 = vpop.f32.mrb[0].mxu0
      %1483 = vmatprep.mubr.bf16.mxu0 0
      %1484 = vmatmul.mubr.bf16.gmra.mrb[0].mxu0 %v1424
      %v1485 = vpop.f32.mrb[0].mxu0
      %v1486 = vadd.f32 0.0, %v1485
      %v1487 = vpop.f32.mrb[0].mxu0
      %v1488 = vpop.f32.mrb[0].mxu0
      %v1489 = vadd.f32 0.0, %v1488
      %v1490 = vpop.f32.mrb[0].mxu0
      %1491 = vmatprep.mubr.bf16.mxu0 0
      %1492 = vmatmul.mubr.bf16.gmra.mrb[0].mxu0 %v1427
      %v1493 = vpop.f32.mrb[0].mxu0
      %v1494 = vadd.f32 0.0, %v1493
      %v1495 = vpop.f32.mrb[0].mxu0
      %v1496 = vpop.f32.mrb[0].mxu0
      %v1497 = vadd.f32 0.0, %v1496
      %v1498 = vpop.f32.mrb[0].mxu0
      %1499 = vmatprep.mubr.bf16.mxu0 0
      %1500 = vmatmul.mubr.bf16.gmra.mrb[0].mxu0 %v1430
      %v1501 = vpop.f32.mrb[0].mxu0
      %v1502 = vadd.f32 0.0, %v1501
      %v1503 = vpop.f32.mrb[0].mxu0
      %v1504 = vpop.f32.mrb[0].mxu0
      %v1505 = vpop.f32.mrb[0].mxu0
      %1506 = vdwg.mxu0
      %v1507 = vadd.f32 %v1332, %v1470
      %v1508 = vadd.f32 %v1333, %v1473
      %v1509 = vadd.f32 %v1334, %v1478
      %v1510 = vadd.f32 %v1335, %v1481
      %v1511 = vadd.f32 %v1336, %v1486
      %v1512 = vadd.f32 %v1337, %v1489
      %v1513 = vadd.f32 %v1338, %v1494
      %v1514 = vadd.f32 %v1339, %v1497
      %v1515 = vadd.f32 %v1340, %v1502
      %1516 = vst [vmem:[#allocation2] sm:$0xff] %v1507
      %1517 = vst [vmem:[#allocation2 + $0x8] sm:$0xff] %v1508
      %1518 = vst [vmem:[#allocation2 + $0x10] sm:$0xff] %v1509
      %1519 = vst [vmem:[#allocation2 + $0x18] sm:$0xff] %v1510
      %1520 = vst [vmem:[#allocation2 + $0x20] sm:$0xff] %v1511
      %1521 = vst [vmem:[#allocation2 + $0x28] sm:$0xff] %v1512
      %1522 = vst [vmem:[#allocation2 + $0x30] sm:$0xff] %v1513
      %1523 = vst [vmem:[#allocation2 + $0x38] sm:$0xff] %v1514
      %1524 = vst [vmem:[#allocation2 + $0x40] sm:$0xff] %v1515
      %v1525 = vld [vmem:[#allocation2] sm:$0xff]
      %v1526 = vld [vmem:[#allocation2 + $0x8] sm:$0xff]
      %v1527 = vld [vmem:[#allocation2 + $0x10] sm:$0xff]
      %v1528 = vld [vmem:[#allocation2 + $0x18] sm:$0xff]
      %v1529 = vld [vmem:[#allocation2 + $0x20] sm:$0xff]
      %v1530 = vld [vmem:[#allocation2 + $0x28] sm:$0xff]
      %v1531 = vld [vmem:[#allocation2 + $0x30] sm:$0xff]
      %v1532 = vld [vmem:[#allocation2 + $0x38] sm:$0xff]
      %v1533 = vld [vmem:[#allocation2 + $0x40] sm:$0xff]
      %v1534 = vld [vmem:[%s206 + $0x2c] sm:$0xe]
      %v1535 = vld [vmem:[%s206 + $0x30] sm:$0xf]
      %v1536 = vld [vmem:[%s206 + $0x34] sm:$0xf]
      %v1537 = vld [vmem:[%s206 + $0x38] sm:$0xf]
      %v1538 = vld [vmem:[%s206 + $0x3c] sm:$0xf]
      %v1539 = vld [vmem:[%s206 + $0x40] sm:$0xf]
      %v1540 = vld [vmem:[%s206 + $0x44] sm:$0xf]
      %v1541 = vld [vmem:[%s206 + $0x48] sm:$0xf]
      %v1542 = vld [vmem:[%s206 + $0x4c] sm:$0xf]
      %v1543 = vld [vmem:[%s206 + $0x50] sm:$0x1]
      %s1544 = scalar_lea.vmem %s210, 28
      %v1545 = vld [vmem:[%s1544] sm:$0xf]
      %v1556 = vunpack.c.l.b16 %v1534
      %v1557 = vunpack.c.l.b16 %v1535
      %v1558 = vunpack.c.l.b16 %v1536
      %v1559 = vunpack.c.l.b16 %v1537
      %v1560 = vunpack.c.l.b16 %v1538
      %v1561 = vunpack.c.l.b16 %v1539
      %v1562 = vunpack.c.l.b16 %v1540
      %v1563 = vunpack.c.l.b16 %v1541
      %v1564 = vunpack.c.l.b16 %v1542
      %v1565 = vunpack.c.l.b16 %v1543
      %v1566 = vpack.c.b16 %v1557, %v1556
      %v1567 = vpack.c.b16 %v1559, %v1558
      %v1568 = vpack.c.b16 %v1561, %v1560
      %v1569 = vpack.c.b16 %v1563, %v1562
      %v1570 = vpack.c.b16 %v1565, %v1564
      %v1571 = vrot.slane %v1566, 1
      %v1572 = vrot.slane %v1567, 1
      %v1573 = vsel %vm817, %v1571, %v1572
      %v1574 = vrot.slane %v1568, 1
      %v1575 = vsel %vm817, %v1572, %v1574
      %v1576 = vrot.slane %v1569, 1
      %v1577 = vsel %vm817, %v1574, %v1576
      %v1578 = vrot.slane %v1570, 1
      %v1579 = vsel %vm817, %v1576, %v1578
      %v1581 = vsel %vm274, %v1573, 0
      %v1584 = vsel %vm274, %v1575, 0
      %v1587 = vsel %vm274, %v1577, 0
      %v1590 = vsel %vm274, %v1579, 0
      %v1593 = vsel %vm274, %v1578, 0
      %v1596 = vsel %vm290, %v1545, 0
      %1598 = vmatprep.subr.bf16.mxu0 0
      %1599 = vmatpush1.bf16.msra.mxu0 %v1596
      %1600 = vmatprep.subr.bf16.mxu0 0
      %1601 = vmatpush1.bf16.msra.mxu0 0
      %1602 = vmatprep.subr.bf16.mxu0 0
      %1603 = vmatpush1.bf16.msra.mxu0 0
      %1604 = vmatprep.subr.bf16.mxu0 0
      %1605 = vmatpush1.bf16.msra.mxu0 0
      %1606 = vmatprep.subr.bf16.mxu0 0
      %1607 = vmatpush1.bf16.msra.mxu0 0
      %1608 = vmatprep.subr.bf16.mxu0 0
      %1609 = vmatpush1.bf16.msra.mxu0 0
      %1610 = vmatprep.subr.bf16.mxu0 0
      %1611 = vmatpush1.bf16.msra.mxu0 0
      %1612 = vmatprep.subr.bf16.mxu0 0
      %1613 = vmatpush1.bf16.msra.mxu0 0
      %1614 = vmatprep.subr.bf16.mxu0 0
      %1615 = vmatpush1.bf16.msra.mxu0 0
      %1616 = vmatprep.subr.bf16.mxu0 0
      %1617 = vmatpush1.bf16.msra.mxu0 0
      %1618 = vmatprep.subr.bf16.mxu0 0
      %1619 = vmatpush1.bf16.msra.mxu0 0
      %1620 = vmatprep.subr.bf16.mxu0 0
      %1621 = vmatpush1.bf16.msra.mxu0 0
      %1622 = vmatprep.subr.bf16.mxu0 0
      %1623 = vmatpush1.bf16.msra.mxu0 0
      %1624 = vmatprep.subr.bf16.mxu0 0
      %1625 = vmatpush1.bf16.msra.mxu0 0
      %1626 = vmatprep.subr.bf16.mxu0 0
      %1627 = vmatpush1.bf16.msra.mxu0 0
      %1628 = vmatprep.subr.bf16.mxu0 0
      %1629 = vmatpush1.bf16.msra.mxu0 0
      %1630 = vmatprep.mubr.bf16.mxu0 0
      %1631 = vmatmul.mubr.bf16.gmra.mrb[0].mxu0 %v1581
      %v1632 = vpop.f32.mrb[0].mxu0
      %v1633 = vadd.f32 0.0, %v1632
      %v1634 = vpop.f32.mrb[0].mxu0
      %v1635 = vpop.f32.mrb[0].mxu0
      %v1636 = vadd.f32 0.0, %v1635
      %v1637 = vpop.f32.mrb[0].mxu0
      %1638 = vmatprep.mubr.bf16.mxu0 0
      %1639 = vmatmul.mubr.bf16.gmra.mrb[0].mxu0 %v1584
      %v1640 = vpop.f32.mrb[0].mxu0
      %v1641 = vadd.f32 0.0, %v1640
      %v1642 = vpop.f32.mrb[0].mxu0
      %v1643 = vpop.f32.mrb[0].mxu0
      %v1644 = vadd.f32 0.0, %v1643
      %v1645 = vpop.f32.mrb[0].mxu0
      %1646 = vmatprep.mubr.bf16.mxu0 0
      %1647 = vmatmul.mubr.bf16.gmra.mrb[0].mxu0 %v1587
      %v1648 = vpop.f32.mrb[0].mxu0
      %v1649 = vadd.f32 0.0, %v1648
      %v1650 = vpop.f32.mrb[0].mxu0
      %v1651 = vpop.f32.mrb[0].mxu0
      %v1652 = vadd.f32 0.0, %v1651
      %v1653 = vpop.f32.mrb[0].mxu0
      %1654 = vmatprep.mubr.bf16.mxu0 0
      %1655 = vmatmul.mubr.bf16.gmra.mrb[0].mxu0 %v1590
      %v1656 = vpop.f32.mrb[0].mxu0
      %v1657 = vadd.f32 0.0, %v1656
      %v1658 = vpop.f32.mrb[0].mxu0
      %v1659 = vpop.f32.mrb[0].mxu0
      %v1660 = vadd.f32 0.0, %v1659
      %v1661 = vpop.f32.mrb[0].mxu0
      %1662 = vmatprep.mubr.bf16.mxu0 0
      %1663 = vmatmul.mubr.bf16.gmra.mrb[0].mxu0 %v1593
      %v1664 = vpop.f32.mrb[0].mxu0
      %v1665 = vadd.f32 0.0, %v1664
      %v1666 = vpop.f32.mrb[0].mxu0
      %v1667 = vpop.f32.mrb[0].mxu0
      %v1668 = vpop.f32.mrb[0].mxu0
      %1669 = vdwg.mxu0
      %v1670 = vadd.f32 %v1525, %v1633
      %v1671 = vadd.f32 %v1526, %v1636
      %v1672 = vadd.f32 %v1527, %v1641
      %v1673 = vadd.f32 %v1528, %v1644
      %v1674 = vadd.f32 %v1529, %v1649
      %v1675 = vadd.f32 %v1530, %v1652
      %v1676 = vadd.f32 %v1531, %v1657
      %v1677 = vadd.f32 %v1532, %v1660
      %v1678 = vadd.f32 %v1533, %v1665
      %1679 = vst [vmem:[#allocation2] sm:$0xff] %v1670
      %1680 = vst [vmem:[#allocation2 + $0x8] sm:$0xff] %v1671
      %1681 = vst [vmem:[#allocation2 + $0x10] sm:$0xff] %v1672
      %1682 = vst [vmem:[#allocation2 + $0x18] sm:$0xff] %v1673
      %1683 = vst [vmem:[#allocation2 + $0x20] sm:$0xff] %v1674
      %1684 = vst [vmem:[#allocation2 + $0x28] sm:$0xff] %v1675
      %1685 = vst [vmem:[#allocation2 + $0x30] sm:$0xff] %v1676
      %1686 = vst [vmem:[#allocation2 + $0x38] sm:$0xff] %v1677
      %1687 = vst [vmem:[#allocation2 + $0x40] sm:$0xff] %v1678
      %v1688 = vld [vmem:[#allocation2] sm:$0xff]
      %v1689 = vld [vmem:[#allocation2 + $0x8] sm:$0xff]
      %v1690 = vld [vmem:[#allocation2 + $0x10] sm:$0xff]
      %v1691 = vld [vmem:[#allocation2 + $0x18] sm:$0xff]
      %v1692 = vld [vmem:[#allocation2 + $0x20] sm:$0xff]
      %v1693 = vld [vmem:[#allocation2 + $0x28] sm:$0xff]
      %v1694 = vld [vmem:[#allocation2 + $0x30] sm:$0xff]
      %v1695 = vld [vmem:[#allocation2 + $0x38] sm:$0xff]
      %v1696 = vld [vmem:[#allocation2 + $0x40] sm:$0xff]
      %v1697 = vld [vmem:[%s206 + $0x4] sm:$0xe]
      %v1698 = vld [vmem:[%s206 + $0x8] sm:$0xf]
      %v1699 = vld [vmem:[%s206 + $0xc] sm:$0xf]
      %v1700 = vld [vmem:[%s206 + $0x10] sm:$0xf]
      %v1701 = vld [vmem:[%s206 + $0x14] sm:$0xf]
      %v1702 = vld [vmem:[%s206 + $0x18] sm:$0xf]
      %v1703 = vld [vmem:[%s206 + $0x1c] sm:$0xf]
      %v1704 = vld [vmem:[%s206 + $0x20] sm:$0xf]
      %v1705 = vld [vmem:[%s206 + $0x24] sm:$0xf]
      %v1706 = vld [vmem:[%s206 + $0x28] sm:$0x1]
      %s1707 = scalar_lea.vmem %s210, 32
      %v1708 = vld [vmem:[%s1707] sm:$0xf]
      %v1719 = vunpack.c.l.b16 %v1697
      %v1720 = vunpack.c.l.b16 %v1698
      %v1721 = vunpack.c.l.b16 %v1699
      %v1722 = vunpack.c.l.b16 %v1700
      %v1723 = vunpack.c.l.b16 %v1701
      %v1724 = vunpack.c.l.b16 %v1702
      %v1725 = vunpack.c.l.b16 %v1703
      %v1726 = vunpack.c.l.b16 %v1704
      %v1727 = vunpack.c.l.b16 %v1705
      %v1728 = vunpack.c.l.b16 %v1706
      %v1729 = vpack.c.b16 %v1720, %v1719
      %v1730 = vpack.c.b16 %v1722, %v1721
      %v1731 = vpack.c.b16 %v1724, %v1723
      %v1732 = vpack.c.b16 %v1726, %v1725
      %v1733 = vpack.c.b16 %v1728, %v1727
      %v1734 = vrot.slane %v1729, 1
      %v1735 = vrot.slane %v1730, 1
      %v1736 = vsel %vm817, %v1734, %v1735
      %v1737 = vrot.slane %v1731, 1
      %v1738 = vsel %vm817, %v1735, %v1737
      %v1739 = vrot.slane %v1732, 1
      %v1740 = vsel %vm817, %v1737, %v1739
      %v1741 = vrot.slane %v1733, 1
      %v1742 = vsel %vm817, %v1739, %v1741
      %v1744 = vsel %vm274, %v1736, 0
      %v1747 = vsel %vm274, %v1738, 0
      %v1750 = vsel %vm274, %v1740, 0
      %v1753 = vsel %vm274, %v1742, 0
      %v1756 = vsel %vm274, %v1741, 0
      %v1759 = vsel %vm290, %v1708, 0
      %1761 = vmatprep.subr.bf16.mxu0 0
      %1762 = vmatpush1.bf16.msra.mxu0 %v1759
      %1763 = vmatprep.subr.bf16.mxu0 0
      %1764 = vmatpush1.bf16.msra.mxu0 0
      %1765 = vmatprep.subr.bf16.mxu0 0
      %1766 = vmatpush1.bf16.msra.mxu0 0
      %1767 = vmatprep.subr.bf16.mxu0 0
      %1768 = vmatpush1.bf16.msra.mxu0 0
      %1769 = vmatprep.subr.bf16.mxu0 0
      %1770 = vmatpush1.bf16.msra.mxu0 0
      %1771 = vmatprep.subr.bf16.mxu0 0
      %1772 = vmatpush1.bf16.msra.mxu0 0
      %1773 = vmatprep.subr.bf16.mxu0 0
      %1774 = vmatpush1.bf16.msra.mxu0 0
      %1775 = vmatprep.subr.bf16.mxu0 0
      %1776 = vmatpush1.bf16.msra.mxu0 0
      %1777 = vmatprep.subr.bf16.mxu0 0
      %1778 = vmatpush1.bf16.msra.mxu0 0
      %1779 = vmatprep.subr.bf16.mxu0 0
      %1780 = vmatpush1.bf16.msra.mxu0 0
      %1781 = vmatprep.subr.bf16.mxu0 0
      %1782 = vmatpush1.bf16.msra.mxu0 0
      %1783 = vmatprep.subr.bf16.mxu0 0
      %1784 = vmatpush1.bf16.msra.mxu0 0
      %1785 = vmatprep.subr.bf16.mxu0 0
      %1786 = vmatpush1.bf16.msra.mxu0 0
      %1787 = vmatprep.subr.bf16.mxu0 0
      %1788 = vmatpush1.bf16.msra.mxu0 0
      %1789 = vmatprep.subr.bf16.mxu0 0
      %1790 = vmatpush1.bf16.msra.mxu0 0
      %1791 = vmatprep.subr.bf16.mxu0 0
      %1792 = vmatpush1.bf16.msra.mxu0 0
      %1793 = vmatprep.mubr.bf16.mxu0 0
      %1794 = vmatmul.mubr.bf16.gmra.mrb[0].mxu0 %v1744
      %v1795 = vpop.f32.mrb[0].mxu0
      %v1796 = vadd.f32 0.0, %v1795
      %v1797 = vpop.f32.mrb[0].mxu0
      %v1798 = vpop.f32.mrb[0].mxu0
      %v1799 = vadd.f32 0.0, %v1798
      %v1800 = vpop.f32.mrb[0].mxu0
      %1801 = vmatprep.mubr.bf16.mxu0 0
      %1802 = vmatmul.mubr.bf16.gmra.mrb[0].mxu0 %v1747
      %v1803 = vpop.f32.mrb[0].mxu0
      %v1804 = vadd.f32 0.0, %v1803
      %v1805 = vpop.f32.mrb[0].mxu0
      %v1806 = vpop.f32.mrb[0].mxu0
      %v1807 = vadd.f32 0.0, %v1806
      %v1808 = vpop.f32.mrb[0].mxu0
      %1809 = vmatprep.mubr.bf16.mxu0 0
      %1810 = vmatmul.mubr.bf16.gmra.mrb[0].mxu0 %v1750
      %v1811 = vpop.f32.mrb[0].mxu0
      %v1812 = vadd.f32 0.0, %v1811
      %v1813 = vpop.f32.mrb[0].mxu0
      %v1814 = vpop.f32.mrb[0].mxu0
      %v1815 = vadd.f32 0.0, %v1814
      %v1816 = vpop.f32.mrb[0].mxu0
      %1817 = vmatprep.mubr.bf16.mxu0 0
      %1818 = vmatmul.mubr.bf16.gmra.mrb[0].mxu0 %v1753
      %v1819 = vpop.f32.mrb[0].mxu0
      %v1820 = vadd.f32 0.0, %v1819
      %v1821 = vpop.f32.mrb[0].mxu0
      %v1822 = vpop.f32.mrb[0].mxu0
      %v1823 = vadd.f32 0.0, %v1822
      %v1824 = vpop.f32.mrb[0].mxu0
      %1825 = vmatprep.mubr.bf16.mxu0 0
      %1826 = vmatmul.mubr.bf16.gmra.mrb[0].mxu0 %v1756
      %v1827 = vpop.f32.mrb[0].mxu0
      %v1828 = vadd.f32 0.0, %v1827
      %v1829 = vpop.f32.mrb[0].mxu0
      %v1830 = vpop.f32.mrb[0].mxu0
      %v1831 = vpop.f32.mrb[0].mxu0
      %1832 = vdwg.mxu0
      %v1833 = vadd.f32 %v1688, %v1796
      %v1834 = vadd.f32 %v1689, %v1799
      %v1835 = vadd.f32 %v1690, %v1804
      %v1836 = vadd.f32 %v1691, %v1807
      %v1837 = vadd.f32 %v1692, %v1812
      %v1838 = vadd.f32 %v1693, %v1815
      %v1839 = vadd.f32 %v1694, %v1820
      %v1840 = vadd.f32 %v1695, %v1823
      %v1841 = vadd.f32 %v1696, %v1828
      %1842 = vst [vmem:[#allocation2] sm:$0xff] %v1833
      %1843 = vst [vmem:[#allocation2 + $0x8] sm:$0xff] %v1834
      %1844 = vst [vmem:[#allocation2 + $0x10] sm:$0xff] %v1835
      %1845 = vst [vmem:[#allocation2 + $0x18] sm:$0xff] %v1836
      %1846 = vst [vmem:[#allocation2 + $0x20] sm:$0xff] %v1837
      %1847 = vst [vmem:[#allocation2 + $0x28] sm:$0xff] %v1838
      %1848 = vst [vmem:[#allocation2 + $0x30] sm:$0xff] %v1839
      %1849 = vst [vmem:[#allocation2 + $0x38] sm:$0xff] %v1840
      %1850 = vst [vmem:[#allocation2 + $0x40] sm:$0xff] %v1841
      %v1851 = vld [vmem:[#allocation2] sm:$0xff]
      %v1852 = vld [vmem:[#allocation2 + $0x8] sm:$0xff]
      %v1853 = vld [vmem:[#allocation2 + $0x10] sm:$0xff]
      %v1854 = vld [vmem:[#allocation2 + $0x18] sm:$0xff]
      %v1855 = vld [vmem:[#allocation2 + $0x20] sm:$0xff]
      %v1856 = vld [vmem:[#allocation2 + $0x28] sm:$0xff]
      %v1857 = vld [vmem:[#allocation2 + $0x30] sm:$0xff]
      %v1858 = vld [vmem:[#allocation2 + $0x38] sm:$0xff]
      %v1859 = vld [vmem:[#allocation2 + $0x40] sm:$0xff]
      %v1860 = vld [vmem:[%s213] sm:$0x1]
      %v1862 = vlaneseq
      %v1863 = vshrl.u32 %v1862, 7
      %v1864 = vsub.s32 0, %v1863
      %v1865 = vrot.slane %v1860, %v1864
      %v1867 = vadd.f32 %v1851, %v1865
      %v1868 = vadd.f32 %v1852, %v1865
      %v1869 = vadd.f32 %v1853, %v1865
      %v1870 = vadd.f32 %v1854, %v1865
      %v1871 = vadd.f32 %v1855, %v1865
      %v1872 = vadd.f32 %v1856, %v1865
      %v1873 = vadd.f32 %v1857, %v1865
      %v1874 = vadd.f32 %v1858, %v1865
      %v1875 = vadd.f32 %v1859, %v1865
      %v1876 = vmax.f32 %v1867, 0.0
      %v1877 = vmax.f32 %v1868, 0.0
      %v1878 = vmax.f32 %v1869, 0.0
      %v1879 = vmax.f32 %v1870, 0.0
      %v1880 = vmax.f32 %v1871, 0.0
      %v1881 = vmax.f32 %v1872, 0.0
      %v1882 = vmax.f32 %v1873, 0.0
      %v1883 = vmax.f32 %v1874, 0.0
      %v1884 = vmax.f32 %v1875, 0.0
      %v1885 = vpack.c.bf16 %v1877, %v1876
      %v1886 = vpack.c.bf16 %v1879, %v1878
      %v1887 = vpack.c.bf16 %v1881, %v1880
      %v1888 = vpack.c.bf16 %v1883, %v1882
      %v1889 = vpack.c.bf16 %v1884, %v1884
      %v1895 = vunpack.c.l.b16 %v1885
      %v1896 = vunpack.c.h.b16 %v1885
      %v1897 = vunpack.c.l.b16 %v1886
      %v1898 = vunpack.c.h.b16 %v1886
      %v1899 = vunpack.c.l.b16 %v1887
      %v1900 = vunpack.c.h.b16 %v1887
      %v1901 = vunpack.c.l.b16 %v1888
      %v1902 = vunpack.c.h.b16 %v1888
      %v1903 = vunpack.c.l.b16 %v1889
      %v1904 = vpack.c.b16 %v1895, %v1895
      %v1905 = vpack.c.b16 %v1896, %v1896
      %v1906 = vpack.c.b16 %v1897, %v1897
      %v1907 = vpack.c.b16 %v1898, %v1898
      %v1908 = vpack.c.b16 %v1899, %v1899
      %v1909 = vpack.c.b16 %v1900, %v1900
      %v1910 = vpack.c.b16 %v1901, %v1901
      %v1911 = vpack.c.b16 %v1902, %v1902
      %v1912 = vpack.c.b16 %v1903, %v1903
      %1922 = vst [vmem:[%s221] sm:$0xf] %v1904
      %1923 = vst [vmem:[%s221 + $0x4] sm:$0xf] %v1905
      %1924 = vst [vmem:[%s221 + $0x8] sm:$0xf] %v1906
      %1925 = vst [vmem:[%s221 + $0xc] sm:$0xf] %v1907
      %1926 = vst [vmem:[%s221 + $0x10] sm:$0xf] %v1908
      %1927 = vst [vmem:[%s221 + $0x14] sm:$0xf] %v1909
      %1928 = vst [vmem:[%s221 + $0x18] sm:$0xf] %v1910
      %1929 = vst [vmem:[%s221 + $0x1c] sm:$0xf] %v1911
      %1930 = vst [vmem:[%s221 + $0x20] sm:$0xf] %v1912
      %p1931 = scmp.lt.s32.totalorder %s18, 1
      %s1932 = scalar_select %p1931, %s18, 1
      %p1933 = scmp.lt.s32.totalorder %s19, 0
      %s1934 = scalar_select %p1933, %s19, 0
      %s1935 = smul.addr %s1932, 9
      %s1936 = sadd.s32 %s1934, %s1935
      %s1937 = smul.addr %s1936, 4
      %s1938 = scalar_lea.vmem %s3, %s1937
      // Predicated region
      $region33: #{resnet_block_forward.2} parent=31 // pred_check
        %p1939 = pneg %p124
      $region34: #{resnet_block_forward.2} parent=31 // pred_check_branch
        %1941 = sbr.rel (%p1939) target = $region36
      $region35: #{resnet_block_forward.2} parent=31 // pred_region
        _
      $region36: #{resnet_block_forward.2} parent=31 // pred_fallthru
        _
    $region32: #{resnet_block_forward.2} parent=5 // pred_fallthru
      _
    %p1942 = scmp.le.s32.totalorder 2, %s9
    // Predicated region
    $region37: #{resnet_block_forward.2} parent=5 // pred_check
      %p1943 = pneg %p1942
    $region38: #{resnet_block_forward.2} parent=5 // pred_check_branch
      %1945 = sbr.rel (%p1943) target = $region40
    $region39: #{resnet_block_forward.2} parent=5 // pred_region
      %s1946 = ssub.s32 %s9, 2
      // Predicated region
      $region41: #{resnet_block_forward.2} parent=39 // pred_check
        %p1947 = pneg %p130
      $region42: #{resnet_block_forward.2} parent=39 // pred_check_branch
        %1949 = sbr.rel (%p1947) target = $region44
      $region43: #{resnet_block_forward.2} parent=39 // pred_region
        %p1950 = scmp.lt.s32.totalorder %s20, 1
        %s1951 = scalar_select %p1950, %s20, 1
        %p1952 = scmp.lt.s32.totalorder %s21, 0
        %s1953 = scalar_select %p1952, %s21, 0
        %s1954 = smul.addr %s1951, 9
        %s1955 = sadd.s32 %s1953, %s1954
        %s1956 = smul.addr %s1955, 4
        %s1957 = scalar_lea.vmem %s3, %s1956
      $region44: #{resnet_block_forward.2} parent=39 // pred_fallthru
        _
    $region40: #{resnet_block_forward.2} parent=5 // pred_fallthru
      _
  $region6: #{resnet_block_forward.2} parent=0 // loop_footer
    %s13 = sadd.s32 1, %s9
  $region7: #{resnet_block_forward.2} parent=0 // loop_footer_branch
    %8 = sbr.rel target = $region3
  $region8: #{resnet_block_forward.2} parent=0 // loop_exit
    _

// kernel: resnet_block_forward.3
$region0: #{resnet_block_forward.3}
  #allocation0 [shape = 'u32[]', space=smem, size = 0x4, offset = 0x4, fixed_abs, tag = 'smem constant byte address 0x4 - core index']
  #allocation1 [shape = 'u32[144,128]{1,0:T(1,128)}', space=vmem, size = 0x12000, scoped, tag = 'internal scratch']
  #allocation2 [shape = 'f32[80,128]{1,0:T(8,128)}', space=vmem, size = 0xa000, scoped, tag = 'scratch operand']
  %s0 = inlined_call_operand.vmem [shape: bf16[2,104,8], index: 0, kind: input, shape index: {}]
  %s1 = inlined_call_operand.vmem [shape: bf16[9,8,128], index: 1, kind: input, shape index: {}]
  %s2 = inlined_call_operand.vmem [shape: f32[1,128], index: 2, kind: input, shape index: {}]
  %s3 = inlined_call_operand.vmem [shape: bf16[2,80,8], index: 3, kind: input, shape index: {}]
  %s4 = inlined_call_operand.vmem [shape: bf16[8,128], index: 4, kind: input, shape index: {}]
  %s5 = inlined_call_operand.vmem [shape: bf16[2,80,128], index: 5, kind: output, shape index: {}]
  %s6 = sld [smem:[#allocation0]]
  $region53: #{resnet_block_forward.3} parent=0
    _
  %s8 = ssub.s32 1, %s6
  %s9 = scalar_select 0, %s8, %s6
  loop: start=0, step=1, limit=4
  $region2: #{resnet_block_forward.3} parent=0 // loop_pre_header
    _
  $region3: #{resnet_block_forward.3} parent=0 // loop_header
    %s11 = sphi 0, %s15
    %p12 = scmp.ge.s32.totalorder %s11, 4
    %s18 = sphi 0, %s30
    %s19 = sphi 0, %s26
    %s20 = sphi 0, %s18
    %s21 = sphi 0, %s19
    %s22 = sphi 0, %s20
    %s23 = sphi 0, %s21
    %s33 = sphi 0, %s35
    %s36 = sphi 0, %s33
    %s37 = sphi 0, %s36
    %s53 = sphi 0, %s37
    %s59 = sphi 0, %s61
    %s62 = sphi 0, %s59
    %s63 = sphi 0, %s62
    %s79 = sphi 0, %s63
    %s85 = sphi 0, %s87
    %s88 = sphi 0, %s85
    %s89 = sphi 0, %s88
    %s105 = sphi 0, %s89
    %s111 = sphi 0, %s113
    %s114 = sphi 0, %s111
    %s115 = sphi 0, %s114
    %s131 = sphi 0, %s115
    %s137 = sphi 0, %s139
    %s140 = sphi 0, %s137
    %s141 = sphi 0, %s140
    %s157 = sphi 0, %s141
    %s165 = sphi 0, %s167
    %s168 = sphi 0, %s165
    %s169 = sphi 0, %s168
    %s185 = sphi 0, %s169
  $region4: #{resnet_block_forward.3} parent=0 // loop_header_branch
    %14 = sbr.rel (%p12) target = $region8
  $region5: #{resnet_block_forward.3} parent=0 // loop_body
    %s16 = ssub.s32 %s11, 1
    %s17 = ssub.s32 %s11, 2
    %s24 = sadd.s32 1, %s19
    %p25 = scmp.ge.s32.totalorder %s24, 1
    %s26 = scalar_select %p25, 0, %s24
    %s27 = sadd.s32 1, %s18
    %s28 = scalar_select %p25, %s27, %s18
    %p29 = scmp.ge.s32.totalorder %s28, 2
    %s30 = scalar_select %p29, 0, %s28
    %s31 = ssub.s32 %s18, %s30
    %p32 = scmp.eq.s32.totalorder %s31, 0
    %s34 = sadd.s32 %s33, 1
    %s35 = scalar_select %p32, %s33, %s34
    %p38 = pneg %p32
    %p39 = scmp.eq.s32.totalorder %s11, 1
    %p40 = por %p38, %p39
    %p41 = scmp.ne.s32.totalorder %s33, %s36
    %p42 = scmp.eq.s32.totalorder %s11, 0
    %p43 = por %p41, %p42
    %p44 = scmp.ne.s32.totalorder %s33, %s36
    %p45 = scmp.eq.s32.totalorder %s16, 1
    %p46 = por %p44, %p45
    %p47 = scmp.ne.s32.totalorder %s36, %s37
    %p48 = scmp.eq.s32.totalorder %s16, 0
    %p49 = por %p47, %p48
    %p50 = scmp.ne.s32.totalorder %s36, %s37
    %p51 = scmp.eq.s32.totalorder %s17, 1
    %p52 = por %p50, %p51
    %p54 = scmp.ne.s32.totalorder %s37, %s53
    %p55 = scmp.eq.s32.totalorder %s17, 0
    %p56 = por %p54, %p55
    %s57 = ssub.s32 %s19, %s26
    %p58 = scmp.eq.s32.totalorder %s57, 0
    %s60 = sadd.s32 %s59, 1
    %s61 = scalar_select %p58, %s59, %s60
    %p64 = pneg %p58
    %p65 = scmp.eq.s32.totalorder %s11, 1
    %p66 = por %p64, %p65
    %p67 = scmp.ne.s32.totalorder %s59, %s62
    %p68 = scmp.eq.s32.totalorder %s11, 0
    %p69 = por %p67, %p68
    %p70 = scmp.ne.s32.totalorder %s59, %s62
    %p71 = scmp.eq.s32.totalorder %s16, 1
    %p72 = por %p70, %p71
    %p73 = scmp.ne.s32.totalorder %s62, %s63
    %p74 = scmp.eq.s32.totalorder %s16, 0
    %p75 = por %p73, %p74
    %p76 = scmp.ne.s32.totalorder %s62, %s63
    %p77 = scmp.eq.s32.totalorder %s17, 1
    %p78 = por %p76, %p77
    %p80 = scmp.ne.s32.totalorder %s63, %s79
    %p81 = scmp.eq.s32.totalorder %s17, 0
    %p82 = por %p80, %p81
    %s83 = ssub.s32 %s19, %s26
    %p84 = scmp.eq.s32.totalorder %s83, 0
    %s86 = sadd.s32 %s85, 1
    %s87 = scalar_select %p84, %s85, %s86
    %p90 = pneg %p84
    %p91 = scmp.eq.s32.totalorder %s11, 1
    %p92 = por %p90, %p91
    %p93 = scmp.ne.s32.totalorder %s85, %s88
    %p94 = scmp.eq.s32.totalorder %s11, 0
    %p95 = por %p93, %p94
    %p96 = scmp.ne.s32.totalorder %s85, %s88
    %p97 = scmp.eq.s32.totalorder %s16, 1
    %p98 = por %p96, %p97
    %p99 = scmp.ne.s32.totalorder %s88, %s89
    %p100 = scmp.eq.s32.totalorder %s16, 0
    %p101 = por %p99, %p100
    %p102 = scmp.ne.s32.totalorder %s88, %s89
    %p103 = scmp.eq.s32.totalorder %s17, 1
    %p104 = por %p102, %p103
    %p106 = scmp.ne.s32.totalorder %s89, %s105
    %p107 = scmp.eq.s32.totalorder %s17, 0
    %p108 = por %p106, %p107
    %s109 = ssub.s32 %s18, %s30
    %p110 = scmp.eq.s32.totalorder %s109, 0
    %s112 = sadd.s32 %s111, 1
    %s113 = scalar_select %p110, %s111, %s112
    %p116 = pneg %p110
    %p117 = scmp.eq.s32.totalorder %s11, 1
    %p118 = por %p116, %p117
    %p119 = scmp.ne.s32.totalorder %s111, %s114
    %p120 = scmp.eq.s32.totalorder %s11, 0
    %p121 = por %p119, %p120
    %p122 = scmp.ne.s32.totalorder %s111, %s114
    %p123 = scmp.eq.s32.totalorder %s16, 1
    %p124 = por %p122, %p123
    %p125 = scmp.ne.s32.totalorder %s114, %s115
    %p126 = scmp.eq.s32.totalorder %s16, 0
    %p127 = por %p125, %p126
    %p128 = scmp.ne.s32.totalorder %s114, %s115
    %p129 = scmp.eq.s32.totalorder %s17, 1
    %p130 = por %p128, %p129
    %p132 = scmp.ne.s32.totalorder %s115, %s131
    %p133 = scmp.eq.s32.totalorder %s17, 0
    %p134 = por %p132, %p133
    %s135 = ssub.s32 %s19, %s26
    %p136 = scmp.eq.s32.totalorder %s135, 0
    %s138 = sadd.s32 %s137, 1
    %s139 = scalar_select %p136, %s137, %s138
    %p142 = pneg %p136
    %p143 = scmp.eq.s32.totalorder %s11, 1
    %p144 = por %p142, %p143
    %p145 = scmp.ne.s32.totalorder %s137, %s140
    %p146 = scmp.eq.s32.totalorder %s11, 0
    %p147 = por %p145, %p146
    %p148 = scmp.ne.s32.totalorder %s137, %s140
    %p149 = scmp.eq.s32.totalorder %s16, 1
    %p150 = por %p148, %p149
    %p151 = scmp.ne.s32.totalorder %s140, %s141
    %p152 = scmp.eq.s32.totalorder %s16, 0
    %p153 = por %p151, %p152
    %p154 = scmp.ne.s32.totalorder %s140, %s141
    %p155 = scmp.eq.s32.totalorder %s17, 1
    %p156 = por %p154, %p155
    %p158 = scmp.ne.s32.totalorder %s141, %s157
    %p159 = scmp.eq.s32.totalorder %s17, 0
    %p160 = por %p158, %p159
    %s161 = ssub.s32 %s18, %s30
    %s162 = ssub.s32 %s19, %s26
    %s163 = sor.u32 %s161, %s162
    %p164 = scmp.eq.s32.totalorder %s163, 0
    %s166 = sadd.s32 %s165, 1
    %s167 = scalar_select %p164, %s165, %s166
    %p170 = pneg %p164
    %p171 = scmp.eq.s32.totalorder %s11, 1
    %p172 = por %p170, %p171
    %p173 = scmp.ne.s32.totalorder %s165, %s168
    %p174 = scmp.eq.s32.totalorder %s11, 0
    %p175 = por %p173, %p174
    %p176 = scmp.ne.s32.totalorder %s165, %s168
    %p177 = scmp.eq.s32.totalorder %s16, 1
    %p178 = por %p176, %p177
    %p179 = scmp.ne.s32.totalorder %s168, %s169
    %p180 = scmp.eq.s32.totalorder %s16, 0
    %p181 = por %p179, %p180
    %p182 = scmp.ne.s32.totalorder %s168, %s169
    %p183 = scmp.eq.s32.totalorder %s17, 1
    %p184 = por %p182, %p183
    %p186 = scmp.ne.s32.totalorder %s169, %s185
    %p187 = scmp.eq.s32.totalorder %s17, 0
    %p188 = por %p186, %p187
    %p189 = scmp.le.s32.totalorder 1, %s11
    %p190 = scmp.lt.s32.totalorder %s11, 3
    %p191 = pnand %p189, %p190
    %p192 = pneg %p191
    // Predicated region
    $region9: #{resnet_block_forward.3} parent=5 // pred_check
      _
    $region10: #{resnet_block_forward.3} parent=5 // pred_check_branch
      %194 = sbr.rel (%p191) target = $region12
    $region11: #{resnet_block_forward.3} parent=5 // pred_region
      %s195 = ssub.s32 %s11, 1
      // Predicated region
      $region13: #{resnet_block_forward.3} parent=11 // pred_check
        %p196 = pneg %p75
      $region14: #{resnet_block_forward.3} parent=11 // pred_check_branch
        %198 = sbr.rel (%p196) target = $region16
      $region15: #{resnet_block_forward.3} parent=11 // pred_region
        %p199 = scmp.lt.s32.totalorder %s21, 0
        %s200 = scalar_select %p199, %s21, 0
        %s201 = smul.addr %s200, 4
        %s202 = scalar_lea.vmem %s1, %s201
      $region16: #{resnet_block_forward.3} parent=11 // pred_fallthru
        _
      // Predicated region
      $region17: #{resnet_block_forward.3} parent=11 // pred_check
        %p203 = pneg %p101
      $region18: #{resnet_block_forward.3} parent=11 // pred_check_branch
        %205 = sbr.rel (%p203) target = $region20
      $region19: #{resnet_block_forward.3} parent=11 // pred_region
        %p206 = scmp.lt.s32.totalorder %s21, 0
        %s207 = scalar_select %p206, %s21, 0
        %s208 = scalar_lea.vmem %s2, %s207
      $region20: #{resnet_block_forward.3} parent=11 // pred_fallthru
        _
      // Predicated region
      $region21: #{resnet_block_forward.3} parent=11 // pred_check
        %p209 = pneg %p153
      $region22: #{resnet_block_forward.3} parent=11 // pred_check_branch
        %211 = sbr.rel (%p209) target = $region24
      $region23: #{resnet_block_forward.3} parent=11 // pred_region
        %p212 = scmp.lt.s32.totalorder %s21, 0
        %s213 = scalar_select %p212, %s21, 0
        %s214 = smul.addr %s213, 4
        %s215 = scalar_lea.vmem %s4, %s214
      $region24: #{resnet_block_forward.3} parent=11 // pred_fallthru
        _
    $region12: #{resnet_block_forward.3} parent=5 // pred_fallthru
      _
    %p216 = scmp.lt.s32.totalorder %s11, 2
    // Predicated region
    $region25: #{resnet_block_forward.3} parent=5 // pred_check
      %p217 = pneg %p216
    $region26: #{resnet_block_forward.3} parent=5 // pred_check_branch
      %219 = sbr.rel (%p217) target = $region28
    $region27: #{resnet_block_forward.3} parent=5 // pred_region
      // Predicated region
      $region29: #{resnet_block_forward.3} parent=27 // pred_check
        %p220 = pneg %p43
      $region30: #{resnet_block_forward.3} parent=27 // pred_check_branch
        %222 = sbr.rel (%p220) target = $region32
      $region31: #{resnet_block_forward.3} parent=27 // pred_region
        %p223 = scmp.lt.s32.totalorder %s18, 1
        %s224 = scalar_select %p223, %s18, 1
        %s225 = smul.addr %s224, 13
        %s226 = smul.addr %s225, 4
        %s227 = scalar_lea.vmem %s0, %s226
      $region32: #{resnet_block_forward.3} parent=27 // pred_fallthru
        _
      // Predicated region
      $region33: #{resnet_block_forward.3} parent=27 // pred_check
        %p228 = pneg %p121
      $region34: #{resnet_block_forward.3} parent=27 // pred_check_branch
        %230 = sbr.rel (%p228) target = $region36
      $region35: #{resnet_block_forward.3} parent=27 // pred_region
        %p231 = scmp.lt.s32.totalorder %s18, 1
        %s232 = scalar_select %p231, %s18, 1
        %s233 = smul.addr %s232, 10
        %s234 = smul.addr %s233, 4
        %s235 = scalar_lea.vmem %s3, %s234
      $region36: #{resnet_block_forward.3} parent=27 // pred_fallthru
        _
    $region28: #{resnet_block_forward.3} parent=5 // pred_fallthru
      _
    %p236 = scmp.le.s32.totalorder 1, %s11
    %p237 = scmp.lt.s32.totalorder %s11, 3
    %p238 = pnand %p236, %p237
    %p239 = pneg %p238
    // Predicated region
    $region37: #{resnet_block_forward.3} parent=5 // pred_check
      _
    $region38: #{resnet_block_forward.3} parent=5 // pred_check_branch
      %241 = sbr.rel (%p238) target = $region40
    $region39: #{resnet_block_forward.3} parent=5 // pred_region
      %s242 = ssub.s32 %s11, 1
      %p243 = scmp.lt.s32.totalorder %s20, 1
      %s244 = scalar_select %p243, %s20, 1
      %s245 = smul.addr %s244, 13
      %s246 = smul.addr %s245, 4
      %s247 = scalar_lea.vmem %s0, %s246
      %p248 = pneg %p49
      %p249 = pneg %p46
      %p250 = scmp.lt.s32.totalorder %s21, 0
      %s251 = scalar_select %p250, %s21, 0
      %s252 = smul.addr %s251, 4
      %s253 = scalar_lea.vmem %s1, %s252
      %p254 = pneg %p75
      %p255 = pneg %p72
      %p256 = scmp.lt.s32.totalorder %s21, 0
      %s257 = scalar_select %p256, %s21, 0
      %s258 = scalar_lea.vmem %s2, %s257
      %p259 = pneg %p101
      %p260 = pneg %p98
      %p261 = scmp.lt.s32.totalorder %s20, 1
      %s262 = scalar_select %p261, %s20, 1
      %s263 = smul.addr %s262, 10
      %s264 = smul.addr %s263, 4
      %s265 = scalar_lea.vmem %s3, %s264
      %p266 = pneg %p127
      %p267 = pneg %p124
      %p268 = scmp.lt.s32.totalorder %s21, 0
      %s269 = scalar_select %p268, %s21, 0
      %s270 = smul.addr %s269, 4
      %s271 = scalar_lea.vmem %s4, %s270
      %p272 = pneg %p153
      %p273 = pneg %p150
      %p274 = pneg %p181
      %p275 = pneg %p178
      %p276 = scmp.lt.s32.totalorder %s20, 1
      %s277 = scalar_select %p276, %s20, 1
      %p278 = scmp.lt.s32.totalorder %s21, 0
      %s279 = scalar_select %p278, %s21, 0
      %s280 = smul.addr %s277, 10
      %s281 = sadd.s32 %s279, %s280
      %s282 = smul.addr %s281, 4
      %s283 = scalar_lea.vmem %s5, %s282
      %p284 = scmp.lt.s32.totalorder %s20, 1
      %s285 = scalar_select %p284, %s20, 1
      %s286 = smul.addr %s285, 13
      %s287 = smul.addr %s286, 4
      %s288 = scalar_lea.vmem %s0, %s287
      %p289 = scmp.lt.s32.totalorder %s21, 0
      %s290 = scalar_select %p289, %s21, 0
      %s291 = smul.addr %s290, 4
      %s292 = scalar_lea.vmem %s1, %s291
      %p293 = scmp.lt.s32.totalorder %s21, 0
      %s294 = scalar_select %p293, %s21, 0
      %s295 = scalar_lea.vmem %s2, %s294
      %p296 = scmp.lt.s32.totalorder %s20, 1
      %s297 = scalar_select %p296, %s20, 1
      %s298 = smul.addr %s297, 10
      %s299 = smul.addr %s298, 4
      %s300 = scalar_lea.vmem %s3, %s299
      %p301 = scmp.lt.s32.totalorder %s21, 0
      %s302 = scalar_select %p301, %s21, 0
      %s303 = smul.addr %s302, 4
      %s304 = scalar_lea.vmem %s4, %s303
      %p305 = scmp.lt.s32.totalorder %s20, 1
      %s306 = scalar_select %p305, %s20, 1
      %p307 = scmp.lt.s32.totalorder %s21, 0
      %s308 = scalar_select %p307, %s21, 0
      %s309 = smul.addr %s306, 10
      %s310 = sadd.s32 %s308, %s309
      %s311 = smul.addr %s310, 4
      %s312 = scalar_lea.vmem %s5, %s311
      %v314 = vld [vmem:[%s300] sm:$0xf]
      %v315 = vld [vmem:[%s300 + $0x4] sm:$0xf]
      %v316 = vld [vmem:[%s300 + $0x8] sm:$0xf]
      %v317 = vld [vmem:[%s300 + $0xc] sm:$0xf]
      %v318 = vld [vmem:[%s300 + $0x10] sm:$0xf]
      %v319 = vld [vmem:[%s300 + $0x14] sm:$0xf]
      %v320 = vld [vmem:[%s300 + $0x18] sm:$0xf]
      %v321 = vld [vmem:[%s300 + $0x1c] sm:$0xf]
      %v322 = vld [vmem:[%s300 + $0x20] sm:$0xf]
      %v323 = vld [vmem:[%s300 + $0x24] sm:$0xf]
      %v324 = vld [vmem:[%s304] sm:$0xf]
      %v335 = vunpack.c.l.b16 %v314
      %v336 = vunpack.c.l.b16 %v315
      %v337 = vunpack.c.l.b16 %v316
      %v338 = vunpack.c.l.b16 %v317
      %v339 = vunpack.c.l.b16 %v318
      %v340 = vunpack.c.l.b16 %v319
      %v341 = vunpack.c.l.b16 %v320
      %v342 = vunpack.c.l.b16 %v321
      %v343 = vunpack.c.l.b16 %v322
      %v344 = vunpack.c.l.b16 %v323
      %v345 = vpack.c.b16 %v336, %v335
      %v346 = vpack.c.b16 %v338, %v337
      %v347 = vpack.c.b16 %v340, %v339
      %v348 = vpack.c.b16 %v342, %v341
      %v349 = vpack.c.b16 %v344, %v343
      %vm350 = vcmask 64512
      %v352 = vsel %vm350, %v345, 0
      %v355 = vsel %vm350, %v346, 0
      %v358 = vsel %vm350, %v347, 0
      %v361 = vsel %vm350, %v348, 0
      %v364 = vsel %vm350, %v349, 0
      %vm366 = vcmask 1043456
      %v368 = vsel %vm366, %v324, 0
      %370 = vmatprep.subr.bf16.mxu0 0
      %371 = vmatpush1.bf16.msra.mxu0 %v368
      %372 = vmatprep.subr.bf16.mxu0 0
      %373 = vmatpush1.bf16.msra.mxu0 0
      %374 = vmatprep.subr.bf16.mxu0 0
      %375 = vmatpush1.bf16.msra.mxu0 0
      %376 = vmatprep.subr.bf16.mxu0 0
      %377 = vmatpush1.bf16.msra.mxu0 0
      %378 = vmatprep.subr.bf16.mxu0 0
      %379 = vmatpush1.bf16.msra.mxu0 0
      %380 = vmatprep.subr.bf16.mxu0 0
      %381 = vmatpush1.bf16.msra.mxu0 0
      %382 = vmatprep.subr.bf16.mxu0 0
      %383 = vmatpush1.bf16.msra.mxu0 0
      %384 = vmatprep.subr.bf16.mxu0 0
      %385 = vmatpush1.bf16.msra.mxu0 0
      %386 = vmatprep.subr.bf16.mxu0 0
      %387 = vmatpush1.bf16.msra.mxu0 0
      %388 = vmatprep.subr.bf16.mxu0 0
      %389 = vmatpush1.bf16.msra.mxu0 0
      %390 = vmatprep.subr.bf16.mxu0 0
      %391 = vmatpush1.bf16.msra.mxu0 0
      %392 = vmatprep.subr.bf16.mxu0 0
      %393 = vmatpush1.bf16.msra.mxu0 0
      %394 = vmatprep.subr.bf16.mxu0 0
      %395 = vmatpush1.bf16.msra.mxu0 0
      %396 = vmatprep.subr.bf16.mxu0 0
      %397 = vmatpush1.bf16.msra.mxu0 0
      %398 = vmatprep.subr.bf16.mxu0 0
      %399 = vmatpush1.bf16.msra.mxu0 0
      %400 = vmatprep.subr.bf16.mxu0 0
      %401 = vmatpush1.bf16.msra.mxu0 0
      %402 = vmatprep.mubr.bf16.mxu0 0
      %403 = vmatmul.mubr.bf16.gmra.mrb[0].mxu0 %v352
      %v404 = vpop.f32.mrb[0].mxu0
      %v405 = vadd.f32 0.0, %v404
      %v406 = vpop.f32.mrb[0].mxu0
      %v407 = vpop.f32.mrb[0].mxu0
      %v408 = vadd.f32 0.0, %v407
      %v409 = vpop.f32.mrb[0].mxu0
      %410 = vmatprep.mubr.bf16.mxu0 0
      %411 = vmatmul.mubr.bf16.gmra.mrb[0].mxu0 %v355
      %v412 = vpop.f32.mrb[0].mxu0
      %v413 = vadd.f32 0.0, %v412
      %v414 = vpop.f32.mrb[0].mxu0
      %v415 = vpop.f32.mrb[0].mxu0
      %v416 = vadd.f32 0.0, %v415
      %v417 = vpop.f32.mrb[0].mxu0
      %418 = vmatprep.mubr.bf16.mxu0 0
      %419 = vmatmul.mubr.bf16.gmra.mrb[0].mxu0 %v358
      %v420 = vpop.f32.mrb[0].mxu0
      %v421 = vadd.f32 0.0, %v420
      %v422 = vpop.f32.mrb[0].mxu0
      %v423 = vpop.f32.mrb[0].mxu0
      %v424 = vadd.f32 0.0, %v423
      %v425 = vpop.f32.mrb[0].mxu0
      %426 = vmatprep.mubr.bf16.mxu0 0
      %427 = vmatmul.mubr.bf16.gmra.mrb[0].mxu0 %v361
      %v428 = vpop.f32.mrb[0].mxu0
      %v429 = vadd.f32 0.0, %v428
      %v430 = vpop.f32.mrb[0].mxu0
      %v431 = vpop.f32.mrb[0].mxu0
      %v432 = vadd.f32 0.0, %v431
      %v433 = vpop.f32.mrb[0].mxu0
      %434 = vmatprep.mubr.bf16.mxu0 0
      %435 = vmatmul.mubr.bf16.gmra.mrb[0].mxu0 %v364
      %v436 = vpop.f32.mrb[0].mxu0
      %v437 = vadd.f32 0.0, %v436
      %v438 = vpop.f32.mrb[0].mxu0
      %v439 = vpop.f32.mrb[0].mxu0
      %v440 = vadd.f32 0.0, %v439
      %v441 = vpop.f32.mrb[0].mxu0
      %442 = vdwg.mxu0
      %443 = vst [vmem:[#allocation2] sm:$0xff] %v405
      %444 = vst [vmem:[#allocation2 + $0x8] sm:$0xff] %v408
      %445 = vst [vmem:[#allocation2 + $0x10] sm:$0xff] %v413
      %446 = vst [vmem:[#allocation2 + $0x18] sm:$0xff] %v416
      %447 = vst [vmem:[#allocation2 + $0x20] sm:$0xff] %v421
      %448 = vst [vmem:[#allocation2 + $0x28] sm:$0xff] %v424
      %449 = vst [vmem:[#allocation2 + $0x30] sm:$0xff] %v429
      %450 = vst [vmem:[#allocation2 + $0x38] sm:$0xff] %v432
      %451 = vst [vmem:[#allocation2 + $0x40] sm:$0xff] %v437
      %452 = vst [vmem:[#allocation2 + $0x48] sm:$0xff] %v440
      %v453 = vld [vmem:[#allocation2] sm:$0xff]
      %v454 = vld [vmem:[#allocation2 + $0x8] sm:$0xff]
      %v455 = vld [vmem:[#allocation2 + $0x10] sm:$0xff]
      %v456 = vld [vmem:[#allocation2 + $0x18] sm:$0xff]
      %v457 = vld [vmem:[#allocation2 + $0x20] sm:$0xff]
      %v458 = vld [vmem:[#allocation2 + $0x28] sm:$0xff]
      %v459 = vld [vmem:[#allocation2 + $0x30] sm:$0xff]
      %v460 = vld [vmem:[#allocation2 + $0x38] sm:$0xff]
      %v461 = vld [vmem:[#allocation2 + $0x40] sm:$0xff]
      %v462 = vld [vmem:[#allocation2 + $0x48] sm:$0xff]
      %v463 = vld [vmem:[%s288] sm:$0xf]
      %v464 = vld [vmem:[%s288 + $0x4] sm:$0xf]
      %v465 = vld [vmem:[%s288 + $0x8] sm:$0xf]
      %v466 = vld [vmem:[%s288 + $0xc] sm:$0xf]
      %v467 = vld [vmem:[%s288 + $0x10] sm:$0xf]
      %v468 = vld [vmem:[%s288 + $0x14] sm:$0xf]
      %v469 = vld [vmem:[%s288 + $0x18] sm:$0xf]
      %v470 = vld [vmem:[%s288 + $0x1c] sm:$0xf]
      %v471 = vld [vmem:[%s288 + $0x20] sm:$0xf]
      %v472 = vld [vmem:[%s288 + $0x24] sm:$0xf]
      %v473 = vld [vmem:[%s292] sm:$0xf]
      %v484 = vunpack.c.l.b16 %v463
      %v485 = vunpack.c.l.b16 %v464
      %v486 = vunpack.c.l.b16 %v465
      %v487 = vunpack.c.l.b16 %v466
      %v488 = vunpack.c.l.b16 %v467
      %v489 = vunpack.c.l.b16 %v468
      %v490 = vunpack.c.l.b16 %v469
      %v491 = vunpack.c.l.b16 %v470
      %v492 = vunpack.c.l.b16 %v471
      %v493 = vunpack.c.l.b16 %v472
      %v494 = vpack.c.b16 %v485, %v484
      %v495 = vpack.c.b16 %v487, %v486
      %v496 = vpack.c.b16 %v489, %v488
      %v497 = vpack.c.b16 %v491, %v490
      %v498 = vpack.c.b16 %v493, %v492
      %v500 = vsel %vm350, %v494, 0
      %v503 = vsel %vm350, %v495, 0
      %v506 = vsel %vm350, %v496, 0
      %v509 = vsel %vm350, %v497, 0
      %v512 = vsel %vm350, %v498, 0
      %v515 = vsel %vm366, %v473, 0
      %517 = vmatprep.subr.bf16.mxu0 0
      %518 = vmatpush1.bf16.msra.mxu0 %v515
      %519 = vmatprep.subr.bf16.mxu0 0
      %520 = vmatpush1.bf16.msra.mxu0 0
      %521 = vmatprep.subr.bf16.mxu0 0
      %522 = vmatpush1.bf16.msra.mxu0 0
      %523 = vmatprep.subr.bf16.mxu0 0
      %524 = vmatpush1.bf16.msra.mxu0 0
      %525 = vmatprep.subr.bf16.mxu0 0
      %526 = vmatpush1.bf16.msra.mxu0 0
      %527 = vmatprep.subr.bf16.mxu0 0
      %528 = vmatpush1.bf16.msra.mxu0 0
      %529 = vmatprep.subr.bf16.mxu0 0
      %530 = vmatpush1.bf16.msra.mxu0 0
      %531 = vmatprep.subr.bf16.mxu0 0
      %532 = vmatpush1.bf16.msra.mxu0 0
      %533 = vmatprep.subr.bf16.mxu0 0
      %534 = vmatpush1.bf16.msra.mxu0 0
      %535 = vmatprep.subr.bf16.mxu0 0
      %536 = vmatpush1.bf16.msra.mxu0 0
      %537 = vmatprep.subr.bf16.mxu0 0
      %538 = vmatpush1.bf16.msra.mxu0 0
      %539 = vmatprep.subr.bf16.mxu0 0
      %540 = vmatpush1.bf16.msra.mxu0 0
      %541 = vmatprep.subr.bf16.mxu0 0
      %542 = vmatpush1.bf16.msra.mxu0 0
      %543 = vmatprep.subr.bf16.mxu0 0
      %544 = vmatpush1.bf16.msra.mxu0 0
      %545 = vmatprep.subr.bf16.mxu0 0
      %546 = vmatpush1.bf16.msra.mxu0 0
      %547 = vmatprep.subr.bf16.mxu0 0
      %548 = vmatpush1.bf16.msra.mxu0 0
      %549 = vmatprep.mubr.bf16.mxu0 0
      %550 = vmatmul.mubr.bf16.gmra.mrb[0].mxu0 %v500
      %v551 = vpop.f32.mrb[0].mxu0
      %v552 = vadd.f32 0.0, %v551
      %v553 = vpop.f32.mrb[0].mxu0
      %v554 = vpop.f32.mrb[0].mxu0
      %v555 = vadd.f32 0.0, %v554
      %v556 = vpop.f32.mrb[0].mxu0
      %557 = vmatprep.mubr.bf16.mxu0 0
      %558 = vmatmul.mubr.bf16.gmra.mrb[0].mxu0 %v503
      %v559 = vpop.f32.mrb[0].mxu0
      %v560 = vadd.f32 0.0, %v559
      %v561 = vpop.f32.mrb[0].mxu0
      %v562 = vpop.f32.mrb[0].mxu0
      %v563 = vadd.f32 0.0, %v562
      %v564 = vpop.f32.mrb[0].mxu0
      %565 = vmatprep.mubr.bf16.mxu0 0
      %566 = vmatmul.mubr.bf16.gmra.mrb[0].mxu0 %v506
      %v567 = vpop.f32.mrb[0].mxu0
      %v568 = vadd.f32 0.0, %v567
      %v569 = vpop.f32.mrb[0].mxu0
      %v570 = vpop.f32.mrb[0].mxu0
      %v571 = vadd.f32 0.0, %v570
      %v572 = vpop.f32.mrb[0].mxu0
      %573 = vmatprep.mubr.bf16.mxu0 0
      %574 = vmatmul.mubr.bf16.gmra.mrb[0].mxu0 %v509
      %v575 = vpop.f32.mrb[0].mxu0
      %v576 = vadd.f32 0.0, %v575
      %v577 = vpop.f32.mrb[0].mxu0
      %v578 = vpop.f32.mrb[0].mxu0
      %v579 = vadd.f32 0.0, %v578
      %v580 = vpop.f32.mrb[0].mxu0
      %581 = vmatprep.mubr.bf16.mxu0 0
      %582 = vmatmul.mubr.bf16.gmra.mrb[0].mxu0 %v512
      %v583 = vpop.f32.mrb[0].mxu0
      %v584 = vadd.f32 0.0, %v583
      %v585 = vpop.f32.mrb[0].mxu0
      %v586 = vpop.f32.mrb[0].mxu0
      %v587 = vadd.f32 0.0, %v586
      %v588 = vpop.f32.mrb[0].mxu0
      %589 = vdwg.mxu0
      %v590 = vadd.f32 %v453, %v552
      %v591 = vadd.f32 %v454, %v555
      %v592 = vadd.f32 %v455, %v560
      %v593 = vadd.f32 %v456, %v563
      %v594 = vadd.f32 %v457, %v568
      %v595 = vadd.f32 %v458, %v571
      %v596 = vadd.f32 %v459, %v576
      %v597 = vadd.f32 %v460, %v579
      %v598 = vadd.f32 %v461, %v584
      %v599 = vadd.f32 %v462, %v587
      %600 = vst [vmem:[#allocation2] sm:$0xff] %v590
      %601 = vst [vmem:[#allocation2 + $0x8] sm:$0xff] %v591
      %602 = vst [vmem:[#allocation2 + $0x10] sm:$0xff] %v592
      %603 = vst [vmem:[#allocation2 + $0x18] sm:$0xff] %v593
      %604 = vst [vmem:[#allocation2 + $0x20] sm:$0xff] %v594
      %605 = vst [vmem:[#allocation2 + $0x28] sm:$0xff] %v595
      %606 = vst [vmem:[#allocation2 + $0x30] sm:$0xff] %v596
      %607 = vst [vmem:[#allocation2 + $0x38] sm:$0xff] %v597
      %608 = vst [vmem:[#allocation2 + $0x40] sm:$0xff] %v598
      %609 = vst [vmem:[#allocation2 + $0x48] sm:$0xff] %v599
      %v610 = vld [vmem:[#allocation2] sm:$0xff]
      %v611 = vld [vmem:[#allocation2 + $0x8] sm:$0xff]
      %v612 = vld [vmem:[#allocation2 + $0x10] sm:$0xff]
      %v613 = vld [vmem:[#allocation2 + $0x18] sm:$0xff]
      %v614 = vld [vmem:[#allocation2 + $0x20] sm:$0xff]
      %v615 = vld [vmem:[#allocation2 + $0x28] sm:$0xff]
      %v616 = vld [vmem:[#allocation2 + $0x30] sm:$0xff]
      %v617 = vld [vmem:[#allocation2 + $0x38] sm:$0xff]
      %v618 = vld [vmem:[#allocation2 + $0x40] sm:$0xff]
      %v619 = vld [vmem:[#allocation2 + $0x48] sm:$0xff]
      %v620 = vld [vmem:[%s288] sm:$0xf]
      %v621 = vld [vmem:[%s288 + $0x4] sm:$0xf]
      %v622 = vld [vmem:[%s288 + $0x8] sm:$0xf]
      %v623 = vld [vmem:[%s288 + $0xc] sm:$0xf]
      %v624 = vld [vmem:[%s288 + $0x10] sm:$0xf]
      %v625 = vld [vmem:[%s288 + $0x14] sm:$0xf]
      %v626 = vld [vmem:[%s288 + $0x18] sm:$0xf]
      %v627 = vld [vmem:[%s288 + $0x1c] sm:$0xf]
      %v628 = vld [vmem:[%s288 + $0x20] sm:$0xf]
      %v629 = vld [vmem:[%s288 + $0x24] sm:$0xf]
      %v630 = vld [vmem:[%s288 + $0x28] sm:$0x1]
      %s631 = scalar_lea.vmem %s292, 4
      %v632 = vld [vmem:[%s631] sm:$0xf]
      %v644 = vunpack.c.l.b16 %v620
      %v645 = vunpack.c.l.b16 %v621
      %v646 = vunpack.c.l.b16 %v622
      %v647 = vunpack.c.l.b16 %v623
      %v648 = vunpack.c.l.b16 %v624
      %v649 = vunpack.c.l.b16 %v625
      %v650 = vunpack.c.l.b16 %v626
      %v651 = vunpack.c.l.b16 %v627
      %v652 = vunpack.c.l.b16 %v628
      %v653 = vunpack.c.l.b16 %v629
      %v654 = vunpack.c.l.b16 %v630
      %v655 = vpack.c.b16 %v645, %v644
      %v656 = vpack.c.b16 %v647, %v646
      %v657 = vpack.c.b16 %v649, %v648
      %v658 = vpack.c.b16 %v651, %v650
      %v659 = vpack.c.b16 %v653, %v652
      %v660 = vpack.c.b16 %v654, %v654
      %vm661 = vsmask.f32 7424
      %v663 = vshrl.u32 %v655, 16
      %v665 = vshll.u32 %v655, 16
      %v667 = vrot.slane %v665, 1
      %v668 = vor.u32 %v663, %v667
      %v670 = vshll.u32 %v656, 16
      %v672 = vrot.slane %v670, 1
      %v673 = vsel %vm661, %v668, %v672
      %v674 = vshrl.u32 %v656, 16
      %v676 = vor.u32 %v674, %v672
      %v678 = vshll.u32 %v657, 16
      %v680 = vrot.slane %v678, 1
      %v681 = vsel %vm661, %v676, %v680
      %v682 = vshrl.u32 %v657, 16
      %v684 = vor.u32 %v682, %v680
      %v686 = vshll.u32 %v658, 16
      %v688 = vrot.slane %v686, 1
      %v689 = vsel %vm661, %v684, %v688
      %v690 = vshrl.u32 %v658, 16
      %v692 = vor.u32 %v690, %v688
      %v694 = vshll.u32 %v659, 16
      %v696 = vrot.slane %v694, 1
      %v697 = vsel %vm661, %v692, %v696
      %v698 = vshrl.u32 %v659, 16
      %v700 = vor.u32 %v698, %v696
      %v702 = vshll.u32 %v660, 16
      %v704 = vrot.slane %v702, 1
      %v705 = vsel %vm661, %v700, %v704
      %v707 = vsel %vm350, %v673, 0
      %v710 = vsel %vm350, %v681, 0
      %v713 = vsel %vm350, %v689, 0
      %v716 = vsel %vm350, %v697, 0
      %v719 = vsel %vm350, %v705, 0
      %v722 = vsel %vm366, %v632, 0
      %724 = vmatprep.subr.bf16.mxu0 0
      %725 = vmatpush1.bf16.msra.mxu0 %v722
      %726 = vmatprep.subr.bf16.mxu0 0
      %727 = vmatpush1.bf16.msra.mxu0 0
      %728 = vmatprep.subr.bf16.mxu0 0
      %729 = vmatpush1.bf16.msra.mxu0 0
      %730 = vmatprep.subr.bf16.mxu0 0
      %731 = vmatpush1.bf16.msra.mxu0 0
      %732 = vmatprep.subr.bf16.mxu0 0
      %733 = vmatpush1.bf16.msra.mxu0 0
      %734 = vmatprep.subr.bf16.mxu0 0
      %735 = vmatpush1.bf16.msra.mxu0 0
      %736 = vmatprep.subr.bf16.mxu0 0
      %737 = vmatpush1.bf16.msra.mxu0 0
      %738 = vmatprep.subr.bf16.mxu0 0
      %739 = vmatpush1.bf16.msra.mxu0 0
      %740 = vmatprep.subr.bf16.mxu0 0
      %741 = vmatpush1.bf16.msra.mxu0 0
      %742 = vmatprep.subr.bf16.mxu0 0
      %743 = vmatpush1.bf16.msra.mxu0 0
      %744 = vmatprep.subr.bf16.mxu0 0
      %745 = vmatpush1.bf16.msra.mxu0 0
      %746 = vmatprep.subr.bf16.mxu0 0
      %747 = vmatpush1.bf16.msra.mxu0 0
      %748 = vmatprep.subr.bf16.mxu0 0
      %749 = vmatpush1.bf16.msra.mxu0 0
      %750 = vmatprep.subr.bf16.mxu0 0
      %751 = vmatpush1.bf16.msra.mxu0 0
      %752 = vmatprep.subr.bf16.mxu0 0
      %753 = vmatpush1.bf16.msra.mxu0 0
      %754 = vmatprep.subr.bf16.mxu0 0
      %755 = vmatpush1.bf16.msra.mxu0 0
      %756 = vmatprep.mubr.bf16.mxu0 0
      %757 = vmatmul.mubr.bf16.gmra.mrb[0].mxu0 %v707
      %v758 = vpop.f32.mrb[0].mxu0
      %v759 = vadd.f32 0.0, %v758
      %v760 = vpop.f32.mrb[0].mxu0
      %v761 = vpop.f32.mrb[0].mxu0
      %v762 = vadd.f32 0.0, %v761
      %v763 = vpop.f32.mrb[0].mxu0
      %764 = vmatprep.mubr.bf16.mxu0 0
      %765 = vmatmul.mubr.bf16.gmra.mrb[0].mxu0 %v710
      %v766 = vpop.f32.mrb[0].mxu0
      %v767 = vadd.f32 0.0, %v766
      %v768 = vpop.f32.mrb[0].mxu0
      %v769 = vpop.f32.mrb[0].mxu0
      %v770 = vadd.f32 0.0, %v769
      %v771 = vpop.f32.mrb[0].mxu0
      %772 = vmatprep.mubr.bf16.mxu0 0
      %773 = vmatmul.mubr.bf16.gmra.mrb[0].mxu0 %v713
      %v774 = vpop.f32.mrb[0].mxu0
      %v775 = vadd.f32 0.0, %v774
      %v776 = vpop.f32.mrb[0].mxu0
      %v777 = vpop.f32.mrb[0].mxu0
      %v778 = vadd.f32 0.0, %v777
      %v779 = vpop.f32.mrb[0].mxu0
      %780 = vmatprep.mubr.bf16.mxu0 0
      %781 = vmatmul.mubr.bf16.gmra.mrb[0].mxu0 %v716
      %v782 = vpop.f32.mrb[0].mxu0
      %v783 = vadd.f32 0.0, %v782
      %v784 = vpop.f32.mrb[0].mxu0
      %v785 = vpop.f32.mrb[0].mxu0
      %v786 = vadd.f32 0.0, %v785
      %v787 = vpop.f32.mrb[0].mxu0
      %788 = vmatprep.mubr.bf16.mxu0 0
      %789 = vmatmul.mubr.bf16.gmra.mrb[0].mxu0 %v719
      %v790 = vpop.f32.mrb[0].mxu0
      %v791 = vadd.f32 0.0, %v790
      %v792 = vpop.f32.mrb[0].mxu0
      %v793 = vpop.f32.mrb[0].mxu0
      %v794 = vadd.f32 0.0, %v793
      %v795 = vpop.f32.mrb[0].mxu0
      %796 = vdwg.mxu0
      %v797 = vadd.f32 %v610, %v759
      %v798 = vadd.f32 %v611, %v762
      %v799 = vadd.f32 %v612, %v767
      %v800 = vadd.f32 %v613, %v770
      %v801 = vadd.f32 %v614, %v775
      %v802 = vadd.f32 %v615, %v778
      %v803 = vadd.f32 %v616, %v783
      %v804 = vadd.f32 %v617, %v786
      %v805 = vadd.f32 %v618, %v791
      %v806 = vadd.f32 %v619, %v794
      %807 = vst [vmem:[#allocation2] sm:$0xff] %v797
      %808 = vst [vmem:[#allocation2 + $0x8] sm:$0xff] %v798
      %809 = vst [vmem:[#allocation2 + $0x10] sm:$0xff] %v799
      %810 = vst [vmem:[#allocation2 + $0x18] sm:$0xff] %v800
      %811 = vst [vmem:[#allocation2 + $0x20] sm:$0xff] %v801
      %812 = vst [vmem:[#allocation2 + $0x28] sm:$0xff] %v802
      %813 = vst [vmem:[#allocation2 + $0x30] sm:$0xff] %v803
      %814 = vst [vmem:[#allocation2 + $0x38] sm:$0xff] %v804
      %815 = vst [vmem:[#allocation2 + $0x40] sm:$0xff] %v805
      %816 = vst [vmem:[#allocation2 + $0x48] sm:$0xff] %v806
      %v817 = vld [vmem:[#allocation2] sm:$0xff]
      %v818 = vld [vmem:[#allocation2 + $0x8] sm:$0xff]
      %v819 = vld [vmem:[#allocation2 + $0x10] sm:$0xff]
      %v820 = vld [vmem:[#allocation2 + $0x18] sm:$0xff]
      %v821 = vld [vmem:[#allocation2 + $0x20] sm:$0xff]
      %v822 = vld [vmem:[#allocation2 + $0x28] sm:$0xff]
      %v823 = vld [vmem:[#allocation2 + $0x30] sm:$0xff]
      %v824 = vld [vmem:[#allocation2 + $0x38] sm:$0xff]
      %v825 = vld [vmem:[#allocation2 + $0x40] sm:$0xff]
      %v826 = vld [vmem:[#allocation2 + $0x48] sm:$0xff]
      %v827 = vld [vmem:[%s288] sm:$0xe]
      %v828 = vld [vmem:[%s288 + $0x4] sm:$0xf]
      %v829 = vld [vmem:[%s288 + $0x8] sm:$0xf]
      %v830 = vld [vmem:[%s288 + $0xc] sm:$0xf]
      %v831 = vld [vmem:[%s288 + $0x10] sm:$0xf]
      %v832 = vld [vmem:[%s288 + $0x14] sm:$0xf]
      %v833 = vld [vmem:[%s288 + $0x18] sm:$0xf]
      %v834 = vld [vmem:[%s288 + $0x1c] sm:$0xf]
      %v835 = vld [vmem:[%s288 + $0x20] sm:$0xf]
      %v836 = vld [vmem:[%s288 + $0x24] sm:$0xf]
      %v837 = vld [vmem:[%s288 + $0x28] sm:$0x1]
      %s838 = scalar_lea.vmem %s292, 8
      %v839 = vld [vmem:[%s838] sm:$0xf]
      %v851 = vunpack.c.l.b16 %v827
      %v852 = vunpack.c.l.b16 %v828
      %v853 = vunpack.c.l.b16 %v829
      %v854 = vunpack.c.l.b16 %v830
      %v855 = vunpack.c.l.b16 %v831
      %v856 = vunpack.c.l.b16 %v832
      %v857 = vunpack.c.l.b16 %v833
      %v858 = vunpack.c.l.b16 %v834
      %v859 = vunpack.c.l.b16 %v835
      %v860 = vunpack.c.l.b16 %v836
      %v861 = vunpack.c.l.b16 %v837
      %v862 = vpack.c.b16 %v852, %v851
      %v863 = vpack.c.b16 %v854, %v853
      %v864 = vpack.c.b16 %v856, %v855
      %v865 = vpack.c.b16 %v858, %v857
      %v866 = vpack.c.b16 %v860, %v859
      %v867 = vpack.c.b16 %v861, %v861
      %vm868 = vcmask 1046528
      %v869 = vrot.slane %v862, 1
      %v870 = vrot.slane %v863, 1
      %v871 = vsel %vm868, %v869, %v870
      %v872 = vrot.slane %v864, 1
      %v873 = vsel %vm868, %v870, %v872
      %v874 = vrot.slane %v865, 1
      %v875 = vsel %vm868, %v872, %v874
      %v876 = vrot.slane %v866, 1
      %v877 = vsel %vm868, %v874, %v876
      %v878 = vrot.slane %v867, 1
      %v879 = vsel %vm868, %v876, %v878
      %v881 = vsel %vm350, %v871, 0
      %v884 = vsel %vm350, %v873, 0
      %v887 = vsel %vm350, %v875, 0
      %v890 = vsel %vm350, %v877, 0
      %v893 = vsel %vm350, %v879, 0
      %v896 = vsel %vm366, %v839, 0
      %898 = vmatprep.subr.bf16.mxu0 0
      %899 = vmatpush1.bf16.msra.mxu0 %v896
      %900 = vmatprep.subr.bf16.mxu0 0
      %901 = vmatpush1.bf16.msra.mxu0 0
      %902 = vmatprep.subr.bf16.mxu0 0
      %903 = vmatpush1.bf16.msra.mxu0 0
      %904 = vmatprep.subr.bf16.mxu0 0
      %905 = vmatpush1.bf16.msra.mxu0 0
      %906 = vmatprep.subr.bf16.mxu0 0
      %907 = vmatpush1.bf16.msra.mxu0 0
      %908 = vmatprep.subr.bf16.mxu0 0
      %909 = vmatpush1.bf16.msra.mxu0 0
      %910 = vmatprep.subr.bf16.mxu0 0
      %911 = vmatpush1.bf16.msra.mxu0 0
      %912 = vmatprep.subr.bf16.mxu0 0
      %913 = vmatpush1.bf16.msra.mxu0 0
      %914 = vmatprep.subr.bf16.mxu0 0
      %915 = vmatpush1.bf16.msra.mxu0 0
      %916 = vmatprep.subr.bf16.mxu0 0
      %917 = vmatpush1.bf16.msra.mxu0 0
      %918 = vmatprep.subr.bf16.mxu0 0
      %919 = vmatpush1.bf16.msra.mxu0 0
      %920 = vmatprep.subr.bf16.mxu0 0
      %921 = vmatpush1.bf16.msra.mxu0 0
      %922 = vmatprep.subr.bf16.mxu0 0
      %923 = vmatpush1.bf16.msra.mxu0 0
      %924 = vmatprep.subr.bf16.mxu0 0
      %925 = vmatpush1.bf16.msra.mxu0 0
      %926 = vmatprep.subr.bf16.mxu0 0
      %927 = vmatpush1.bf16.msra.mxu0 0
      %928 = vmatprep.subr.bf16.mxu0 0
      %929 = vmatpush1.bf16.msra.mxu0 0
      %930 = vmatprep.mubr.bf16.mxu0 0
      %931 = vmatmul.mubr.bf16.gmra.mrb[0].mxu0 %v881
      %v932 = vpop.f32.mrb[0].mxu0
      %v933 = vadd.f32 0.0, %v932
      %v934 = vpop.f32.mrb[0].mxu0
      %v935 = vpop.f32.mrb[0].mxu0
      %v936 = vadd.f32 0.0, %v935
      %v937 = vpop.f32.mrb[0].mxu0
      %938 = vmatprep.mubr.bf16.mxu0 0
      %939 = vmatmul.mubr.bf16.gmra.mrb[0].mxu0 %v884
      %v940 = vpop.f32.mrb[0].mxu0
      %v941 = vadd.f32 0.0, %v940
      %v942 = vpop.f32.mrb[0].mxu0
      %v943 = vpop.f32.mrb[0].mxu0
      %v944 = vadd.f32 0.0, %v943
      %v945 = vpop.f32.mrb[0].mxu0
      %946 = vmatprep.mubr.bf16.mxu0 0
      %947 = vmatmul.mubr.bf16.gmra.mrb[0].mxu0 %v887
      %v948 = vpop.f32.mrb[0].mxu0
      %v949 = vadd.f32 0.0, %v948
      %v950 = vpop.f32.mrb[0].mxu0
      %v951 = vpop.f32.mrb[0].mxu0
      %v952 = vadd.f32 0.0, %v951
      %v953 = vpop.f32.mrb[0].mxu0
      %954 = vmatprep.mubr.bf16.mxu0 0
      %955 = vmatmul.mubr.bf16.gmra.mrb[0].mxu0 %v890
      %v956 = vpop.f32.mrb[0].mxu0
      %v957 = vadd.f32 0.0, %v956
      %v958 = vpop.f32.mrb[0].mxu0
      %v959 = vpop.f32.mrb[0].mxu0
      %v960 = vadd.f32 0.0, %v959
      %v961 = vpop.f32.mrb[0].mxu0
      %962 = vmatprep.mubr.bf16.mxu0 0
      %963 = vmatmul.mubr.bf16.gmra.mrb[0].mxu0 %v893
      %v964 = vpop.f32.mrb[0].mxu0
      %v965 = vadd.f32 0.0, %v964
      %v966 = vpop.f32.mrb[0].mxu0
      %v967 = vpop.f32.mrb[0].mxu0
      %v968 = vadd.f32 0.0, %v967
      %v969 = vpop.f32.mrb[0].mxu0
      %970 = vdwg.mxu0
      %v971 = vadd.f32 %v817, %v933
      %v972 = vadd.f32 %v818, %v936
      %v973 = vadd.f32 %v819, %v941
      %v974 = vadd.f32 %v820, %v944
      %v975 = vadd.f32 %v821, %v949
      %v976 = vadd.f32 %v822, %v952
      %v977 = vadd.f32 %v823, %v957
      %v978 = vadd.f32 %v824, %v960
      %v979 = vadd.f32 %v825, %v965
      %v980 = vadd.f32 %v826, %v968
      %981 = vst [vmem:[#allocation2] sm:$0xff] %v971
      %982 = vst [vmem:[#allocation2 + $0x8] sm:$0xff] %v972
      %983 = vst [vmem:[#allocation2 + $0x10] sm:$0xff] %v973
      %984 = vst [vmem:[#allocation2 + $0x18] sm:$0xff] %v974
      %985 = vst [vmem:[#allocation2 + $0x20] sm:$0xff] %v975
      %986 = vst [vmem:[#allocation2 + $0x28] sm:$0xff] %v976
      %987 = vst [vmem:[#allocation2 + $0x30] sm:$0xff] %v977
      %988 = vst [vmem:[#allocation2 + $0x38] sm:$0xff] %v978
      %989 = vst [vmem:[#allocation2 + $0x40] sm:$0xff] %v979
      %990 = vst [vmem:[#allocation2 + $0x48] sm:$0xff] %v980
      %v991 = vld [vmem:[#allocation2] sm:$0xff]
      %v992 = vld [vmem:[#allocation2 + $0x8] sm:$0xff]
      %v993 = vld [vmem:[#allocation2 + $0x10] sm:$0xff]
      %v994 = vld [vmem:[#allocation2 + $0x18] sm:$0xff]
      %v995 = vld [vmem:[#allocation2 + $0x20] sm:$0xff]
      %v996 = vld [vmem:[#allocation2 + $0x28] sm:$0xff]
      %v997 = vld [vmem:[#allocation2 + $0x30] sm:$0xff]
      %v998 = vld [vmem:[#allocation2 + $0x38] sm:$0xff]
      %v999 = vld [vmem:[#allocation2 + $0x40] sm:$0xff]
      %v1000 = vld [vmem:[#allocation2 + $0x48] sm:$0xff]
      %v1001 = vld [vmem:[%s288 + $0x4] sm:$0xe]
      %v1002 = vld [vmem:[%s288 + $0x8] sm:$0xf]
      %v1003 = vld [vmem:[%s288 + $0xc] sm:$0xf]
      %v1004 = vld [vmem:[%s288 + $0x10] sm:$0xf]
      %v1005 = vld [vmem:[%s288 + $0x14] sm:$0xf]
      %v1006 = vld [vmem:[%s288 + $0x18] sm:$0xf]
      %v1007 = vld [vmem:[%s288 + $0x1c] sm:$0xf]
      %v1008 = vld [vmem:[%s288 + $0x20] sm:$0xf]
      %v1009 = vld [vmem:[%s288 + $0x24] sm:$0xf]
      %v1010 = vld [vmem:[%s288 + $0x28] sm:$0xf]
      %v1011 = vld [vmem:[%s288 + $0x2c] sm:$0x1]
      %s1012 = scalar_lea.vmem %s292, 12
      %v1013 = vld [vmem:[%s1012] sm:$0xf]
      %v1025 = vunpack.c.l.b16 %v1001
      %v1026 = vunpack.c.l.b16 %v1002
      %v1027 = vunpack.c.l.b16 %v1003
      %v1028 = vunpack.c.l.b16 %v1004
      %v1029 = vunpack.c.l.b16 %v1005
      %v1030 = vunpack.c.l.b16 %v1006
      %v1031 = vunpack.c.l.b16 %v1007
      %v1032 = vunpack.c.l.b16 %v1008
      %v1033 = vunpack.c.l.b16 %v1009
      %v1034 = vunpack.c.l.b16 %v1010
      %v1035 = vunpack.c.l.b16 %v1011
      %v1036 = vpack.c.b16 %v1026, %v1025
      %v1037 = vpack.c.b16 %v1028, %v1027
      %v1038 = vpack.c.b16 %v1030, %v1029
      %v1039 = vpack.c.b16 %v1032, %v1031
      %v1040 = vpack.c.b16 %v1034, %v1033
      %v1041 = vpack.c.b16 %v1035, %v1035
      %v1042 = vrot.slane %v1036, 1
      %v1043 = vrot.slane %v1037, 1
      %v1044 = vsel %vm868, %v1042, %v1043
      %v1045 = vrot.slane %v1038, 1
      %v1046 = vsel %vm868, %v1043, %v1045
      %v1047 = vrot.slane %v1039, 1
      %v1048 = vsel %vm868, %v1045, %v1047
      %v1049 = vrot.slane %v1040, 1
      %v1050 = vsel %vm868, %v1047, %v1049
      %v1051 = vrot.slane %v1041, 1
      %v1052 = vsel %vm868, %v1049, %v1051
      %v1054 = vsel %vm350, %v1044, 0
      %v1057 = vsel %vm350, %v1046, 0
      %v1060 = vsel %vm350, %v1048, 0
      %v1063 = vsel %vm350, %v1050, 0
      %v1066 = vsel %vm350, %v1052, 0
      %v1069 = vsel %vm366, %v1013, 0
      %1071 = vmatprep.subr.bf16.mxu0 0
      %1072 = vmatpush1.bf16.msra.mxu0 %v1069
      %1073 = vmatprep.subr.bf16.mxu0 0
      %1074 = vmatpush1.bf16.msra.mxu0 0
      %1075 = vmatprep.subr.bf16.mxu0 0
      %1076 = vmatpush1.bf16.msra.mxu0 0
      %1077 = vmatprep.subr.bf16.mxu0 0
      %1078 = vmatpush1.bf16.msra.mxu0 0
      %1079 = vmatprep.subr.bf16.mxu0 0
      %1080 = vmatpush1.bf16.msra.mxu0 0
      %1081 = vmatprep.subr.bf16.mxu0 0
      %1082 = vmatpush1.bf16.msra.mxu0 0
      %1083 = vmatprep.subr.bf16.mxu0 0
      %1084 = vmatpush1.bf16.msra.mxu0 0
      %1085 = vmatprep.subr.bf16.mxu0 0
      %1086 = vmatpush1.bf16.msra.mxu0 0
      %1087 = vmatprep.subr.bf16.mxu0 0
      %1088 = vmatpush1.bf16.msra.mxu0 0
      %1089 = vmatprep.subr.bf16.mxu0 0
      %1090 = vmatpush1.bf16.msra.mxu0 0
      %1091 = vmatprep.subr.bf16.mxu0 0
      %1092 = vmatpush1.bf16.msra.mxu0 0
      %1093 = vmatprep.subr.bf16.mxu0 0
      %1094 = vmatpush1.bf16.msra.mxu0 0
      %1095 = vmatprep.subr.bf16.mxu0 0
      %1096 = vmatpush1.bf16.msra.mxu0 0
      %1097 = vmatprep.subr.bf16.mxu0 0
      %1098 = vmatpush1.bf16.msra.mxu0 0
      %1099 = vmatprep.subr.bf16.mxu0 0
      %1100 = vmatpush1.bf16.msra.mxu0 0
      %1101 = vmatprep.subr.bf16.mxu0 0
      %1102 = vmatpush1.bf16.msra.mxu0 0
      %1103 = vmatprep.mubr.bf16.mxu0 0
      %1104 = vmatmul.mubr.bf16.gmra.mrb[0].mxu0 %v1054
      %v1105 = vpop.f32.mrb[0].mxu0
      %v1106 = vadd.f32 0.0, %v1105
      %v1107 = vpop.f32.mrb[0].mxu0
      %v1108 = vpop.f32.mrb[0].mxu0
      %v1109 = vadd.f32 0.0, %v1108
      %v1110 = vpop.f32.mrb[0].mxu0
      %1111 = vmatprep.mubr.bf16.mxu0 0
      %1112 = vmatmul.mubr.bf16.gmra.mrb[0].mxu0 %v1057
      %v1113 = vpop.f32.mrb[0].mxu0
      %v1114 = vadd.f32 0.0, %v1113
      %v1115 = vpop.f32.mrb[0].mxu0
      %v1116 = vpop.f32.mrb[0].mxu0
      %v1117 = vadd.f32 0.0, %v1116
      %v1118 = vpop.f32.mrb[0].mxu0
      %1119 = vmatprep.mubr.bf16.mxu0 0
      %1120 = vmatmul.mubr.bf16.gmra.mrb[0].mxu0 %v1060
      %v1121 = vpop.f32.mrb[0].mxu0
      %v1122 = vadd.f32 0.0, %v1121
      %v1123 = vpop.f32.mrb[0].mxu0
      %v1124 = vpop.f32.mrb[0].mxu0
      %v1125 = vadd.f32 0.0, %v1124
      %v1126 = vpop.f32.mrb[0].mxu0
      %1127 = vmatprep.mubr.bf16.mxu0 0
      %1128 = vmatmul.mubr.bf16.gmra.mrb[0].mxu0 %v1063
      %v1129 = vpop.f32.mrb[0].mxu0
      %v1130 = vadd.f32 0.0, %v1129
      %v1131 = vpop.f32.mrb[0].mxu0
      %v1132 = vpop.f32.mrb[0].mxu0
      %v1133 = vadd.f32 0.0, %v1132
      %v1134 = vpop.f32.mrb[0].mxu0
      %1135 = vmatprep.mubr.bf16.mxu0 0
      %1136 = vmatmul.mubr.bf16.gmra.mrb[0].mxu0 %v1066
      %v1137 = vpop.f32.mrb[0].mxu0
      %v1138 = vadd.f32 0.0, %v1137
      %v1139 = vpop.f32.mrb[0].mxu0
      %v1140 = vpop.f32.mrb[0].mxu0
      %v1141 = vadd.f32 0.0, %v1140
      %v1142 = vpop.f32.mrb[0].mxu0
      %1143 = vdwg.mxu0
      %v1144 = vadd.f32 %v991, %v1106
      %v1145 = vadd.f32 %v992, %v1109
      %v1146 = vadd.f32 %v993, %v1114
      %v1147 = vadd.f32 %v994, %v1117
      %v1148 = vadd.f32 %v995, %v1122
      %v1149 = vadd.f32 %v996, %v1125
      %v1150 = vadd.f32 %v997, %v1130
      %v1151 = vadd.f32 %v998, %v1133
      %v1152 = vadd.f32 %v999, %v1138
      %v1153 = vadd.f32 %v1000, %v1141
      %1154 = vst [vmem:[#allocation2] sm:$0xff] %v1144
      %1155 = vst [vmem:[#allocation2 + $0x8] sm:$0xff] %v1145
      %1156 = vst [vmem:[#allocation2 + $0x10] sm:$0xff] %v1146
      %1157 = vst [vmem:[#allocation2 + $0x18] sm:$0xff] %v1147
      %1158 = vst [vmem:[#allocation2 + $0x20] sm:$0xff] %v1148
      %1159 = vst [vmem:[#allocation2 + $0x28] sm:$0xff] %v1149
      %1160 = vst [vmem:[#allocation2 + $0x30] sm:$0xff] %v1150
      %1161 = vst [vmem:[#allocation2 + $0x38] sm:$0xff] %v1151
      %1162 = vst [vmem:[#allocation2 + $0x40] sm:$0xff] %v1152
      %1163 = vst [vmem:[#allocation2 + $0x48] sm:$0xff] %v1153
      %v1164 = vld [vmem:[#allocation2] sm:$0xff]
      %v1165 = vld [vmem:[#allocation2 + $0x8] sm:$0xff]
      %v1166 = vld [vmem:[#allocation2 + $0x10] sm:$0xff]
      %v1167 = vld [vmem:[#allocation2 + $0x18] sm:$0xff]
      %v1168 = vld [vmem:[#allocation2 + $0x20] sm:$0xff]
      %v1169 = vld [vmem:[#allocation2 + $0x28] sm:$0xff]
      %v1170 = vld [vmem:[#allocation2 + $0x30] sm:$0xff]
      %v1171 = vld [vmem:[#allocation2 + $0x38] sm:$0xff]
      %v1172 = vld [vmem:[#allocation2 + $0x40] sm:$0xff]
      %v1173 = vld [vmem:[#allocation2 + $0x48] sm:$0xff]
      %v1174 = vld [vmem:[%s288 + $0x4] sm:$0xe]
      %v1175 = vld [vmem:[%s288 + $0x8] sm:$0xf]
      %v1176 = vld [vmem:[%s288 + $0xc] sm:$0xf]
      %v1177 = vld [vmem:[%s288 + $0x10] sm:$0xf]
      %v1178 = vld [vmem:[%s288 + $0x14] sm:$0xf]
      %v1179 = vld [vmem:[%s288 + $0x18] sm:$0xf]
      %v1180 = vld [vmem:[%s288 + $0x1c] sm:$0xf]
      %v1181 = vld [vmem:[%s288 + $0x20] sm:$0xf]
      %v1182 = vld [vmem:[%s288 + $0x24] sm:$0xf]
      %v1183 = vld [vmem:[%s288 + $0x28] sm:$0xf]
      %v1184 = vld [vmem:[%s288 + $0x2c] sm:$0x3]
      %s1185 = scalar_lea.vmem %s292, 16
      %v1186 = vld [vmem:[%s1185] sm:$0xf]
      %v1198 = vunpack.c.l.b16 %v1174
      %v1199 = vunpack.c.l.b16 %v1175
      %v1200 = vunpack.c.l.b16 %v1176
      %v1201 = vunpack.c.l.b16 %v1177
      %v1202 = vunpack.c.l.b16 %v1178
      %v1203 = vunpack.c.l.b16 %v1179
      %v1204 = vunpack.c.l.b16 %v1180
      %v1205 = vunpack.c.l.b16 %v1181
      %v1206 = vunpack.c.l.b16 %v1182
      %v1207 = vunpack.c.l.b16 %v1183
      %v1208 = vunpack.c.l.b16 %v1184
      %v1209 = vpack.c.b16 %v1199, %v1198
      %v1210 = vpack.c.b16 %v1201, %v1200
      %v1211 = vpack.c.b16 %v1203, %v1202
      %v1212 = vpack.c.b16 %v1205, %v1204
      %v1213 = vpack.c.b16 %v1207, %v1206
      %v1214 = vpack.c.b16 %v1208, %v1208
      %vm1215 = vsmask.f32 6400
      %v1217 = vshrl.u32 %v1209, 16
      %v1219 = vrot.slane %v1217, 1
      %v1220 = vshll.u32 %v1209, 16
      %v1222 = vrot.slane %v1220, 2
      %v1223 = vor.u32 %v1219, %v1222
      %v1225 = vshrl.u32 %v1210, 16
      %v1227 = vrot.slane %v1225, 1
      %v1228 = vshll.u32 %v1210, 16
      %v1230 = vrot.slane %v1228, 2
      %v1231 = vor.u32 %v1227, %v1230
      %v1232 = vsel %vm1215, %v1223, %v1231
      %v1234 = vshrl.u32 %v1211, 16
      %v1236 = vrot.slane %v1234, 1
      %v1237 = vshll.u32 %v1211, 16
      %v1239 = vrot.slane %v1237, 2
      %v1240 = vor.u32 %v1236, %v1239
      %v1241 = vsel %vm1215, %v1231, %v1240
      %v1243 = vshrl.u32 %v1212, 16
      %v1245 = vrot.slane %v1243, 1
      %v1246 = vshll.u32 %v1212, 16
      %v1248 = vrot.slane %v1246, 2
      %v1249 = vor.u32 %v1245, %v1248
      %v1250 = vsel %vm1215, %v1240, %v1249
      %v1252 = vshrl.u32 %v1213, 16
      %v1254 = vrot.slane %v1252, 1
      %v1255 = vshll.u32 %v1213, 16
      %v1257 = vrot.slane %v1255, 2
      %v1258 = vor.u32 %v1254, %v1257
      %v1259 = vsel %vm1215, %v1249, %v1258
      %v1261 = vshrl.u32 %v1214, 16
      %v1263 = vrot.slane %v1261, 1
      %v1264 = vshll.u32 %v1214, 16
      %v1266 = vrot.slane %v1264, 2
      %v1267 = vor.u32 %v1263, %v1266
      %v1268 = vsel %vm1215, %v1258, %v1267
      %v1270 = vsel %vm350, %v1232, 0
      %v1273 = vsel %vm350, %v1241, 0
      %v1276 = vsel %vm350, %v1250, 0
      %v1279 = vsel %vm350, %v1259, 0
      %v1282 = vsel %vm350, %v1268, 0
      %v1285 = vsel %vm366, %v1186, 0
      %1287 = vmatprep.subr.bf16.mxu0 0
      %1288 = vmatpush1.bf16.msra.mxu0 %v1285
      %1289 = vmatprep.subr.bf16.mxu0 0
      %1290 = vmatpush1.bf16.msra.mxu0 0
      %1291 = vmatprep.subr.bf16.mxu0 0
      %1292 = vmatpush1.bf16.msra.mxu0 0
      %1293 = vmatprep.subr.bf16.mxu0 0
      %1294 = vmatpush1.bf16.msra.mxu0 0
      %1295 = vmatprep.subr.bf16.mxu0 0
      %1296 = vmatpush1.bf16.msra.mxu0 0
      %1297 = vmatprep.subr.bf16.mxu0 0
      %1298 = vmatpush1.bf16.msra.mxu0 0
      %1299 = vmatprep.subr.bf16.mxu0 0
      %1300 = vmatpush1.bf16.msra.mxu0 0
      %1301 = vmatprep.subr.bf16.mxu0 0
      %1302 = vmatpush1.bf16.msra.mxu0 0
      %1303 = vmatprep.subr.bf16.mxu0 0
      %1304 = vmatpush1.bf16.msra.mxu0 0
      %1305 = vmatprep.subr.bf16.mxu0 0
      %1306 = vmatpush1.bf16.msra.mxu0 0
      %1307 = vmatprep.subr.bf16.mxu0 0
      %1308 = vmatpush1.bf16.msra.mxu0 0
      %1309 = vmatprep.subr.bf16.mxu0 0
      %1310 = vmatpush1.bf16.msra.mxu0 0
      %1311 = vmatprep.subr.bf16.mxu0 0
      %1312 = vmatpush1.bf16.msra.mxu0 0
      %1313 = vmatprep.subr.bf16.mxu0 0
      %1314 = vmatpush1.bf16.msra.mxu0 0
      %1315 = vmatprep.subr.bf16.mxu0 0
      %1316 = vmatpush1.bf16.msra.mxu0 0
      %1317 = vmatprep.subr.bf16.mxu0 0
      %1318 = vmatpush1.bf16.msra.mxu0 0
      %1319 = vmatprep.mubr.bf16.mxu0 0
      %1320 = vmatmul.mubr.bf16.gmra.mrb[0].mxu0 %v1270
      %v1321 = vpop.f32.mrb[0].mxu0
      %v1322 = vadd.f32 0.0, %v1321
      %v1323 = vpop.f32.mrb[0].mxu0
      %v1324 = vpop.f32.mrb[0].mxu0
      %v1325 = vadd.f32 0.0, %v1324
      %v1326 = vpop.f32.mrb[0].mxu0
      %1327 = vmatprep.mubr.bf16.mxu0 0
      %1328 = vmatmul.mubr.bf16.gmra.mrb[0].mxu0 %v1273
      %v1329 = vpop.f32.mrb[0].mxu0
      %v1330 = vadd.f32 0.0, %v1329
      %v1331 = vpop.f32.mrb[0].mxu0
      %v1332 = vpop.f32.mrb[0].mxu0
      %v1333 = vadd.f32 0.0, %v1332
      %v1334 = vpop.f32.mrb[0].mxu0
      %1335 = vmatprep.mubr.bf16.mxu0 0
      %1336 = vmatmul.mubr.bf16.gmra.mrb[0].mxu0 %v1276
      %v1337 = vpop.f32.mrb[0].mxu0
      %v1338 = vadd.f32 0.0, %v1337
      %v1339 = vpop.f32.mrb[0].mxu0
      %v1340 = vpop.f32.mrb[0].mxu0
      %v1341 = vadd.f32 0.0, %v1340
      %v1342 = vpop.f32.mrb[0].mxu0
      %1343 = vmatprep.mubr.bf16.mxu0 0
      %1344 = vmatmul.mubr.bf16.gmra.mrb[0].mxu0 %v1279
      %v1345 = vpop.f32.mrb[0].mxu0
      %v1346 = vadd.f32 0.0, %v1345
      %v1347 = vpop.f32.mrb[0].mxu0
      %v1348 = vpop.f32.mrb[0].mxu0
      %v1349 = vadd.f32 0.0, %v1348
      %v1350 = vpop.f32.mrb[0].mxu0
      %1351 = vmatprep.mubr.bf16.mxu0 0
      %1352 = vmatmul.mubr.bf16.gmra.mrb[0].mxu0 %v1282
      %v1353 = vpop.f32.mrb[0].mxu0
      %v1354 = vadd.f32 0.0, %v1353
      %v1355 = vpop.f32.mrb[0].mxu0
      %v1356 = vpop.f32.mrb[0].mxu0
      %v1357 = vadd.f32 0.0, %v1356
      %v1358 = vpop.f32.mrb[0].mxu0
      %1359 = vdwg.mxu0
      %v1360 = vadd.f32 %v1164, %v1322
      %v1361 = vadd.f32 %v1165, %v1325
      %v1362 = vadd.f32 %v1166, %v1330
      %v1363 = vadd.f32 %v1167, %v1333
      %v1364 = vadd.f32 %v1168, %v1338
      %v1365 = vadd.f32 %v1169, %v1341
      %v1366 = vadd.f32 %v1170, %v1346
      %v1367 = vadd.f32 %v1171, %v1349
      %v1368 = vadd.f32 %v1172, %v1354
      %v1369 = vadd.f32 %v1173, %v1357
      %1370 = vst [vmem:[#allocation2] sm:$0xff] %v1360
      %1371 = vst [vmem:[#allocation2 + $0x8] sm:$0xff] %v1361
      %1372 = vst [vmem:[#allocation2 + $0x10] sm:$0xff] %v1362
      %1373 = vst [vmem:[#allocation2 + $0x18] sm:$0xff] %v1363
      %1374 = vst [vmem:[#allocation2 + $0x20] sm:$0xff] %v1364
      %1375 = vst [vmem:[#allocation2 + $0x28] sm:$0xff] %v1365
      %1376 = vst [vmem:[#allocation2 + $0x30] sm:$0xff] %v1366
      %1377 = vst [vmem:[#allocation2 + $0x38] sm:$0xff] %v1367
      %1378 = vst [vmem:[#allocation2 + $0x40] sm:$0xff] %v1368
      %1379 = vst [vmem:[#allocation2 + $0x48] sm:$0xff] %v1369
      %v1380 = vld [vmem:[#allocation2] sm:$0xff]
      %v1381 = vld [vmem:[#allocation2 + $0x8] sm:$0xff]
      %v1382 = vld [vmem:[#allocation2 + $0x10] sm:$0xff]
      %v1383 = vld [vmem:[#allocation2 + $0x18] sm:$0xff]
      %v1384 = vld [vmem:[#allocation2 + $0x20] sm:$0xff]
      %v1385 = vld [vmem:[#allocation2 + $0x28] sm:$0xff]
      %v1386 = vld [vmem:[#allocation2 + $0x30] sm:$0xff]
      %v1387 = vld [vmem:[#allocation2 + $0x38] sm:$0xff]
      %v1388 = vld [vmem:[#allocation2 + $0x40] sm:$0xff]
      %v1389 = vld [vmem:[#allocation2 + $0x48] sm:$0xff]
      %v1390 = vld [vmem:[%s288 + $0x4] sm:$0xc]
      %v1391 = vld [vmem:[%s288 + $0x8] sm:$0xf]
      %v1392 = vld [vmem:[%s288 + $0xc] sm:$0xf]
      %v1393 = vld [vmem:[%s288 + $0x10] sm:$0xf]
      %v1394 = vld [vmem:[%s288 + $0x14] sm:$0xf]
      %v1395 = vld [vmem:[%s288 + $0x18] sm:$0xf]
      %v1396 = vld [vmem:[%s288 + $0x1c] sm:$0xf]
      %v1397 = vld [vmem:[%s288 + $0x20] sm:$0xf]
      %v1398 = vld [vmem:[%s288 + $0x24] sm:$0xf]
      %v1399 = vld [vmem:[%s288 + $0x28] sm:$0xf]
      %v1400 = vld [vmem:[%s288 + $0x2c] sm:$0x3]
      %s1401 = scalar_lea.vmem %s292, 20
      %v1402 = vld [vmem:[%s1401] sm:$0xf]
      %v1414 = vunpack.c.l.b16 %v1390
      %v1415 = vunpack.c.l.b16 %v1391
      %v1416 = vunpack.c.l.b16 %v1392
      %v1417 = vunpack.c.l.b16 %v1393
      %v1418 = vunpack.c.l.b16 %v1394
      %v1419 = vunpack.c.l.b16 %v1395
      %v1420 = vunpack.c.l.b16 %v1396
      %v1421 = vunpack.c.l.b16 %v1397
      %v1422 = vunpack.c.l.b16 %v1398
      %v1423 = vunpack.c.l.b16 %v1399
      %v1424 = vunpack.c.l.b16 %v1400
      %v1425 = vpack.c.b16 %v1415, %v1414
      %v1426 = vpack.c.b16 %v1417, %v1416
      %v1427 = vpack.c.b16 %v1419, %v1418
      %v1428 = vpack.c.b16 %v1421, %v1420
      %v1429 = vpack.c.b16 %v1423, %v1422
      %v1430 = vpack.c.b16 %v1424, %v1424
      %vm1431 = vcmask 1045504
      %v1432 = vrot.slane %v1425, 2
      %v1433 = vrot.slane %v1426, 2
      %v1434 = vsel %vm1431, %v1432, %v1433
      %v1435 = vrot.slane %v1427, 2
      %v1436 = vsel %vm1431, %v1433, %v1435
      %v1437 = vrot.slane %v1428, 2
      %v1438 = vsel %vm1431, %v1435, %v1437
      %v1439 = vrot.slane %v1429, 2
      %v1440 = vsel %vm1431, %v1437, %v1439
      %v1441 = vrot.slane %v1430, 2
      %v1442 = vsel %vm1431, %v1439, %v1441
      %v1444 = vsel %vm350, %v1434, 0
      %v1447 = vsel %vm350, %v1436, 0
      %v1450 = vsel %vm350, %v1438, 0
      %v1453 = vsel %vm350, %v1440, 0
      %v1456 = vsel %vm350, %v1442, 0
      %v1459 = vsel %vm366, %v1402, 0
      %1461 = vmatprep.subr.bf16.mxu0 0
      %1462 = vmatpush1.bf16.msra.mxu0 %v1459
      %1463 = vmatprep.subr.bf16.mxu0 0
      %1464 = vmatpush1.bf16.msra.mxu0 0
      %1465 = vmatprep.subr.bf16.mxu0 0
      %1466 = vmatpush1.bf16.msra.mxu0 0
      %1467 = vmatprep.subr.bf16.mxu0 0
      %1468 = vmatpush1.bf16.msra.mxu0 0
      %1469 = vmatprep.subr.bf16.mxu0 0
      %1470 = vmatpush1.bf16.msra.mxu0 0
      %1471 = vmatprep.subr.bf16.mxu0 0
      %1472 = vmatpush1.bf16.msra.mxu0 0
      %1473 = vmatprep.subr.bf16.mxu0 0
      %1474 = vmatpush1.bf16.msra.mxu0 0
      %1475 = vmatprep.subr.bf16.mxu0 0
      %1476 = vmatpush1.bf16.msra.mxu0 0
      %1477 = vmatprep.subr.bf16.mxu0 0
      %1478 = vmatpush1.bf16.msra.mxu0 0
      %1479 = vmatprep.subr.bf16.mxu0 0
      %1480 = vmatpush1.bf16.msra.mxu0 0
      %1481 = vmatprep.subr.bf16.mxu0 0
      %1482 = vmatpush1.bf16.msra.mxu0 0
      %1483 = vmatprep.subr.bf16.mxu0 0
      %1484 = vmatpush1.bf16.msra.mxu0 0
      %1485 = vmatprep.subr.bf16.mxu0 0
      %1486 = vmatpush1.bf16.msra.mxu0 0
      %1487 = vmatprep.subr.bf16.mxu0 0
      %1488 = vmatpush1.bf16.msra.mxu0 0
      %1489 = vmatprep.subr.bf16.mxu0 0
      %1490 = vmatpush1.bf16.msra.mxu0 0
      %1491 = vmatprep.subr.bf16.mxu0 0
      %1492 = vmatpush1.bf16.msra.mxu0 0
      %1493 = vmatprep.mubr.bf16.mxu0 0
      %1494 = vmatmul.mubr.bf16.gmra.mrb[0].mxu0 %v1444
      %v1495 = vpop.f32.mrb[0].mxu0
      %v1496 = vadd.f32 0.0, %v1495
      %v1497 = vpop.f32.mrb[0].mxu0
      %v1498 = vpop.f32.mrb[0].mxu0
      %v1499 = vadd.f32 0.0, %v1498
      %v1500 = vpop.f32.mrb[0].mxu0
      %1501 = vmatprep.mubr.bf16.mxu0 0
      %1502 = vmatmul.mubr.bf16.gmra.mrb[0].mxu0 %v1447
      %v1503 = vpop.f32.mrb[0].mxu0
      %v1504 = vadd.f32 0.0, %v1503
      %v1505 = vpop.f32.mrb[0].mxu0
      %v1506 = vpop.f32.mrb[0].mxu0
      %v1507 = vadd.f32 0.0, %v1506
      %v1508 = vpop.f32.mrb[0].mxu0
      %1509 = vmatprep.mubr.bf16.mxu0 0
      %1510 = vmatmul.mubr.bf16.gmra.mrb[0].mxu0 %v1450
      %v1511 = vpop.f32.mrb[0].mxu0
      %v1512 = vadd.f32 0.0, %v1511
      %v1513 = vpop.f32.mrb[0].mxu0
      %v1514 = vpop.f32.mrb[0].mxu0
      %v1515 = vadd.f32 0.0, %v1514
      %v1516 = vpop.f32.mrb[0].mxu0
      %1517 = vmatprep.mubr.bf16.mxu0 0
      %1518 = vmatmul.mubr.bf16.gmra.mrb[0].mxu0 %v1453
      %v1519 = vpop.f32.mrb[0].mxu0
      %v1520 = vadd.f32 0.0, %v1519
      %v1521 = vpop.f32.mrb[0].mxu0
      %v1522 = vpop.f32.mrb[0].mxu0
      %v1523 = vadd.f32 0.0, %v1522
      %v1524 = vpop.f32.mrb[0].mxu0
      %1525 = vmatprep.mubr.bf16.mxu0 0
      %1526 = vmatmul.mubr.bf16.gmra.mrb[0].mxu0 %v1456
      %v1527 = vpop.f32.mrb[0].mxu0
      %v1528 = vadd.f32 0.0, %v1527
      %v1529 = vpop.f32.mrb[0].mxu0
      %v1530 = vpop.f32.mrb[0].mxu0
      %v1531 = vadd.f32 0.0, %v1530
      %v1532 = vpop.f32.mrb[0].mxu0
      %1533 = vdwg.mxu0
      %v1534 = vadd.f32 %v1380, %v1496
      %v1535 = vadd.f32 %v1381, %v1499
      %v1536 = vadd.f32 %v1382, %v1504
      %v1537 = vadd.f32 %v1383, %v1507
      %v1538 = vadd.f32 %v1384, %v1512
      %v1539 = vadd.f32 %v1385, %v1515
      %v1540 = vadd.f32 %v1386, %v1520
      %v1541 = vadd.f32 %v1387, %v1523
      %v1542 = vadd.f32 %v1388, %v1528
      %v1543 = vadd.f32 %v1389, %v1531
      %1544 = vst [vmem:[#allocation2] sm:$0xff] %v1534
      %1545 = vst [vmem:[#allocation2 + $0x8] sm:$0xff] %v1535
      %1546 = vst [vmem:[#allocation2 + $0x10] sm:$0xff] %v1536
      %1547 = vst [vmem:[#allocation2 + $0x18] sm:$0xff] %v1537
      %1548 = vst [vmem:[#allocation2 + $0x20] sm:$0xff] %v1538
      %1549 = vst [vmem:[#allocation2 + $0x28] sm:$0xff] %v1539
      %1550 = vst [vmem:[#allocation2 + $0x30] sm:$0xff] %v1540
      %1551 = vst [vmem:[#allocation2 + $0x38] sm:$0xff] %v1541
      %1552 = vst [vmem:[#allocation2 + $0x40] sm:$0xff] %v1542
      %1553 = vst [vmem:[#allocation2 + $0x48] sm:$0xff] %v1543
      %v1554 = vld [vmem:[#allocation2] sm:$0xff]
      %v1555 = vld [vmem:[#allocation2 + $0x8] sm:$0xff]
      %v1556 = vld [vmem:[#allocation2 + $0x10] sm:$0xff]
      %v1557 = vld [vmem:[#allocation2 + $0x18] sm:$0xff]
      %v1558 = vld [vmem:[#allocation2 + $0x20] sm:$0xff]
      %v1559 = vld [vmem:[#allocation2 + $0x28] sm:$0xff]
      %v1560 = vld [vmem:[#allocation2 + $0x30] sm:$0xff]
      %v1561 = vld [vmem:[#allocation2 + $0x38] sm:$0xff]
      %v1562 = vld [vmem:[#allocation2 + $0x40] sm:$0xff]
      %v1563 = vld [vmem:[#allocation2 + $0x48] sm:$0xff]
      %v1564 = vld [vmem:[%s288 + $0x8] sm:$0xc]
      %v1565 = vld [vmem:[%s288 + $0xc] sm:$0xf]
      %v1566 = vld [vmem:[%s288 + $0x10] sm:$0xf]
      %v1567 = vld [vmem:[%s288 + $0x14] sm:$0xf]
      %v1568 = vld [vmem:[%s288 + $0x18] sm:$0xf]
      %v1569 = vld [vmem:[%s288 + $0x1c] sm:$0xf]
      %v1570 = vld [vmem:[%s288 + $0x20] sm:$0xf]
      %v1571 = vld [vmem:[%s288 + $0x24] sm:$0xf]
      %v1572 = vld [vmem:[%s288 + $0x28] sm:$0xf]
      %v1573 = vld [vmem:[%s288 + $0x2c] sm:$0xf]
      %v1574 = vld [vmem:[%s288 + $0x30] sm:$0x3]
      %s1575 = scalar_lea.vmem %s292, 24
      %v1576 = vld [vmem:[%s1575] sm:$0xf]
      %v1588 = vunpack.c.l.b16 %v1564
      %v1589 = vunpack.c.l.b16 %v1565
      %v1590 = vunpack.c.l.b16 %v1566
      %v1591 = vunpack.c.l.b16 %v1567
      %v1592 = vunpack.c.l.b16 %v1568
      %v1593 = vunpack.c.l.b16 %v1569
      %v1594 = vunpack.c.l.b16 %v1570
      %v1595 = vunpack.c.l.b16 %v1571
      %v1596 = vunpack.c.l.b16 %v1572
      %v1597 = vunpack.c.l.b16 %v1573
      %v1598 = vunpack.c.l.b16 %v1574
      %v1599 = vpack.c.b16 %v1589, %v1588
      %v1600 = vpack.c.b16 %v1591, %v1590
      %v1601 = vpack.c.b16 %v1593, %v1592
      %v1602 = vpack.c.b16 %v1595, %v1594
      %v1603 = vpack.c.b16 %v1597, %v1596
      %v1604 = vpack.c.b16 %v1598, %v1598
      %v1605 = vrot.slane %v1599, 2
      %v1606 = vrot.slane %v1600, 2
      %v1607 = vsel %vm1431, %v1605, %v1606
      %v1608 = vrot.slane %v1601, 2
      %v1609 = vsel %vm1431, %v1606, %v1608
      %v1610 = vrot.slane %v1602, 2
      %v1611 = vsel %vm1431, %v1608, %v1610
      %v1612 = vrot.slane %v1603, 2
      %v1613 = vsel %vm1431, %v1610, %v1612
      %v1614 = vrot.slane %v1604, 2
      %v1615 = vsel %vm1431, %v1612, %v1614
      %v1617 = vsel %vm350, %v1607, 0
      %v1620 = vsel %vm350, %v1609, 0
      %v1623 = vsel %vm350, %v1611, 0
      %v1626 = vsel %vm350, %v1613, 0
      %v1629 = vsel %vm350, %v1615, 0
      %v1632 = vsel %vm366, %v1576, 0
      %1634 = vmatprep.subr.bf16.mxu0 0
      %1635 = vmatpush1.bf16.msra.mxu0 %v1632
      %1636 = vmatprep.subr.bf16.mxu0 0
      %1637 = vmatpush1.bf16.msra.mxu0 0
      %1638 = vmatprep.subr.bf16.mxu0 0
      %1639 = vmatpush1.bf16.msra.mxu0 0
      %1640 = vmatprep.subr.bf16.mxu0 0
      %1641 = vmatpush1.bf16.msra.mxu0 0
      %1642 = vmatprep.subr.bf16.mxu0 0
      %1643 = vmatpush1.bf16.msra.mxu0 0
      %1644 = vmatprep.subr.bf16.mxu0 0
      %1645 = vmatpush1.bf16.msra.mxu0 0
      %1646 = vmatprep.subr.bf16.mxu0 0
      %1647 = vmatpush1.bf16.msra.mxu0 0
      %1648 = vmatprep.subr.bf16.mxu0 0
      %1649 = vmatpush1.bf16.msra.mxu0 0
      %1650 = vmatprep.subr.bf16.mxu0 0
      %1651 = vmatpush1.bf16.msra.mxu0 0
      %1652 = vmatprep.subr.bf16.mxu0 0
      %1653 = vmatpush1.bf16.msra.mxu0 0
      %1654 = vmatprep.subr.bf16.mxu0 0
      %1655 = vmatpush1.bf16.msra.mxu0 0
      %1656 = vmatprep.subr.bf16.mxu0 0
      %1657 = vmatpush1.bf16.msra.mxu0 0
      %1658 = vmatprep.subr.bf16.mxu0 0
      %1659 = vmatpush1.bf16.msra.mxu0 0
      %1660 = vmatprep.subr.bf16.mxu0 0
      %1661 = vmatpush1.bf16.msra.mxu0 0
      %1662 = vmatprep.subr.bf16.mxu0 0
      %1663 = vmatpush1.bf16.msra.mxu0 0
      %1664 = vmatprep.subr.bf16.mxu0 0
      %1665 = vmatpush1.bf16.msra.mxu0 0
      %1666 = vmatprep.mubr.bf16.mxu0 0
      %1667 = vmatmul.mubr.bf16.gmra.mrb[0].mxu0 %v1617
      %v1668 = vpop.f32.mrb[0].mxu0
      %v1669 = vadd.f32 0.0, %v1668
      %v1670 = vpop.f32.mrb[0].mxu0
      %v1671 = vpop.f32.mrb[0].mxu0
      %v1672 = vadd.f32 0.0, %v1671
      %v1673 = vpop.f32.mrb[0].mxu0
      %1674 = vmatprep.mubr.bf16.mxu0 0
      %1675 = vmatmul.mubr.bf16.gmra.mrb[0].mxu0 %v1620
      %v1676 = vpop.f32.mrb[0].mxu0
      %v1677 = vadd.f32 0.0, %v1676
      %v1678 = vpop.f32.mrb[0].mxu0
      %v1679 = vpop.f32.mrb[0].mxu0
      %v1680 = vadd.f32 0.0, %v1679
      %v1681 = vpop.f32.mrb[0].mxu0
      %1682 = vmatprep.mubr.bf16.mxu0 0
      %1683 = vmatmul.mubr.bf16.gmra.mrb[0].mxu0 %v1623
      %v1684 = vpop.f32.mrb[0].mxu0
      %v1685 = vadd.f32 0.0, %v1684
      %v1686 = vpop.f32.mrb[0].mxu0
      %v1687 = vpop.f32.mrb[0].mxu0
      %v1688 = vadd.f32 0.0, %v1687
      %v1689 = vpop.f32.mrb[0].mxu0
      %1690 = vmatprep.mubr.bf16.mxu0 0
      %1691 = vmatmul.mubr.bf16.gmra.mrb[0].mxu0 %v1626
      %v1692 = vpop.f32.mrb[0].mxu0
      %v1693 = vadd.f32 0.0, %v1692
      %v1694 = vpop.f32.mrb[0].mxu0
      %v1695 = vpop.f32.mrb[0].mxu0
      %v1696 = vadd.f32 0.0, %v1695
      %v1697 = vpop.f32.mrb[0].mxu0
      %1698 = vmatprep.mubr.bf16.mxu0 0
      %1699 = vmatmul.mubr.bf16.gmra.mrb[0].mxu0 %v1629
      %v1700 = vpop.f32.mrb[0].mxu0
      %v1701 = vadd.f32 0.0, %v1700
      %v1702 = vpop.f32.mrb[0].mxu0
      %v1703 = vpop.f32.mrb[0].mxu0
      %v1704 = vadd.f32 0.0, %v1703
      %v1705 = vpop.f32.mrb[0].mxu0
      %1706 = vdwg.mxu0
      %v1707 = vadd.f32 %v1554, %v1669
      %v1708 = vadd.f32 %v1555, %v1672
      %v1709 = vadd.f32 %v1556, %v1677
      %v1710 = vadd.f32 %v1557, %v1680
      %v1711 = vadd.f32 %v1558, %v1685
      %v1712 = vadd.f32 %v1559, %v1688
      %v1713 = vadd.f32 %v1560, %v1693
      %v1714 = vadd.f32 %v1561, %v1696
      %v1715 = vadd.f32 %v1562, %v1701
      %v1716 = vadd.f32 %v1563, %v1704
      %1717 = vst [vmem:[#allocation2] sm:$0xff] %v1707
      %1718 = vst [vmem:[#allocation2 + $0x8] sm:$0xff] %v1708
      %1719 = vst [vmem:[#allocation2 + $0x10] sm:$0xff] %v1709
      %1720 = vst [vmem:[#allocation2 + $0x18] sm:$0xff] %v1710
      %1721 = vst [vmem:[#allocation2 + $0x20] sm:$0xff] %v1711
      %1722 = vst [vmem:[#allocation2 + $0x28] sm:$0xff] %v1712
      %1723 = vst [vmem:[#allocation2 + $0x30] sm:$0xff] %v1713
      %1724 = vst [vmem:[#allocation2 + $0x38] sm:$0xff] %v1714
      %1725 = vst [vmem:[#allocation2 + $0x40] sm:$0xff] %v1715
      %1726 = vst [vmem:[#allocation2 + $0x48] sm:$0xff] %v1716
      %v1727 = vld [vmem:[#allocation2] sm:$0xff]
      %v1728 = vld [vmem:[#allocation2 + $0x8] sm:$0xff]
      %v1729 = vld [vmem:[#allocation2 + $0x10] sm:$0xff]
      %v1730 = vld [vmem:[#allocation2 + $0x18] sm:$0xff]
      %v1731 = vld [vmem:[#allocation2 + $0x20] sm:$0xff]
      %v1732 = vld [vmem:[#allocation2 + $0x28] sm:$0xff]
      %v1733 = vld [vmem:[#allocation2 + $0x30] sm:$0xff]
      %v1734 = vld [vmem:[#allocation2 + $0x38] sm:$0xff]
      %v1735 = vld [vmem:[#allocation2 + $0x40] sm:$0xff]
      %v1736 = vld [vmem:[#allocation2 + $0x48] sm:$0xff]
      %v1737 = vld [vmem:[%s288 + $0x8] sm:$0xc]
      %v1738 = vld [vmem:[%s288 + $0xc] sm:$0xf]
      %v1739 = vld [vmem:[%s288 + $0x10] sm:$0xf]
      %v1740 = vld [vmem:[%s288 + $0x14] sm:$0xf]
      %v1741 = vld [vmem:[%s288 + $0x18] sm:$0xf]
      %v1742 = vld [vmem:[%s288 + $0x1c] sm:$0xf]
      %v1743 = vld [vmem:[%s288 + $0x20] sm:$0xf]
      %v1744 = vld [vmem:[%s288 + $0x24] sm:$0xf]
      %v1745 = vld [vmem:[%s288 + $0x28] sm:$0xf]
      %v1746 = vld [vmem:[%s288 + $0x2c] sm:$0xf]
      %v1747 = vld [vmem:[%s288 + $0x30] sm:$0x7]
      %s1748 = scalar_lea.vmem %s292, 28
      %v1749 = vld [vmem:[%s1748] sm:$0xf]
      %v1761 = vunpack.c.l.b16 %v1737
      %v1762 = vunpack.c.l.b16 %v1738
      %v1763 = vunpack.c.l.b16 %v1739
      %v1764 = vunpack.c.l.b16 %v1740
      %v1765 = vunpack.c.l.b16 %v1741
      %v1766 = vunpack.c.l.b16 %v1742
      %v1767 = vunpack.c.l.b16 %v1743
      %v1768 = vunpack.c.l.b16 %v1744
      %v1769 = vunpack.c.l.b16 %v1745
      %v1770 = vunpack.c.l.b16 %v1746
      %v1771 = vunpack.c.l.b16 %v1747
      %v1772 = vpack.c.b16 %v1762, %v1761
      %v1773 = vpack.c.b16 %v1764, %v1763
      %v1774 = vpack.c.b16 %v1766, %v1765
      %v1775 = vpack.c.b16 %v1768, %v1767
      %v1776 = vpack.c.b16 %v1770, %v1769
      %v1777 = vpack.c.b16 %v1771, %v1771
      %vm1778 = vsmask.f32 5376
      %v1780 = vshrl.u32 %v1772, 16
      %v1782 = vrot.slane %v1780, 2
      %v1783 = vshll.u32 %v1772, 16
      %v1785 = vrot.slane %v1783, 3
      %v1786 = vor.u32 %v1782, %v1785
      %v1788 = vshrl.u32 %v1773, 16
      %v1790 = vrot.slane %v1788, 2
      %v1791 = vshll.u32 %v1773, 16
      %v1793 = vrot.slane %v1791, 3
      %v1794 = vor.u32 %v1790, %v1793
      %v1795 = vsel %vm1778, %v1786, %v1794
      %v1797 = vshrl.u32 %v1774, 16
      %v1799 = vrot.slane %v1797, 2
      %v1800 = vshll.u32 %v1774, 16
      %v1802 = vrot.slane %v1800, 3
      %v1803 = vor.u32 %v1799, %v1802
      %v1804 = vsel %vm1778, %v1794, %v1803
      %v1806 = vshrl.u32 %v1775, 16
      %v1808 = vrot.slane %v1806, 2
      %v1809 = vshll.u32 %v1775, 16
      %v1811 = vrot.slane %v1809, 3
      %v1812 = vor.u32 %v1808, %v1811
      %v1813 = vsel %vm1778, %v1803, %v1812
      %v1815 = vshrl.u32 %v1776, 16
      %v1817 = vrot.slane %v1815, 2
      %v1818 = vshll.u32 %v1776, 16
      %v1820 = vrot.slane %v1818, 3
      %v1821 = vor.u32 %v1817, %v1820
      %v1822 = vsel %vm1778, %v1812, %v1821
      %v1824 = vshrl.u32 %v1777, 16
      %v1826 = vrot.slane %v1824, 2
      %v1827 = vshll.u32 %v1777, 16
      %v1829 = vrot.slane %v1827, 3
      %v1830 = vor.u32 %v1826, %v1829
      %v1831 = vsel %vm1778, %v1821, %v1830
      %v1833 = vsel %vm350, %v1795, 0
      %v1836 = vsel %vm350, %v1804, 0
      %v1839 = vsel %vm350, %v1813, 0
      %v1842 = vsel %vm350, %v1822, 0
      %v1845 = vsel %vm350, %v1831, 0
      %v1848 = vsel %vm366, %v1749, 0
      %1850 = vmatprep.subr.bf16.mxu0 0
      %1851 = vmatpush1.bf16.msra.mxu0 %v1848
      %1852 = vmatprep.subr.bf16.mxu0 0
      %1853 = vmatpush1.bf16.msra.mxu0 0
      %1854 = vmatprep.subr.bf16.mxu0 0
      %1855 = vmatpush1.bf16.msra.mxu0 0
      %1856 = vmatprep.subr.bf16.mxu0 0
      %1857 = vmatpush1.bf16.msra.mxu0 0
      %1858 = vmatprep.subr.bf16.mxu0 0
      %1859 = vmatpush1.bf16.msra.mxu0 0
      %1860 = vmatprep.subr.bf16.mxu0 0
      %1861 = vmatpush1.bf16.msra.mxu0 0
      %1862 = vmatprep.subr.bf16.mxu0 0
      %1863 = vmatpush1.bf16.msra.mxu0 0
      %1864 = vmatprep.subr.bf16.mxu0 0
      %1865 = vmatpush1.bf16.msra.mxu0 0
      %1866 = vmatprep.subr.bf16.mxu0 0
      %1867 = vmatpush1.bf16.msra.mxu0 0
      %1868 = vmatprep.subr.bf16.mxu0 0
      %1869 = vmatpush1.bf16.msra.mxu0 0
      %1870 = vmatprep.subr.bf16.mxu0 0
      %1871 = vmatpush1.bf16.msra.mxu0 0
      %1872 = vmatprep.subr.bf16.mxu0 0
      %1873 = vmatpush1.bf16.msra.mxu0 0
      %1874 = vmatprep.subr.bf16.mxu0 0
      %1875 = vmatpush1.bf16.msra.mxu0 0
      %1876 = vmatprep.subr.bf16.mxu0 0
      %1877 = vmatpush1.bf16.msra.mxu0 0
      %1878 = vmatprep.subr.bf16.mxu0 0
      %1879 = vmatpush1.bf16.msra.mxu0 0
      %1880 = vmatprep.subr.bf16.mxu0 0
      %1881 = vmatpush1.bf16.msra.mxu0 0
      %1882 = vmatprep.mubr.bf16.mxu0 0
      %1883 = vmatmul.mubr.bf16.gmra.mrb[0].mxu0 %v1833
      %v1884 = vpop.f32.mrb[0].mxu0
      %v1885 = vadd.f32 0.0, %v1884
      %v1886 = vpop.f32.mrb[0].mxu0
      %v1887 = vpop.f32.mrb[0].mxu0
      %v1888 = vadd.f32 0.0, %v1887
      %v1889 = vpop.f32.mrb[0].mxu0
      %1890 = vmatprep.mubr.bf16.mxu0 0
      %1891 = vmatmul.mubr.bf16.gmra.mrb[0].mxu0 %v1836
      %v1892 = vpop.f32.mrb[0].mxu0
      %v1893 = vadd.f32 0.0, %v1892
      %v1894 = vpop.f32.mrb[0].mxu0
      %v1895 = vpop.f32.mrb[0].mxu0
      %v1896 = vadd.f32 0.0, %v1895
      %v1897 = vpop.f32.mrb[0].mxu0
      %1898 = vmatprep.mubr.bf16.mxu0 0
      %1899 = vmatmul.mubr.bf16.gmra.mrb[0].mxu0 %v1839
      %v1900 = vpop.f32.mrb[0].mxu0
      %v1901 = vadd.f32 0.0, %v1900
      %v1902 = vpop.f32.mrb[0].mxu0
      %v1903 = vpop.f32.mrb[0].mxu0
      %v1904 = vadd.f32 0.0, %v1903
      %v1905 = vpop.f32.mrb[0].mxu0
      %1906 = vmatprep.mubr.bf16.mxu0 0
      %1907 = vmatmul.mubr.bf16.gmra.mrb[0].mxu0 %v1842
      %v1908 = vpop.f32.mrb[0].mxu0
      %v1909 = vadd.f32 0.0, %v1908
      %v1910 = vpop.f32.mrb[0].mxu0
      %v1911 = vpop.f32.mrb[0].mxu0
      %v1912 = vadd.f32 0.0, %v1911
      %v1913 = vpop.f32.mrb[0].mxu0
      %1914 = vmatprep.mubr.bf16.mxu0 0
      %1915 = vmatmul.mubr.bf16.gmra.mrb[0].mxu0 %v1845
      %v1916 = vpop.f32.mrb[0].mxu0
      %v1917 = vadd.f32 0.0, %v1916
      %v1918 = vpop.f32.mrb[0].mxu0
      %v1919 = vpop.f32.mrb[0].mxu0
      %v1920 = vadd.f32 0.0, %v1919
      %v1921 = vpop.f32.mrb[0].mxu0
      %1922 = vdwg.mxu0
      %v1923 = vadd.f32 %v1727, %v1885
      %v1924 = vadd.f32 %v1728, %v1888
      %v1925 = vadd.f32 %v1729, %v1893
      %v1926 = vadd.f32 %v1730, %v1896
      %v1927 = vadd.f32 %v1731, %v1901
      %v1928 = vadd.f32 %v1732, %v1904
      %v1929 = vadd.f32 %v1733, %v1909
      %v1930 = vadd.f32 %v1734, %v1912
      %v1931 = vadd.f32 %v1735, %v1917
      %v1932 = vadd.f32 %v1736, %v1920
      %1933 = vst [vmem:[#allocation2] sm:$0xff] %v1923
      %1934 = vst [vmem:[#allocation2 + $0x8] sm:$0xff] %v1924
      %1935 = vst [vmem:[#allocation2 + $0x10] sm:$0xff] %v1925
      %1936 = vst [vmem:[#allocation2 + $0x18] sm:$0xff] %v1926
      %1937 = vst [vmem:[#allocation2 + $0x20] sm:$0xff] %v1927
      %1938 = vst [vmem:[#allocation2 + $0x28] sm:$0xff] %v1928
      %1939 = vst [vmem:[#allocation2 + $0x30] sm:$0xff] %v1929
      %1940 = vst [vmem:[#allocation2 + $0x38] sm:$0xff] %v1930
      %1941 = vst [vmem:[#allocation2 + $0x40] sm:$0xff] %v1931
      %1942 = vst [vmem:[#allocation2 + $0x48] sm:$0xff] %v1932
      %v1943 = vld [vmem:[#allocation2] sm:$0xff]
      %v1944 = vld [vmem:[#allocation2 + $0x8] sm:$0xff]
      %v1945 = vld [vmem:[#allocation2 + $0x10] sm:$0xff]
      %v1946 = vld [vmem:[#allocation2 + $0x18] sm:$0xff]
      %v1947 = vld [vmem:[#allocation2 + $0x20] sm:$0xff]
      %v1948 = vld [vmem:[#allocation2 + $0x28] sm:$0xff]
      %v1949 = vld [vmem:[#allocation2 + $0x30] sm:$0xff]
      %v1950 = vld [vmem:[#allocation2 + $0x38] sm:$0xff]
      %v1951 = vld [vmem:[#allocation2 + $0x40] sm:$0xff]
      %v1952 = vld [vmem:[#allocation2 + $0x48] sm:$0xff]
      %v1953 = vld [vmem:[%s288 + $0x8] sm:$0x8]
      %v1954 = vld [vmem:[%s288 + $0xc] sm:$0xf]
      %v1955 = vld [vmem:[%s288 + $0x10] sm:$0xf]
      %v1956 = vld [vmem:[%s288 + $0x14] sm:$0xf]
      %v1957 = vld [vmem:[%s288 + $0x18] sm:$0xf]
      %v1958 = vld [vmem:[%s288 + $0x1c] sm:$0xf]
      %v1959 = vld [vmem:[%s288 + $0x20] sm:$0xf]
      %v1960 = vld [vmem:[%s288 + $0x24] sm:$0xf]
      %v1961 = vld [vmem:[%s288 + $0x28] sm:$0xf]
      %v1962 = vld [vmem:[%s288 + $0x2c] sm:$0xf]
      %v1963 = vld [vmem:[%s288 + $0x30] sm:$0x7]
      %s1964 = scalar_lea.vmem %s292, 32
      %v1965 = vld [vmem:[%s1964] sm:$0xf]
      %v1977 = vunpack.c.l.b16 %v1953
      %v1978 = vunpack.c.l.b16 %v1954
      %v1979 = vunpack.c.l.b16 %v1955
      %v1980 = vunpack.c.l.b16 %v1956
      %v1981 = vunpack.c.l.b16 %v1957
      %v1982 = vunpack.c.l.b16 %v1958
      %v1983 = vunpack.c.l.b16 %v1959
      %v1984 = vunpack.c.l.b16 %v1960
      %v1985 = vunpack.c.l.b16 %v1961
      %v1986 = vunpack.c.l.b16 %v1962
      %v1987 = vunpack.c.l.b16 %v1963
      %v1988 = vpack.c.b16 %v1978, %v1977
      %v1989 = vpack.c.b16 %v1980, %v1979
      %v1990 = vpack.c.b16 %v1982, %v1981
      %v1991 = vpack.c.b16 %v1984, %v1983
      %v1992 = vpack.c.b16 %v1986, %v1985
      %v1993 = vpack.c.b16 %v1987, %v1987
      %vm1994 = vcmask 1044480
      %v1995 = vrot.slane %v1988, 3
      %v1996 = vrot.slane %v1989, 3
      %v1997 = vsel %vm1994, %v1995, %v1996
      %v1998 = vrot.slane %v1990, 3
      %v1999 = vsel %vm1994, %v1996, %v1998
      %v2000 = vrot.slane %v1991, 3
      %v2001 = vsel %vm1994, %v1998, %v2000
      %v2002 = vrot.slane %v1992, 3
      %v2003 = vsel %vm1994, %v2000, %v2002
      %v2004 = vrot.slane %v1993, 3
      %v2005 = vsel %vm1994, %v2002, %v2004
      %v2007 = vsel %vm350, %v1997, 0
      %v2010 = vsel %vm350, %v1999, 0
      %v2013 = vsel %vm350, %v2001, 0
      %v2016 = vsel %vm350, %v2003, 0
      %v2019 = vsel %vm350, %v2005, 0
      %v2022 = vsel %vm366, %v1965, 0
      %2024 = vmatprep.subr.bf16.mxu0 0
      %2025 = vmatpush1.bf16.msra.mxu0 %v2022
      %2026 = vmatprep.subr.bf16.mxu0 0
      %2027 = vmatpush1.bf16.msra.mxu0 0
      %2028 = vmatprep.subr.bf16.mxu0 0
      %2029 = vmatpush1.bf16.msra.mxu0 0
      %2030 = vmatprep.subr.bf16.mxu0 0
      %2031 = vmatpush1.bf16.msra.mxu0 0
      %2032 = vmatprep.subr.bf16.mxu0 0
      %2033 = vmatpush1.bf16.msra.mxu0 0
      %2034 = vmatprep.subr.bf16.mxu0 0
      %2035 = vmatpush1.bf16.msra.mxu0 0
      %2036 = vmatprep.subr.bf16.mxu0 0
      %2037 = vmatpush1.bf16.msra.mxu0 0
      %2038 = vmatprep.subr.bf16.mxu0 0
      %2039 = vmatpush1.bf16.msra.mxu0 0
      %2040 = vmatprep.subr.bf16.mxu0 0
      %2041 = vmatpush1.bf16.msra.mxu0 0
      %2042 = vmatprep.subr.bf16.mxu0 0
      %2043 = vmatpush1.bf16.msra.mxu0 0
      %2044 = vmatprep.subr.bf16.mxu0 0
      %2045 = vmatpush1.bf16.msra.mxu0 0
      %2046 = vmatprep.subr.bf16.mxu0 0
      %2047 = vmatpush1.bf16.msra.mxu0 0
      %2048 = vmatprep.subr.bf16.mxu0 0
      %2049 = vmatpush1.bf16.msra.mxu0 0
      %2050 = vmatprep.subr.bf16.mxu0 0
      %2051 = vmatpush1.bf16.msra.mxu0 0
      %2052 = vmatprep.subr.bf16.mxu0 0
      %2053 = vmatpush1.bf16.msra.mxu0 0
      %2054 = vmatprep.subr.bf16.mxu0 0
      %2055 = vmatpush1.bf16.msra.mxu0 0
      %2056 = vmatprep.mubr.bf16.mxu0 0
      %2057 = vmatmul.mubr.bf16.gmra.mrb[0].mxu0 %v2007
      %v2058 = vpop.f32.mrb[0].mxu0
      %v2059 = vadd.f32 0.0, %v2058
      %v2060 = vpop.f32.mrb[0].mxu0
      %v2061 = vpop.f32.mrb[0].mxu0
      %v2062 = vadd.f32 0.0, %v2061
      %v2063 = vpop.f32.mrb[0].mxu0
      %2064 = vmatprep.mubr.bf16.mxu0 0
      %2065 = vmatmul.mubr.bf16.gmra.mrb[0].mxu0 %v2010
      %v2066 = vpop.f32.mrb[0].mxu0
      %v2067 = vadd.f32 0.0, %v2066
      %v2068 = vpop.f32.mrb[0].mxu0
      %v2069 = vpop.f32.mrb[0].mxu0
      %v2070 = vadd.f32 0.0, %v2069
      %v2071 = vpop.f32.mrb[0].mxu0
      %2072 = vmatprep.mubr.bf16.mxu0 0
      %2073 = vmatmul.mubr.bf16.gmra.mrb[0].mxu0 %v2013
      %v2074 = vpop.f32.mrb[0].mxu0
      %v2075 = vadd.f32 0.0, %v2074
      %v2076 = vpop.f32.mrb[0].mxu0
      %v2077 = vpop.f32.mrb[0].mxu0
      %v2078 = vadd.f32 0.0, %v2077
      %v2079 = vpop.f32.mrb[0].mxu0
      %2080 = vmatprep.mubr.bf16.mxu0 0
      %2081 = vmatmul.mubr.bf16.gmra.mrb[0].mxu0 %v2016
      %v2082 = vpop.f32.mrb[0].mxu0
      %v2083 = vadd.f32 0.0, %v2082
      %v2084 = vpop.f32.mrb[0].mxu0
      %v2085 = vpop.f32.mrb[0].mxu0
      %v2086 = vadd.f32 0.0, %v2085
      %v2087 = vpop.f32.mrb[0].mxu0
      %2088 = vmatprep.mubr.bf16.mxu0 0
      %2089 = vmatmul.mubr.bf16.gmra.mrb[0].mxu0 %v2019
      %v2090 = vpop.f32.mrb[0].mxu0
      %v2091 = vadd.f32 0.0, %v2090
      %v2092 = vpop.f32.mrb[0].mxu0
      %v2093 = vpop.f32.mrb[0].mxu0
      %v2094 = vadd.f32 0.0, %v2093
      %v2095 = vpop.f32.mrb[0].mxu0
      %2096 = vdwg.mxu0
      %v2097 = vadd.f32 %v1943, %v2059
      %v2098 = vadd.f32 %v1944, %v2062
      %v2099 = vadd.f32 %v1945, %v2067
      %v2100 = vadd.f32 %v1946, %v2070
      %v2101 = vadd.f32 %v1947, %v2075
      %v2102 = vadd.f32 %v1948, %v2078
      %v2103 = vadd.f32 %v1949, %v2083
      %v2104 = vadd.f32 %v1950, %v2086
      %v2105 = vadd.f32 %v1951, %v2091
      %v2106 = vadd.f32 %v1952, %v2094
      %2107 = vst [vmem:[#allocation2] sm:$0xff] %v2097
      %2108 = vst [vmem:[#allocation2 + $0x8] sm:$0xff] %v2098
      %2109 = vst [vmem:[#allocation2 + $0x10] sm:$0xff] %v2099
      %2110 = vst [vmem:[#allocation2 + $0x18] sm:$0xff] %v2100
      %2111 = vst [vmem:[#allocation2 + $0x20] sm:$0xff] %v2101
      %2112 = vst [vmem:[#allocation2 + $0x28] sm:$0xff] %v2102
      %2113 = vst [vmem:[#allocation2 + $0x30] sm:$0xff] %v2103
      %2114 = vst [vmem:[#allocation2 + $0x38] sm:$0xff] %v2104
      %2115 = vst [vmem:[#allocation2 + $0x40] sm:$0xff] %v2105
      %2116 = vst [vmem:[#allocation2 + $0x48] sm:$0xff] %v2106
      %v2117 = vld [vmem:[#allocation2] sm:$0xff]
      %v2118 = vld [vmem:[#allocation2 + $0x8] sm:$0xff]
      %v2119 = vld [vmem:[#allocation2 + $0x10] sm:$0xff]
      %v2120 = vld [vmem:[#allocation2 + $0x18] sm:$0xff]
      %v2121 = vld [vmem:[#allocation2 + $0x20] sm:$0xff]
      %v2122 = vld [vmem:[#allocation2 + $0x28] sm:$0xff]
      %v2123 = vld [vmem:[#allocation2 + $0x30] sm:$0xff]
      %v2124 = vld [vmem:[#allocation2 + $0x38] sm:$0xff]
      %v2125 = vld [vmem:[#allocation2 + $0x40] sm:$0xff]
      %v2126 = vld [vmem:[#allocation2 + $0x48] sm:$0xff]
      %v2127 = vld [vmem:[%s295] sm:$0x1]
      %v2129 = vlaneseq
      %v2130 = vshrl.u32 %v2129, 7
      %v2131 = vsub.s32 0, %v2130
      %v2132 = vrot.slane %v2127, %v2131
      %v2134 = vadd.f32 %v2117, %v2132
      %v2135 = vadd.f32 %v2118, %v2132
      %v2136 = vadd.f32 %v2119, %v2132
      %v2137 = vadd.f32 %v2120, %v2132
      %v2138 = vadd.f32 %v2121, %v2132
      %v2139 = vadd.f32 %v2122, %v2132
      %v2140 = vadd.f32 %v2123, %v2132
      %v2141 = vadd.f32 %v2124, %v2132
      %v2142 = vadd.f32 %v2125, %v2132
      %v2143 = vadd.f32 %v2126, %v2132
      %v2144 = vmax.f32 %v2134, 0.0
      %v2145 = vmax.f32 %v2135, 0.0
      %v2146 = vmax.f32 %v2136, 0.0
      %v2147 = vmax.f32 %v2137, 0.0
      %v2148 = vmax.f32 %v2138, 0.0
      %v2149 = vmax.f32 %v2139, 0.0
      %v2150 = vmax.f32 %v2140, 0.0
      %v2151 = vmax.f32 %v2141, 0.0
      %v2152 = vmax.f32 %v2142, 0.0
      %v2153 = vmax.f32 %v2143, 0.0
      %v2154 = vpack.c.bf16 %v2145, %v2144
      %v2155 = vpack.c.bf16 %v2147, %v2146
      %v2156 = vpack.c.bf16 %v2149, %v2148
      %v2157 = vpack.c.bf16 %v2151, %v2150
      %v2158 = vpack.c.bf16 %v2153, %v2152
      %v2164 = vunpack.c.l.b16 %v2154
      %v2165 = vunpack.c.h.b16 %v2154
      %v2166 = vunpack.c.l.b16 %v2155
      %v2167 = vunpack.c.h.b16 %v2155
      %v2168 = vunpack.c.l.b16 %v2156
      %v2169 = vunpack.c.h.b16 %v2156
      %v2170 = vunpack.c.l.b16 %v2157
      %v2171 = vunpack.c.h.b16 %v2157
      %v2172 = vunpack.c.l.b16 %v2158
      %v2173 = vunpack.c.h.b16 %v2158
      %v2174 = vpack.c.b16 %v2164, %v2164
      %v2175 = vpack.c.b16 %v2165, %v2165
      %v2176 = vpack.c.b16 %v2166, %v2166
      %v2177 = vpack.c.b16 %v2167, %v2167
      %v2178 = vpack.c.b16 %v2168, %v2168
      %v2179 = vpack.c.b16 %v2169, %v2169
      %v2180 = vpack.c.b16 %v2170, %v2170
      %v2181 = vpack.c.b16 %v2171, %v2171
      %v2182 = vpack.c.b16 %v2172, %v2172
      %v2183 = vpack.c.b16 %v2173, %v2173
      %2194 = vst [vmem:[%s312] sm:$0xf] %v2174
      %2195 = vst [vmem:[%s312 + $0x4] sm:$0xf] %v2175
      %2196 = vst [vmem:[%s312 + $0x8] sm:$0xf] %v2176
      %2197 = vst [vmem:[%s312 + $0xc] sm:$0xf] %v2177
      %2198 = vst [vmem:[%s312 + $0x10] sm:$0xf] %v2178
      %2199 = vst [vmem:[%s312 + $0x14] sm:$0xf] %v2179
      %2200 = vst [vmem:[%s312 + $0x18] sm:$0xf] %v2180
      %2201 = vst [vmem:[%s312 + $0x1c] sm:$0xf] %v2181
      %2202 = vst [vmem:[%s312 + $0x20] sm:$0xf] %v2182
      %2203 = vst [vmem:[%s312 + $0x24] sm:$0xf] %v2183
      %p2204 = scmp.lt.s32.totalorder %s20, 1
      %s2205 = scalar_select %p2204, %s20, 1
      %p2206 = scmp.lt.s32.totalorder %s21, 0
      %s2207 = scalar_select %p2206, %s21, 0
      %s2208 = smul.addr %s2205, 10
      %s2209 = sadd.s32 %s2207, %s2208
      %s2210 = smul.addr %s2209, 4
      %s2211 = scalar_lea.vmem %s5, %s2210
      // Predicated region
      $region41: #{resnet_block_forward.3} parent=39 // pred_check
        %p2212 = pneg %p178
      $region42: #{resnet_block_forward.3} parent=39 // pred_check_branch
        %2214 = sbr.rel (%p2212) target = $region44
      $region43: #{resnet_block_forward.3} parent=39 // pred_region
        _
      $region44: #{resnet_block_forward.3} parent=39 // pred_fallthru
        _
    $region40: #{resnet_block_forward.3} parent=5 // pred_fallthru
      _
    %p2215 = scmp.le.s32.totalorder 2, %s11
    // Predicated region
    $region45: #{resnet_block_forward.3} parent=5 // pred_check
      %p2216 = pneg %p2215
    $region46: #{resnet_block_forward.3} parent=5 // pred_check_branch
      %2218 = sbr.rel (%p2216) target = $region48
    $region47: #{resnet_block_forward.3} parent=5 // pred_region
      %s2219 = ssub.s32 %s11, 2
      // Predicated region
      $region49: #{resnet_block_forward.3} parent=47 // pred_check
        %p2220 = pneg %p184
      $region50: #{resnet_block_forward.3} parent=47 // pred_check_branch
        %2222 = sbr.rel (%p2220) target = $region52
      $region51: #{resnet_block_forward.3} parent=47 // pred_region
        %p2223 = scmp.lt.s32.totalorder %s22, 1
        %s2224 = scalar_select %p2223, %s22, 1
        %p2225 = scmp.lt.s32.totalorder %s23, 0
        %s2226 = scalar_select %p2225, %s23, 0
        %s2227 = smul.addr %s2224, 10
        %s2228 = sadd.s32 %s2226, %s2227
        %s2229 = smul.addr %s2228, 4
        %s2230 = scalar_lea.vmem %s5, %s2229
      $region52: #{resnet_block_forward.3} parent=47 // pred_fallthru
        _
    $region48: #{resnet_block_forward.3} parent=5 // pred_fallthru
      _
  $region6: #{resnet_block_forward.3} parent=0 // loop_footer
    %s15 = sadd.s32 1, %s11
  $region7: #{resnet_block_forward.3} parent=0 // loop_footer_branch
    %10 = sbr.rel target = $region3
  $region8: #{resnet_block_forward.3} parent=0 // loop_exit
    _

</llo_original>
